<compile_context>
chip_gen: v7x
topology: tpu7x:2x2x1
jax: 0.10.0
libtpu: 0.0.40
codegen_flags: <defaults>
</compile_context>

<pallas_src>
import functools

import jax
import jax.numpy as jnp
import numpy as np
from jax.experimental import pallas as pl
from jax.experimental.pallas import tpu as pltpu

EPS = 1e-5  # nn.LayerNorm default

_FRONT_KEYS = ("norm_g", "norm_b", "mlp_w1", "mlp_b1", "mlp_w2", "mlp_b2", "qparam")
_CA_KEYS = ("n1_g", "n1_b", "wq", "wkv", "wp", "bp",
            "n2_g", "n2_b", "f1_w", "f1_b", "f2_w", "f2_b")


def _layernorm(x, gamma, beta):
    mu = jnp.mean(x, axis=-1, keepdims=True)
    var = jnp.mean(jnp.square(x - mu), axis=-1, keepdims=True)
    return (x - mu) * jax.lax.rsqrt(var + EPS) * gamma + beta


def _gelu(x):
    # TODO(synk): PyTorch nn.GELU defaults to the exact erf form; the tanh approximation
    # is used here (guaranteed Mosaic lowering); max abs difference ~1e-3.
    return jax.nn.gelu(x, approximate=True)


# ---------------------------------------------------------------------------
# In-kernel cross-attention CompBlock on a single batch element (VMEM arrays)
#   out = y + Mlp(LN2(y)),   y = queries + Proj(MHA(LN1(ctx), queries))
# ---------------------------------------------------------------------------
def _ca_block(ctx, qin, p, num_heads):
    """ctx: (L, C) f32 context tokens; qin: (M, C) f32 queries; p: loaded params."""
    C = ctx.shape[-1]
    M = qin.shape[0]
    D = C // num_heads
    cdt = p["wq"].dtype  # bf16 compute dtype for MXU operands

    xn = _layernorm(ctx, p["n1_g"], p["n1_b"]).astype(cdt)                     # (L, C)
    kv = jnp.dot(xn, p["wkv"], preferred_element_type=jnp.float32)             # (L, 2C)
    # 1/sqrt(D) is already folded into wq (parameter preparation time).
    q = jnp.dot(qin.astype(cdt), p["wq"], preferred_element_type=jnp.float32)  # (M, C)

    # Per-head attention with the output projection folded into the loop
    # (no head-output concatenate; live ranges bounded by the f32 accumulator).
    acc = jnp.zeros((M, C), jnp.float32)
    for h in range(num_heads):
        lo = h * D
        qh = q[:, lo:lo + D].astype(cdt)                                       # (M, D)
        kh = kv[:, lo:lo + D].astype(cdt)                                      # (L, D)
        vh = kv[:, C + lo:C + lo + D].astype(cdt)                              # (L, D)
        logits = jax.lax.dot_general(                                          # q_h @ k_h^T
            qh, kh, (((1,), (1,)), ((), ())), preferred_element_type=jnp.float32)
        prob = jax.nn.softmax(logits, axis=-1).astype(cdt)                     # softmax in f32
        oh = jnp.dot(prob, vh, preferred_element_type=jnp.float32)             # (M, D)
        acc = acc + jnp.dot(oh.astype(cdt), p["wp"][lo:lo + D, :],
                            preferred_element_type=jnp.float32)
    y = qin + acc + p["bp"]                                                    # residual 1

    yn = _layernorm(y, p["n2_g"], p["n2_b"]).astype(cdt)
    ff = _gelu(jnp.dot(yn, p["f1_w"], preferred_element_type=jnp.float32) + p["f1_b"])
    out = y + jnp.dot(ff.astype(cdt), p["f2_w"],
                      preferred_element_type=jnp.float32) + p["f2_b"]          # residual 2
    return out                                                                 # (M, C) f32


# ---------------------------------------------------------------------------
# Fused kernel: LayerNorm + query-Mlp + softmax-mix + CompBlock1 + CompBlock2
# (one grid step per batch element; all intermediates stay in VMEM)
# ---------------------------------------------------------------------------
def fused_compressor_kernel(*refs, num_heads):
    x_ref, out_ref = refs[0], refs[-1]
    pr = refs[1:-1]
    nf, nc = len(_FRONT_KEYS), len(_CA_KEYS)
    front = {k: pr[i][...] for i, k in enumerate(_FRONT_KEYS)}
    ca1 = {k: pr[nf + i][...] for i, k in enumerate(_CA_KEYS)}
    ca2 = {k: pr[nf + nc + i][...] for i, k in enumerate(_CA_KEYS)}

    cdt = front["mlp_w1"].dtype                     # bf16 compute dtype
    xt = x_ref[0].astype(jnp.float32)               # (Np, C) patch tokens (cls handled in wrapper)

    # ---- Compressor.norm + query-generation Mlp + softmax mix ----
    xn = _layernorm(xt, front["norm_g"], front["norm_b"])                       # (Np, C) f32
    xn_c = xn.astype(cdt)
    h = _gelu(jnp.dot(xn_c, front["mlp_w1"],
                      preferred_element_type=jnp.float32) + front["mlp_b1"])    # (Np, Hq) f32
    s = jnp.dot(h.astype(cdt), front["mlp_w2"],
                preferred_element_type=jnp.float32) + front["mlp_b2"]           # (Np, M) f32
    # softmax over the token axis == softmax(s.mT, -1), without the transpose
    s = s - jnp.max(s, axis=0, keepdims=True)
    e = jnp.exp(s)
    prob = e / jnp.sum(e, axis=0, keepdims=True)                                # (Np, M) f32
    # q[m, c] = sum_n prob[n, m] * xn[n, c]  — transposed-LHS matmul on the MXU
    q = jax.lax.dot_general(prob.astype(cdt), xn_c, (((0,), (0,)), ((), ())),
                            preferred_element_type=jnp.float32) + front["qparam"]  # (M, C)

    # ---- CompBlock 1: compressed queries cross-attend to the patch tokens ----
    c1 = _ca_block(xn, q, ca1, num_heads)                                       # (M, C) f32

    # ---- CompBlock 2: context = [xn ; c1] (concat kept in VMEM, no HBM trip) ----
    ctx2 = jnp.concatenate([xn, c1], axis=0)                                    # (Np+M, C)
    c2 = _ca_block(ctx2, c1, ca2, num_heads)                                    # (M, C) f32

    out_ref[0] = c2.astype(out_ref.dtype)


# ---------------------------------------------------------------------------
# Wrapper
# ---------------------------------------------------------------------------
def _fullspec(a):
    nd = a.ndim
    # TODO(synk): for large dims on v7x (64 MiB VMEM), add pipeline_mode=pl.Buffered(1) to
    # these constant-index weight specs and tile f1_w/f2_w over the hidden dim with an extra
    # "arbitrary" grid axis instead of loading them whole.
    return pl.BlockSpec(a.shape, lambda b, _nd=nd: (0,) * _nd)


def _cost_estimate(x, kparams, M):
    B, Np, C = x.shape
    Hq = kparams["front"]["mlp_w1"].shape[-1]
    Hf = kparams["ca1"]["f1_w"].shape[-1]
    flops = 2 * Np * C * Hq + 2 * Np * Hq * M + 2 * M * Np * C                  # query Mlp + mix
    for L in (Np, Np + M):                                                      # two CompBlocks
        flops += 2 * L * C * 2 * C                                              # kv projection
        flops += 2 * M * C * C                                                  # q projection
        flops += 4 * M * L * C                                                  # logits + attn@v
        flops += 2 * M * C * C                                                  # output projection
        flops += 4 * M * C * Hf                                                 # FFN
    flops *= B
    transc = B * (Np * Hq + Np * M + M * (Np + (Np + M)) + 2 * M * Hf)
    nbytes = int(x.size) * x.dtype.itemsize + B * M * C * x.dtype.itemsize
    nbytes += sum(int(a.size) * a.dtype.itemsize
                  for blk in kparams.values() for a in blk.values())
    return int(flops), int(transc), int(nbytes)


def compressed_tokens_fused(xt, kparams, num_heads):
    """xt: (B, Np, C) patch tokens (cls already stripped). Returns (B, M, C)."""
    B, Np, C = xt.shape
    M = kparams["front"]["qparam"].shape[0]
    param_list = ([kparams["front"][k] for k in _FRONT_KEYS]
                  + [kparams["ca1"][k] for k in _CA_KEYS]
                  + [kparams["ca2"][k] for k in _CA_KEYS])
    in_specs = ([pl.BlockSpec((1, Np, C), lambda b: (b, 0, 0))]
                + [_fullspec(a) for a in param_list])
    flops, transc, nbytes = _cost_estimate(xt, kparams, M)
    kernel = functools.partial(fused_compressor_kernel, num_heads=num_heads)
    # TODO(synk): if B==1 is common on v7x (2 TCs), add a second parallel axis splitting the
    # Nx-heavy LN1+kv work across cores; also consider batching the (M, C) query-side matmuls
    # to a (B*M, C) slab for better MXU row occupancy when B is large.
    return pl.pallas_call(
        kernel,
        out_shape=jax.ShapeDtypeStruct((B, M, C), xt.dtype),
        grid=(B,),
        in_specs=in_specs,
        out_specs=pl.BlockSpec((1, M, C), lambda b: (b, 0, 0)),
        compiler_params=pltpu.CompilerParams(
            dimension_semantics=("parallel",),
            vmem_limit_bytes=48 * 1024 * 1024),  # above 16 MiB (v5e) / 32 MiB (v6e, v7x) defaults
        cost_estimate=pl.CostEstimate(flops=flops, transcendentals=transc,
                                      bytes_accessed=nbytes),
    )(xt, *param_list)


def compressor_mlp_forward(x, kparams, num_heads):
    """CompressorMlp.forward (num_register_tokens=0, get_attn=False). Expects prepared params."""
    cls_token = x[:, 0:1]                      # (B, 1, C)
    xt = x[:, 1:]                              # (B, Np, C)
    compressed = compressed_tokens_fused(xt, kparams, num_heads)
    return jnp.concatenate([cls_token, compressed], axis=1)       # (B, 1+M, C)


# ---------------------------------------------------------------------------
# Parameter preparation: bf16 matmul weights, attention scale folded into wq
# ---------------------------------------------------------------------------
def prepare_kernel_params(params, num_heads):
    bf = jnp.bfloat16
    dim = params["front"]["qparam"].shape[-1]
    scale = (dim // num_heads) ** -0.5

    f = params["front"]
    front = dict(norm_g=f["norm_g"], norm_b=f["norm_b"],
                 mlp_w1=f["mlp_w1"].astype(bf), mlp_b1=f["mlp_b1"],
                 mlp_w2=f["mlp_w2"].astype(bf), mlp_b2=f["mlp_b2"],
                 qparam=f["qparam"])

    def ca(p):
        return dict(n1_g=p["n1_g"], n1_b=p["n1_b"],
                    wq=(p["wq"] * scale).astype(bf),      # fold 1/sqrt(D) into wq
                    wkv=p["wkv"].astype(bf),
                    wp=p["wp"].astype(bf), bp=p["bp"],
                    n2_g=p["n2_g"], n2_b=p["n2_b"],
                    f1_w=p["f1_w"].astype(bf), f1_b=p["f1_b"],
                    f2_w=p["f2_w"].astype(bf), f2_b=p["f2_b"])

    return dict(front=front, ca1=ca(params["ca1"]), ca2=ca(params["ca2"]))


# ---------------------------------------------------------------------------
# Pure-JAX f32 reference (mirrors the PyTorch semantics) for validation
# ---------------------------------------------------------------------------
def _ref_compblock(x, q, p, num_heads):
    B, Nx, C = x.shape
    M = q.shape[1]
    D = C // num_heads
    xn = _layernorm(x, p["n1_g"], p["n1_b"])
    qp = q @ p["wq"]
    kv = xn @ p["wkv"]
    k, v = kv[..., :C], kv[..., C:]
    qh = qp.reshape(B, M, num_heads, D).transpose(0, 2, 1, 3)
    kh = k.reshape(B, Nx, num_heads, D).transpose(0, 2, 1, 3)
    vh = v.reshape(B, Nx, num_heads, D).transpose(0, 2, 1, 3)
    attn = jnp.einsum("bhmd,bhnd->bhmn", qh, kh) * (D ** -0.5)
    attn = jax.nn.softmax(attn, axis=-1)
    o = jnp.einsum("bhmn,bhnd->bhmd", attn, vh).transpose(0, 2, 1, 3).reshape(B, M, C)
    o = o @ p["wp"] + p["bp"]
    y = q + o
    yn = _layernorm(y, p["n2_g"], p["n2_b"])
    ff = _gelu(yn @ p["f1_w"] + p["f1_b"]) @ p["f2_w"] + p["f2_b"]
    return y + ff


def reference_forward(x, params, num_heads):
    p = params["front"]
    cls_token, xt = x[:, 0:1], x[:, 1:]
    xn = _layernorm(xt, p["norm_g"], p["norm_b"])
    s = _gelu(xn @ p["mlp_w1"] + p["mlp_b1"]) @ p["mlp_w2"] + p["mlp_b2"]
    a = jax.nn.softmax(jnp.swapaxes(s, -1, -2), axis=-1)
    q = a @ xn + p["qparam"][None]
    c = _ref_compblock(xn, q, params["ca1"], num_heads)
    xcat = jnp.concatenate([xn, c], axis=1)
    c = _ref_compblock(xcat, c, params["ca2"], num_heads)
    return jnp.concatenate([cls_token, c], axis=1)


# ---------------------------------------------------------------------------
# Deterministic synthetic parameter init (module __init__ shapes; eval mode)
# ---------------------------------------------------------------------------
def init_params(key, dim, mlp_ratio, num_compressed_tokens):
    M = num_compressed_tokens
    hidden_q = int(dim // mlp_ratio)           # Compressor's query-Mlp hidden
    hidden_f = int(dim * mlp_ratio)            # CompBlock FFN hidden

    def w(k, shape, scale=0.02):
        return (scale * jax.random.normal(k, shape)).astype(jnp.float32)

    ks = jax.random.split(key, 8)
    front = dict(
        norm_g=jnp.ones((1, dim), jnp.float32),
        norm_b=jnp.zeros((1, dim), jnp.float32),
        mlp_w1=w(ks[0], (dim, hidden_q)),
        mlp_b1=w(ks[1], (1, hidden_q)),
        mlp_w2=w(ks[2], (hidden_q, M)),
        mlp_b2=w(ks[3], (1, M)),
        qparam=jax.random.normal(ks[4], (M, dim), jnp.float32),  # torch.randn
    )

    def ca(kbase):
        kk = jax.random.split(kbase, 8)
        return dict(
            n1_g=jnp.ones((1, dim), jnp.float32),
            n1_b=jnp.zeros((1, dim), jnp.float32),
            wq=w(kk[0], (dim, dim)),             # qkv_bias=False -> no bias
            wkv=w(kk[1], (dim, 2 * dim)),        # qkv_bias=False -> no bias
            wp=w(kk[2], (dim, dim)),
            bp=w(kk[3], (1, dim)),               # proj_bias=True
            n2_g=jnp.ones((1, dim), jnp.float32),
            n2_b=jnp.zeros((1, dim), jnp.float32),
            f1_w=w(kk[4], (dim, hidden_f)),
            f1_b=w(kk[5], (1, hidden_f)),        # ffn_bias=True
            f2_w=w(kk[6], (hidden_f, dim)),
            f2_b=w(kk[7], (1, dim)),
        )

    return dict(front=front, ca1=ca(ks[5]), ca2=ca(ks[6]))


if __name__ == "__main__":
    # Small shapes consistent with the module: B=2, N=17 (1 cls + 16 patch tokens),
    # dim=64, num_heads=2, mlp_ratio=4, num_compressed_tokens=8.
    # NOTE: real model dims should have C a multiple of 128 and M >= 8 for lane-dense stores.
    B, N, dim = 2, 17, 64
    num_heads, mlp_ratio, M = 2, 4.0, 8

    key = jax.random.PRNGKey(0)
    kx, kp = jax.random.split(key)
    x = jax.random.normal(kx, (B, N, dim), jnp.float32)
    params = init_params(kp, dim, mlp_ratio, M)          # f32 master params (for reference)
    kparams = prepare_kernel_params(params, num_heads)   # bf16 weights, scale folded into wq

    fwd = jax.jit(functools.partial(compressor_mlp_forward, num_heads=num_heads))
    out = jax.block_until_ready(fwd(x, kparams))

    assert out.shape == (B, 1 + M, dim), out.shape
    ref = reference_forward(x, params, num_heads)
    # Tolerance loosened vs. the all-f32 version: matmul operands are bf16 (f32 accumulation).
    np.testing.assert_allclose(np.asarray(out), np.asarray(ref), rtol=3e-2, atol=3e-2)

    print("KERNEL_OK")
</pallas_src>

<mosaic_0001>
module attributes {stable_mosaic.version = 11 : i64} {
  func.func @fused_compressor_kernel(%arg0: i32, %arg1: memref<1x16x64xf32, #tpu.memory_space<vmem>>, %arg2: memref<1x64xf32, #tpu.memory_space<vmem>>, %arg3: memref<1x64xf32, #tpu.memory_space<vmem>>, %arg4: memref<64x16xbf16, #tpu.memory_space<vmem>>, %arg5: memref<1x16xf32, #tpu.memory_space<vmem>>, %arg6: memref<16x8xbf16, #tpu.memory_space<vmem>>, %arg7: memref<1x8xf32, #tpu.memory_space<vmem>>, %arg8: memref<8x64xf32, #tpu.memory_space<vmem>>, %arg9: memref<1x64xf32, #tpu.memory_space<vmem>>, %arg10: memref<1x64xf32, #tpu.memory_space<vmem>>, %arg11: memref<64x64xbf16, #tpu.memory_space<vmem>>, %arg12: memref<64x128xbf16, #tpu.memory_space<vmem>>, %arg13: memref<64x64xbf16, #tpu.memory_space<vmem>>, %arg14: memref<1x64xf32, #tpu.memory_space<vmem>>, %arg15: memref<1x64xf32, #tpu.memory_space<vmem>>, %arg16: memref<1x64xf32, #tpu.memory_space<vmem>>, %arg17: memref<64x256xbf16, #tpu.memory_space<vmem>>, %arg18: memref<1x256xf32, #tpu.memory_space<vmem>>, %arg19: memref<256x64xbf16, #tpu.memory_space<vmem>>, %arg20: memref<1x64xf32, #tpu.memory_space<vmem>>, %arg21: memref<1x64xf32, #tpu.memory_space<vmem>>, %arg22: memref<1x64xf32, #tpu.memory_space<vmem>>, %arg23: memref<64x64xbf16, #tpu.memory_space<vmem>>, %arg24: memref<64x128xbf16, #tpu.memory_space<vmem>>, %arg25: memref<64x64xbf16, #tpu.memory_space<vmem>>, %arg26: memref<1x64xf32, #tpu.memory_space<vmem>>, %arg27: memref<1x64xf32, #tpu.memory_space<vmem>>, %arg28: memref<1x64xf32, #tpu.memory_space<vmem>>, %arg29: memref<64x256xbf16, #tpu.memory_space<vmem>>, %arg30: memref<1x256xf32, #tpu.memory_space<vmem>>, %arg31: memref<256x64xbf16, #tpu.memory_space<vmem>>, %arg32: memref<1x64xf32, #tpu.memory_space<vmem>>, %arg33: memref<1x8x64xf32, #tpu.memory_space<vmem>>) attributes {dimension_semantics = [#tpu.dimension_semantics<parallel>], iteration_bounds = array<i64: 2>, scalar_prefetch = 0 : i64, scratch_operands = 0 : i64, tpu.core_type = #tpu.core_type<tc>, window_params = [{transform_indices = @transform_0, window_bounds = array<i64: 1, 16, 64>}, {pipeline_mode = #tpu.pipeline_mode<synchronous>, transform_indices = @transform_1, window_bounds = array<i64: 1, 64>}, {pipeline_mode = #tpu.pipeline_mode<synchronous>, transform_indices = @transform_2, window_bounds = array<i64: 1, 64>}, {pipeline_mode = #tpu.pipeline_mode<synchronous>, transform_indices = @transform_3, window_bounds = array<i64: 64, 16>}, {pipeline_mode = #tpu.pipeline_mode<synchronous>, transform_indices = @transform_4, window_bounds = array<i64: 1, 16>}, {pipeline_mode = #tpu.pipeline_mode<synchronous>, transform_indices = @transform_5, window_bounds = array<i64: 16, 8>}, {pipeline_mode = #tpu.pipeline_mode<synchronous>, transform_indices = @transform_6, window_bounds = array<i64: 1, 8>}, {pipeline_mode = #tpu.pipeline_mode<synchronous>, transform_indices = @transform_7, window_bounds = array<i64: 8, 64>}, {pipeline_mode = #tpu.pipeline_mode<synchronous>, transform_indices = @transform_8, window_bounds = array<i64: 1, 64>}, {pipeline_mode = #tpu.pipeline_mode<synchronous>, transform_indices = @transform_9, window_bounds = array<i64: 1, 64>}, {pipeline_mode = #tpu.pipeline_mode<synchronous>, transform_indices = @transform_10, window_bounds = array<i64: 64, 64>}, {pipeline_mode = #tpu.pipeline_mode<synchronous>, transform_indices = @transform_11, window_bounds = array<i64: 64, 128>}, {pipeline_mode = #tpu.pipeline_mode<synchronous>, transform_indices = @transform_12, window_bounds = array<i64: 64, 64>}, {pipeline_mode = #tpu.pipeline_mode<synchronous>, transform_indices = @transform_13, window_bounds = array<i64: 1, 64>}, {pipeline_mode = #tpu.pipeline_mode<synchronous>, transform_indices = @transform_14, window_bounds = array<i64: 1, 64>}, {pipeline_mode = #tpu.pipeline_mode<synchronous>, transform_indices = @transform_15, window_bounds = array<i64: 1, 64>}, {pipeline_mode = #tpu.pipeline_mode<synchronous>, transform_indices = @transform_16, window_bounds = array<i64: 64, 256>}, {pipeline_mode = #tpu.pipeline_mode<synchronous>, transform_indices = @transform_17, window_bounds = array<i64: 1, 256>}, {pipeline_mode = #tpu.pipeline_mode<synchronous>, transform_indices = @transform_18, window_bounds = array<i64: 256, 64>}, {pipeline_mode = #tpu.pipeline_mode<synchronous>, transform_indices = @transform_19, window_bounds = array<i64: 1, 64>}, {pipeline_mode = #tpu.pipeline_mode<synchronous>, transform_indices = @transform_20, window_bounds = array<i64: 1, 64>}, {pipeline_mode = #tpu.pipeline_mode<synchronous>, transform_indices = @transform_21, window_bounds = array<i64: 1, 64>}, {pipeline_mode = #tpu.pipeline_mode<synchronous>, transform_indices = @transform_22, window_bounds = array<i64: 64, 64>}, {pipeline_mode = #tpu.pipeline_mode<synchronous>, transform_indices = @transform_23, window_bounds = array<i64: 64, 128>}, {pipeline_mode = #tpu.pipeline_mode<synchronous>, transform_indices = @transform_24, window_bounds = array<i64: 64, 64>}, {pipeline_mode = #tpu.pipeline_mode<synchronous>, transform_indices = @transform_25, window_bounds = array<i64: 1, 64>}, {pipeline_mode = #tpu.pipeline_mode<synchronous>, transform_indices = @transform_26, window_bounds = array<i64: 1, 64>}, {pipeline_mode = #tpu.pipeline_mode<synchronous>, transform_indices = @transform_27, window_bounds = array<i64: 1, 64>}, {pipeline_mode = #tpu.pipeline_mode<synchronous>, transform_indices = @transform_28, window_bounds = array<i64: 64, 256>}, {pipeline_mode = #tpu.pipeline_mode<synchronous>, transform_indices = @transform_29, window_bounds = array<i64: 1, 256>}, {pipeline_mode = #tpu.pipeline_mode<synchronous>, transform_indices = @transform_30, window_bounds = array<i64: 256, 64>}, {pipeline_mode = #tpu.pipeline_mode<synchronous>, transform_indices = @transform_31, window_bounds = array<i64: 1, 64>}, {transform_indices = @transform_32, window_bounds = array<i64: 1, 8, 64>}]} {
    %c0 = arith.constant 0 : index
    %c0_0 = arith.constant 0 : index
    %0 = vector.load %arg2[%c0, %c0_0] : memref<1x64xf32, #tpu.memory_space<vmem>>, vector<1x64xf32>
    %c0_1 = arith.constant 0 : index
    %c0_2 = arith.constant 0 : index
    %1 = vector.load %arg3[%c0_1, %c0_2] : memref<1x64xf32, #tpu.memory_space<vmem>>, vector<1x64xf32>
    %c0_3 = arith.constant 0 : index
    %c0_4 = arith.constant 0 : index
    %2 = vector.load %arg4[%c0_3, %c0_4] : memref<64x16xbf16, #tpu.memory_space<vmem>>, vector<64x16xbf16>
    %c0_5 = arith.constant 0 : index
    %c0_6 = arith.constant 0 : index
    %3 = vector.load %arg5[%c0_5, %c0_6] : memref<1x16xf32, #tpu.memory_space<vmem>>, vector<1x16xf32>
    %c0_7 = arith.constant 0 : index
    %c0_8 = arith.constant 0 : index
    %4 = vector.load %arg6[%c0_7, %c0_8] : memref<16x8xbf16, #tpu.memory_space<vmem>>, vector<16x8xbf16>
    %c0_9 = arith.constant 0 : index
    %c0_10 = arith.constant 0 : index
    %5 = vector.load %arg7[%c0_9, %c0_10] : memref<1x8xf32, #tpu.memory_space<vmem>>, vector<1x8xf32>
    %c0_11 = arith.constant 0 : index
    %c0_12 = arith.constant 0 : index
    %6 = vector.load %arg8[%c0_11, %c0_12] : memref<8x64xf32, #tpu.memory_space<vmem>>, vector<8x64xf32>
    %c0_13 = arith.constant 0 : index
    %c0_14 = arith.constant 0 : index
    %7 = vector.load %arg9[%c0_13, %c0_14] : memref<1x64xf32, #tpu.memory_space<vmem>>, vector<1x64xf32>
    %c0_15 = arith.constant 0 : index
    %c0_16 = arith.constant 0 : index
    %8 = vector.load %arg10[%c0_15, %c0_16] : memref<1x64xf32, #tpu.memory_space<vmem>>, vector<1x64xf32>
    %c0_17 = arith.constant 0 : index
    %c0_18 = arith.constant 0 : index
    %9 = vector.load %arg11[%c0_17, %c0_18] : memref<64x64xbf16, #tpu.memory_space<vmem>>, vector<64x64xbf16>
    %c0_19 = arith.constant 0 : index
    %c0_20 = arith.constant 0 : index
    %10 = vector.load %arg12[%c0_19, %c0_20] : memref<64x128xbf16, #tpu.memory_space<vmem>>, vector<64x128xbf16>
    %c0_21 = arith.constant 0 : index
    %c0_22 = arith.constant 0 : index
    %11 = vector.load %arg13[%c0_21, %c0_22] : memref<64x64xbf16, #tpu.memory_space<vmem>>, vector<64x64xbf16>
    %c0_23 = arith.constant 0 : index
    %c0_24 = arith.constant 0 : index
    %12 = vector.load %arg14[%c0_23, %c0_24] : memref<1x64xf32, #tpu.memory_space<vmem>>, vector<1x64xf32>
    %c0_25 = arith.constant 0 : index
    %c0_26 = arith.constant 0 : index
    %13 = vector.load %arg15[%c0_25, %c0_26] : memref<1x64xf32, #tpu.memory_space<vmem>>, vector<1x64xf32>
    %c0_27 = arith.constant 0 : index
    %c0_28 = arith.constant 0 : index
    %14 = vector.load %arg16[%c0_27, %c0_28] : memref<1x64xf32, #tpu.memory_space<vmem>>, vector<1x64xf32>
    %c0_29 = arith.constant 0 : index
    %c0_30 = arith.constant 0 : index
    %15 = vector.load %arg17[%c0_29, %c0_30] : memref<64x256xbf16, #tpu.memory_space<vmem>>, vector<64x256xbf16>
    %c0_31 = arith.constant 0 : index
    %c0_32 = arith.constant 0 : index
    %16 = vector.load %arg18[%c0_31, %c0_32] : memref<1x256xf32, #tpu.memory_space<vmem>>, vector<1x256xf32>
    %c0_33 = arith.constant 0 : index
    %c0_34 = arith.constant 0 : index
    %17 = vector.load %arg19[%c0_33, %c0_34] : memref<256x64xbf16, #tpu.memory_space<vmem>>, vector<256x64xbf16>
    %c0_35 = arith.constant 0 : index
    %c0_36 = arith.constant 0 : index
    %18 = vector.load %arg20[%c0_35, %c0_36] : memref<1x64xf32, #tpu.memory_space<vmem>>, vector<1x64xf32>
    %c0_37 = arith.constant 0 : index
    %c0_38 = arith.constant 0 : index
    %19 = vector.load %arg21[%c0_37, %c0_38] : memref<1x64xf32, #tpu.memory_space<vmem>>, vector<1x64xf32>
    %c0_39 = arith.constant 0 : index
    %c0_40 = arith.constant 0 : index
    %20 = vector.load %arg22[%c0_39, %c0_40] : memref<1x64xf32, #tpu.memory_space<vmem>>, vector<1x64xf32>
    %c0_41 = arith.constant 0 : index
    %c0_42 = arith.constant 0 : index
    %21 = vector.load %arg23[%c0_41, %c0_42] : memref<64x64xbf16, #tpu.memory_space<vmem>>, vector<64x64xbf16>
    %c0_43 = arith.constant 0 : index
    %c0_44 = arith.constant 0 : index
    %22 = vector.load %arg24[%c0_43, %c0_44] : memref<64x128xbf16, #tpu.memory_space<vmem>>, vector<64x128xbf16>
    %c0_45 = arith.constant 0 : index
    %c0_46 = arith.constant 0 : index
    %23 = vector.load %arg25[%c0_45, %c0_46] : memref<64x64xbf16, #tpu.memory_space<vmem>>, vector<64x64xbf16>
    %c0_47 = arith.constant 0 : index
    %c0_48 = arith.constant 0 : index
    %24 = vector.load %arg26[%c0_47, %c0_48] : memref<1x64xf32, #tpu.memory_space<vmem>>, vector<1x64xf32>
    %c0_49 = arith.constant 0 : index
    %c0_50 = arith.constant 0 : index
    %25 = vector.load %arg27[%c0_49, %c0_50] : memref<1x64xf32, #tpu.memory_space<vmem>>, vector<1x64xf32>
    %c0_51 = arith.constant 0 : index
    %c0_52 = arith.constant 0 : index
    %26 = vector.load %arg28[%c0_51, %c0_52] : memref<1x64xf32, #tpu.memory_space<vmem>>, vector<1x64xf32>
    %c0_53 = arith.constant 0 : index
    %c0_54 = arith.constant 0 : index
    %27 = vector.load %arg29[%c0_53, %c0_54] : memref<64x256xbf16, #tpu.memory_space<vmem>>, vector<64x256xbf16>
    %c0_55 = arith.constant 0 : index
    %c0_56 = arith.constant 0 : index
    %28 = vector.load %arg30[%c0_55, %c0_56] : memref<1x256xf32, #tpu.memory_space<vmem>>, vector<1x256xf32>
    %c0_57 = arith.constant 0 : index
    %c0_58 = arith.constant 0 : index
    %29 = vector.load %arg31[%c0_57, %c0_58] : memref<256x64xbf16, #tpu.memory_space<vmem>>, vector<256x64xbf16>
    %c0_59 = arith.constant 0 : index
    %c0_60 = arith.constant 0 : index
    %30 = vector.load %arg32[%c0_59, %c0_60] : memref<1x64xf32, #tpu.memory_space<vmem>>, vector<1x64xf32>
    %c0_61 = arith.constant 0 : index
    %c0_62 = arith.constant 0 : index
    %c0_63 = arith.constant 0 : index
    %31 = vector.load %arg1[%c0_61, %c0_62, %c0_63] : memref<1x16x64xf32, #tpu.memory_space<vmem>>, vector<1x16x64xf32>
    %32 = vector.shape_cast %31 : vector<1x16x64xf32> to vector<16x64xf32>
    %cst = arith.constant dense<0.000000e+00> : vector<16xf32>
    %33 = vector.multi_reduction <add>, %32, %cst [1] : vector<16x64xf32> to vector<16xf32>
    %34 = vector.shape_cast %33 : vector<16xf32> to vector<16x1xf32>
    %cst_64 = arith.constant 6.400000e+01 : f32
    %35 = vector.broadcast %cst_64 : f32 to vector<16x1xf32>
    %36 = arith.divf %34, %35 : vector<16x1xf32>
    %37 = vector.broadcast %36 : vector<16x1xf32> to vector<16x64xf32>
    %38 = arith.subf %32, %37 : vector<16x64xf32>
    %39 = arith.mulf %38, %38 : vector<16x64xf32>
    %cst_65 = arith.constant dense<0.000000e+00> : vector<16xf32>
    %40 = vector.multi_reduction <add>, %39, %cst_65 [1] : vector<16x64xf32> to vector<16xf32>
    %41 = vector.shape_cast %40 : vector<16xf32> to vector<16x1xf32>
    %cst_66 = arith.constant 6.400000e+01 : f32
    %42 = vector.broadcast %cst_66 : f32 to vector<16x1xf32>
    %43 = arith.divf %41, %42 : vector<16x1xf32>
    %44 = vector.broadcast %36 : vector<16x1xf32> to vector<16x64xf32>
    %45 = arith.subf %32, %44 : vector<16x64xf32>
    %cst_67 = arith.constant 9.99999974E-6 : f32
    %46 = vector.broadcast %cst_67 : f32 to vector<16x1xf32>
    %47 = arith.addf %43, %46 : vector<16x1xf32>
    %48 = math.rsqrt %47 : vector<16x1xf32>
    %49 = vector.broadcast %48 : vector<16x1xf32> to vector<16x64xf32>
    %50 = arith.mulf %45, %49 : vector<16x64xf32>
    %51 = vector.broadcast %0 : vector<1x64xf32> to vector<16x64xf32>
    %52 = arith.mulf %50, %51 : vector<16x64xf32>
    %53 = vector.broadcast %1 : vector<1x64xf32> to vector<16x64xf32>
    %54 = arith.addf %52, %53 : vector<16x64xf32>
    %55 = arith.truncf %54 : vector<16x64xf32> to vector<16x64xbf16>
    %cst_68 = arith.constant dense<0.000000e+00> : vector<16x16xf32>
    %56 = tpu.matmul %55, %2, %cst_68 {dimension_numbers = #tpu.dot_dimension_numbers<[1], [0], [0], [1], [0, 0, 1, 1], [], []>} : vector<16x64xbf16>, vector<64x16xbf16>, vector<16x16xf32> -> vector<16x16xf32>
    %57 = vector.broadcast %3 : vector<1x16xf32> to vector<16x16xf32>
    %58 = arith.addf %56, %57 : vector<16x16xf32>
    %59 = arith.mulf %58, %58 : vector<16x16xf32>
    %60 = arith.mulf %58, %59 : vector<16x16xf32>
    %cst_69 = arith.constant 4.471500e-02 : f32
    %61 = vector.broadcast %cst_69 : f32 to vector<16x16xf32>
    %62 = arith.mulf %61, %60 : vector<16x16xf32>
    %63 = arith.addf %58, %62 : vector<16x16xf32>
    %cst_70 = arith.constant 0.797884583 : f32
    %64 = vector.broadcast %cst_70 : f32 to vector<16x16xf32>
    %65 = arith.mulf %64, %63 : vector<16x16xf32>
    %66 = math.tanh %65 : vector<16x16xf32>
    %cst_71 = arith.constant 1.000000e+00 : f32
    %67 = vector.broadcast %cst_71 : f32 to vector<16x16xf32>
    %68 = arith.addf %67, %66 : vector<16x16xf32>
    %cst_72 = arith.constant 5.000000e-01 : f32
    %69 = vector.broadcast %cst_72 : f32 to vector<16x16xf32>
    %70 = arith.mulf %69, %68 : vector<16x16xf32>
    %71 = arith.mulf %58, %70 : vector<16x16xf32>
    %72 = arith.truncf %71 : vector<16x16xf32> to vector<16x16xbf16>
    %cst_73 = arith.constant dense<0.000000e+00> : vector<16x8xf32>
    %73 = tpu.matmul %72, %4, %cst_73 {dimension_numbers = #tpu.dot_dimension_numbers<[1], [0], [0], [1], [0, 0, 1, 1], [], []>} : vector<16x16xbf16>, vector<16x8xbf16>, vector<16x8xf32> -> vector<16x8xf32>
    %74 = vector.broadcast %5 : vector<1x8xf32> to vector<16x8xf32>
    %75 = arith.addf %73, %74 : vector<16x8xf32>
    %cst_74 = arith.constant dense<0xFF800000> : vector<8xf32>
    %76 = vector.multi_reduction <maximumf>, %75, %cst_74 [0] : vector<16x8xf32> to vector<8xf32>
    %77 = vector.shape_cast %76 : vector<8xf32> to vector<1x8xf32>
    %78 = vector.broadcast %77 : vector<1x8xf32> to vector<16x8xf32>
    %79 = arith.subf %75, %78 : vector<16x8xf32>
    %80 = math.exp %79 : vector<16x8xf32>
    %cst_75 = arith.constant dense<0.000000e+00> : vector<8xf32>
    %81 = vector.multi_reduction <add>, %80, %cst_75 [0] : vector<16x8xf32> to vector<8xf32>
    %82 = vector.shape_cast %81 : vector<8xf32> to vector<1x8xf32>
    %83 = vector.broadcast %82 : vector<1x8xf32> to vector<16x8xf32>
    %84 = arith.divf %80, %83 : vector<16x8xf32>
    %85 = arith.truncf %84 : vector<16x8xf32> to vector<16x8xbf16>
    %cst_76 = arith.constant dense<0.000000e+00> : vector<8x64xf32>
    %86 = tpu.matmul %85, %55, %cst_76 {dimension_numbers = #tpu.dot_dimension_numbers<[0], [0], [1], [1], [0, 1, 1, 1], [], []>} : vector<16x8xbf16>, vector<16x64xbf16>, vector<8x64xf32> -> vector<8x64xf32>
    %87 = arith.addf %86, %6 : vector<8x64xf32>
    %cst_77 = arith.constant dense<0.000000e+00> : vector<16xf32>
    %88 = vector.multi_reduction <add>, %54, %cst_77 [1] : vector<16x64xf32> to vector<16xf32>
    %89 = vector.shape_cast %88 : vector<16xf32> to vector<16x1xf32>
    %cst_78 = arith.constant 6.400000e+01 : f32
    %90 = vector.broadcast %cst_78 : f32 to vector<16x1xf32>
    %91 = arith.divf %89, %90 : vector<16x1xf32>
    %92 = vector.broadcast %91 : vector<16x1xf32> to vector<16x64xf32>
    %93 = arith.subf %54, %92 : vector<16x64xf32>
    %94 = arith.mulf %93, %93 : vector<16x64xf32>
    %cst_79 = arith.constant dense<0.000000e+00> : vector<16xf32>
    %95 = vector.multi_reduction <add>, %94, %cst_79 [1] : vector<16x64xf32> to vector<16xf32>
    %96 = vector.shape_cast %95 : vector<16xf32> to vector<16x1xf32>
    %cst_80 = arith.constant 6.400000e+01 : f32
    %97 = vector.broadcast %cst_80 : f32 to vector<16x1xf32>
    %98 = arith.divf %96, %97 : vector<16x1xf32>
    %99 = vector.broadcast %91 : vector<16x1xf32> to vector<16x64xf32>
    %100 = arith.subf %54, %99 : vector<16x64xf32>
    %cst_81 = arith.constant 9.99999974E-6 : f32
    %101 = vector.broadcast %cst_81 : f32 to vector<16x1xf32>
    %102 = arith.addf %98, %101 : vector<16x1xf32>
    %103 = math.rsqrt %102 : vector<16x1xf32>
    %104 = vector.broadcast %103 : vector<16x1xf32> to vector<16x64xf32>
    %105 = arith.mulf %100, %104 : vector<16x64xf32>
    %106 = vector.broadcast %7 : vector<1x64xf32> to vector<16x64xf32>
    %107 = arith.mulf %105, %106 : vector<16x64xf32>
    %108 = vector.broadcast %8 : vector<1x64xf32> to vector<16x64xf32>
    %109 = arith.addf %107, %108 : vector<16x64xf32>
    %110 = arith.truncf %109 : vector<16x64xf32> to vector<16x64xbf16>
    %cst_82 = arith.constant dense<0.000000e+00> : vector<16x128xf32>
    %111 = tpu.matmul %110, %10, %cst_82 {dimension_numbers = #tpu.dot_dimension_numbers<[1], [0], [0], [1], [0, 0, 1, 1], [], []>} : vector<16x64xbf16>, vector<64x128xbf16>, vector<16x128xf32> -> vector<16x128xf32>
    %112 = arith.truncf %87 : vector<8x64xf32> to vector<8x64xbf16>
    %cst_83 = arith.constant dense<0.000000e+00> : vector<8x64xf32>
    %113 = tpu.matmul %112, %9, %cst_83 {dimension_numbers = #tpu.dot_dimension_numbers<[1], [0], [0], [1], [0, 0, 1, 1], [], []>} : vector<8x64xbf16>, vector<64x64xbf16>, vector<8x64xf32> -> vector<8x64xf32>
    %cst_84 = arith.constant 0.000000e+00 : f32
    %114 = vector.broadcast %cst_84 : f32 to vector<8x64xf32>
    %115 = vector.extract_strided_slice %113 {offsets = [0, 0], sizes = [8, 32], strides = [1, 1]} : vector<8x64xf32> to vector<8x32xf32>
    %116 = arith.truncf %115 : vector<8x32xf32> to vector<8x32xbf16>
    %117 = vector.extract_strided_slice %111 {offsets = [0, 0], sizes = [16, 32], strides = [1, 1]} : vector<16x128xf32> to vector<16x32xf32>
    %118 = arith.truncf %117 : vector<16x32xf32> to vector<16x32xbf16>
    %119 = vector.extract_strided_slice %111 {offsets = [0, 64], sizes = [16, 32], strides = [1, 1]} : vector<16x128xf32> to vector<16x32xf32>
    %120 = arith.truncf %119 : vector<16x32xf32> to vector<16x32xbf16>
    %cst_85 = arith.constant dense<0.000000e+00> : vector<8x16xf32>
    %121 = tpu.matmul %116, %118, %cst_85 {dimension_numbers = #tpu.dot_dimension_numbers<[1], [1], [0], [0], [0, 0, 1, 0], [], []>} : vector<8x32xbf16>, vector<16x32xbf16>, vector<8x16xf32> -> vector<8x16xf32>
    %cst_86 = arith.constant dense<0xFF800000> : vector<8xf32>
    %122 = vector.multi_reduction <maximumf>, %121, %cst_86 [1] : vector<8x16xf32> to vector<8xf32>
    %cst_87 = arith.constant 0xFF800000 : f32
    %123 = vector.broadcast %cst_87 : f32 to vector<8xf32>
    %124 = arith.maximumf %123, %122 : vector<8xf32>
    %125 = vector.shape_cast %124 : vector<8xf32> to vector<8x1xf32>
    %126 = vector.broadcast %125 : vector<8x1xf32> to vector<8x16xf32>
    %127 = arith.subf %121, %126 : vector<8x16xf32>
    %128 = math.exp %127 : vector<8x16xf32>
    %cst_88 = arith.constant dense<0.000000e+00> : vector<8xf32>
    %129 = vector.multi_reduction <add>, %128, %cst_88 [1] : vector<8x16xf32> to vector<8xf32>
    %130 = vector.shape_cast %129 : vector<8xf32> to vector<8x1xf32>
    %131 = vector.broadcast %130 : vector<8x1xf32> to vector<8x16xf32>
    %132 = arith.divf %128, %131 : vector<8x16xf32>
    %133 = arith.truncf %132 : vector<8x16xf32> to vector<8x16xbf16>
    %cst_89 = arith.constant dense<0.000000e+00> : vector<8x32xf32>
    %134 = tpu.matmul %133, %120, %cst_89 {dimension_numbers = #tpu.dot_dimension_numbers<[1], [0], [0], [1], [0, 0, 1, 1], [], []>} : vector<8x16xbf16>, vector<16x32xbf16>, vector<8x32xf32> -> vector<8x32xf32>
    %135 = arith.truncf %134 : vector<8x32xf32> to vector<8x32xbf16>
    %136 = vector.extract_strided_slice %11 {offsets = [0, 0], sizes = [32, 64], strides = [1, 1]} : vector<64x64xbf16> to vector<32x64xbf16>
    %cst_90 = arith.constant dense<0.000000e+00> : vector<8x64xf32>
    %137 = tpu.matmul %135, %136, %cst_90 {dimension_numbers = #tpu.dot_dimension_numbers<[1], [0], [0], [1], [0, 0, 1, 1], [], []>} : vector<8x32xbf16>, vector<32x64xbf16>, vector<8x64xf32> -> vector<8x64xf32>
    %138 = arith.addf %114, %137 : vector<8x64xf32>
    %139 = vector.extract_strided_slice %113 {offsets = [0, 32], sizes = [8, 32], strides = [1, 1]} : vector<8x64xf32> to vector<8x32xf32>
    %140 = arith.truncf %139 : vector<8x32xf32> to vector<8x32xbf16>
    %141 = vector.extract_strided_slice %111 {offsets = [0, 32], sizes = [16, 32], strides = [1, 1]} : vector<16x128xf32> to vector<16x32xf32>
    %142 = arith.truncf %141 : vector<16x32xf32> to vector<16x32xbf16>
    %143 = vector.extract_strided_slice %111 {offsets = [0, 96], sizes = [16, 32], strides = [1, 1]} : vector<16x128xf32> to vector<16x32xf32>
    %144 = arith.truncf %143 : vector<16x32xf32> to vector<16x32xbf16>
    %cst_91 = arith.constant dense<0.000000e+00> : vector<8x16xf32>
    %145 = tpu.matmul %140, %142, %cst_91 {dimension_numbers = #tpu.dot_dimension_numbers<[1], [1], [0], [0], [0, 0, 1, 0], [], []>} : vector<8x32xbf16>, vector<16x32xbf16>, vector<8x16xf32> -> vector<8x16xf32>
    %cst_92 = arith.constant dense<0xFF800000> : vector<8xf32>
    %146 = vector.multi_reduction <maximumf>, %145, %cst_92 [1] : vector<8x16xf32> to vector<8xf32>
    %cst_93 = arith.constant 0xFF800000 : f32
    %147 = vector.broadcast %cst_93 : f32 to vector<8xf32>
    %148 = arith.maximumf %147, %146 : vector<8xf32>
    %149 = vector.shape_cast %148 : vector<8xf32> to vector<8x1xf32>
    %150 = vector.broadcast %149 : vector<8x1xf32> to vector<8x16xf32>
    %151 = arith.subf %145, %150 : vector<8x16xf32>
    %152 = math.exp %151 : vector<8x16xf32>
    %cst_94 = arith.constant dense<0.000000e+00> : vector<8xf32>
    %153 = vector.multi_reduction <add>, %152, %cst_94 [1] : vector<8x16xf32> to vector<8xf32>
    %154 = vector.shape_cast %153 : vector<8xf32> to vector<8x1xf32>
    %155 = vector.broadcast %154 : vector<8x1xf32> to vector<8x16xf32>
    %156 = arith.divf %152, %155 : vector<8x16xf32>
    %157 = arith.truncf %156 : vector<8x16xf32> to vector<8x16xbf16>
    %cst_95 = arith.constant dense<0.000000e+00> : vector<8x32xf32>
    %158 = tpu.matmul %157, %144, %cst_95 {dimension_numbers = #tpu.dot_dimension_numbers<[1], [0], [0], [1], [0, 0, 1, 1], [], []>} : vector<8x16xbf16>, vector<16x32xbf16>, vector<8x32xf32> -> vector<8x32xf32>
    %159 = arith.truncf %158 : vector<8x32xf32> to vector<8x32xbf16>
    %160 = vector.extract_strided_slice %11 {offsets = [32, 0], sizes = [32, 64], strides = [1, 1]} : vector<64x64xbf16> to vector<32x64xbf16>
    %cst_96 = arith.constant dense<0.000000e+00> : vector<8x64xf32>
    %161 = tpu.matmul %159, %160, %cst_96 {dimension_numbers = #tpu.dot_dimension_numbers<[1], [0], [0], [1], [0, 0, 1, 1], [], []>} : vector<8x32xbf16>, vector<32x64xbf16>, vector<8x64xf32> -> vector<8x64xf32>
    %162 = arith.addf %138, %161 : vector<8x64xf32>
    %163 = arith.addf %87, %162 : vector<8x64xf32>
    %164 = vector.broadcast %12 : vector<1x64xf32> to vector<8x64xf32>
    %165 = arith.addf %163, %164 : vector<8x64xf32>
    %cst_97 = arith.constant dense<0.000000e+00> : vector<8xf32>
    %166 = vector.multi_reduction <add>, %165, %cst_97 [1] : vector<8x64xf32> to vector<8xf32>
    %167 = vector.shape_cast %166 : vector<8xf32> to vector<8x1xf32>
    %cst_98 = arith.constant 6.400000e+01 : f32
    %168 = vector.broadcast %cst_98 : f32 to vector<8x1xf32>
    %169 = arith.divf %167, %168 : vector<8x1xf32>
    %170 = vector.broadcast %169 : vector<8x1xf32> to vector<8x64xf32>
    %171 = arith.subf %165, %170 : vector<8x64xf32>
    %172 = arith.mulf %171, %171 : vector<8x64xf32>
    %cst_99 = arith.constant dense<0.000000e+00> : vector<8xf32>
    %173 = vector.multi_reduction <add>, %172, %cst_99 [1] : vector<8x64xf32> to vector<8xf32>
    %174 = vector.shape_cast %173 : vector<8xf32> to vector<8x1xf32>
    %cst_100 = arith.constant 6.400000e+01 : f32
    %175 = vector.broadcast %cst_100 : f32 to vector<8x1xf32>
    %176 = arith.divf %174, %175 : vector<8x1xf32>
    %177 = vector.broadcast %169 : vector<8x1xf32> to vector<8x64xf32>
    %178 = arith.subf %165, %177 : vector<8x64xf32>
    %cst_101 = arith.constant 9.99999974E-6 : f32
    %179 = vector.broadcast %cst_101 : f32 to vector<8x1xf32>
    %180 = arith.addf %176, %179 : vector<8x1xf32>
    %181 = math.rsqrt %180 : vector<8x1xf32>
    %182 = vector.broadcast %181 : vector<8x1xf32> to vector<8x64xf32>
    %183 = arith.mulf %178, %182 : vector<8x64xf32>
    %184 = vector.broadcast %13 : vector<1x64xf32> to vector<8x64xf32>
    %185 = arith.mulf %183, %184 : vector<8x64xf32>
    %186 = vector.broadcast %14 : vector<1x64xf32> to vector<8x64xf32>
    %187 = arith.addf %185, %186 : vector<8x64xf32>
    %188 = arith.truncf %187 : vector<8x64xf32> to vector<8x64xbf16>
    %cst_102 = arith.constant dense<0.000000e+00> : vector<8x256xf32>
    %189 = tpu.matmul %188, %15, %cst_102 {dimension_numbers = #tpu.dot_dimension_numbers<[1], [0], [0], [1], [0, 0, 1, 1], [], []>} : vector<8x64xbf16>, vector<64x256xbf16>, vector<8x256xf32> -> vector<8x256xf32>
    %190 = vector.broadcast %16 : vector<1x256xf32> to vector<8x256xf32>
    %191 = arith.addf %189, %190 : vector<8x256xf32>
    %192 = arith.mulf %191, %191 : vector<8x256xf32>
    %193 = arith.mulf %191, %192 : vector<8x256xf32>
    %cst_103 = arith.constant 4.471500e-02 : f32
    %194 = vector.broadcast %cst_103 : f32 to vector<8x256xf32>
    %195 = arith.mulf %194, %193 : vector<8x256xf32>
    %196 = arith.addf %191, %195 : vector<8x256xf32>
    %cst_104 = arith.constant 0.797884583 : f32
    %197 = vector.broadcast %cst_104 : f32 to vector<8x256xf32>
    %198 = arith.mulf %197, %196 : vector<8x256xf32>
    %199 = math.tanh %198 : vector<8x256xf32>
    %cst_105 = arith.constant 1.000000e+00 : f32
    %200 = vector.broadcast %cst_105 : f32 to vector<8x256xf32>
    %201 = arith.addf %200, %199 : vector<8x256xf32>
    %cst_106 = arith.constant 5.000000e-01 : f32
    %202 = vector.broadcast %cst_106 : f32 to vector<8x256xf32>
    %203 = arith.mulf %202, %201 : vector<8x256xf32>
    %204 = arith.mulf %191, %203 : vector<8x256xf32>
    %205 = arith.truncf %204 : vector<8x256xf32> to vector<8x256xbf16>
    %cst_107 = arith.constant dense<0.000000e+00> : vector<8x64xf32>
    %206 = tpu.matmul %205, %17, %cst_107 {dimension_numbers = #tpu.dot_dimension_numbers<[1], [0], [0], [1], [0, 0, 1, 1], [], []>} : vector<8x256xbf16>, vector<256x64xbf16>, vector<8x64xf32> -> vector<8x64xf32>
    %207 = arith.addf %165, %206 : vector<8x64xf32>
    %208 = vector.broadcast %18 : vector<1x64xf32> to vector<8x64xf32>
    %209 = arith.addf %207, %208 : vector<8x64xf32>
    %210 = tpu.concatenate %54, %209 in 0 : vector<16x64xf32>, vector<8x64xf32> -> vector<24x64xf32>
    %cst_108 = arith.constant dense<0.000000e+00> : vector<24xf32>
    %211 = vector.multi_reduction <add>, %210, %cst_108 [1] : vector<24x64xf32> to vector<24xf32>
    %212 = vector.shape_cast %211 : vector<24xf32> to vector<24x1xf32>
    %cst_109 = arith.constant 6.400000e+01 : f32
    %213 = vector.broadcast %cst_109 : f32 to vector<24x1xf32>
    %214 = arith.divf %212, %213 : vector<24x1xf32>
    %215 = vector.broadcast %214 : vector<24x1xf32> to vector<24x64xf32>
    %216 = arith.subf %210, %215 : vector<24x64xf32>
    %217 = arith.mulf %216, %216 : vector<24x64xf32>
    %cst_110 = arith.constant dense<0.000000e+00> : vector<24xf32>
    %218 = vector.multi_reduction <add>, %217, %cst_110 [1] : vector<24x64xf32> to vector<24xf32>
    %219 = vector.shape_cast %218 : vector<24xf32> to vector<24x1xf32>
    %cst_111 = arith.constant 6.400000e+01 : f32
    %220 = vector.broadcast %cst_111 : f32 to vector<24x1xf32>
    %221 = arith.divf %219, %220 : vector<24x1xf32>
    %222 = vector.broadcast %214 : vector<24x1xf32> to vector<24x64xf32>
    %223 = arith.subf %210, %222 : vector<24x64xf32>
    %cst_112 = arith.constant 9.99999974E-6 : f32
    %224 = vector.broadcast %cst_112 : f32 to vector<24x1xf32>
    %225 = arith.addf %221, %224 : vector<24x1xf32>
    %226 = math.rsqrt %225 : vector<24x1xf32>
    %227 = vector.broadcast %226 : vector<24x1xf32> to vector<24x64xf32>
    %228 = arith.mulf %223, %227 : vector<24x64xf32>
    %229 = vector.broadcast %19 : vector<1x64xf32> to vector<24x64xf32>
    %230 = arith.mulf %228, %229 : vector<24x64xf32>
    %231 = vector.broadcast %20 : vector<1x64xf32> to vector<24x64xf32>
    %232 = arith.addf %230, %231 : vector<24x64xf32>
    %233 = arith.truncf %232 : vector<24x64xf32> to vector<24x64xbf16>
    %cst_113 = arith.constant dense<0.000000e+00> : vector<24x128xf32>
    %234 = tpu.matmul %233, %22, %cst_113 {dimension_numbers = #tpu.dot_dimension_numbers<[1], [0], [0], [1], [0, 0, 1, 1], [], []>} : vector<24x64xbf16>, vector<64x128xbf16>, vector<24x128xf32> -> vector<24x128xf32>
    %235 = arith.truncf %209 : vector<8x64xf32> to vector<8x64xbf16>
    %cst_114 = arith.constant dense<0.000000e+00> : vector<8x64xf32>
    %236 = tpu.matmul %235, %21, %cst_114 {dimension_numbers = #tpu.dot_dimension_numbers<[1], [0], [0], [1], [0, 0, 1, 1], [], []>} : vector<8x64xbf16>, vector<64x64xbf16>, vector<8x64xf32> -> vector<8x64xf32>
    %cst_115 = arith.constant 0.000000e+00 : f32
    %237 = vector.broadcast %cst_115 : f32 to vector<8x64xf32>
    %238 = vector.extract_strided_slice %236 {offsets = [0, 0], sizes = [8, 32], strides = [1, 1]} : vector<8x64xf32> to vector<8x32xf32>
    %239 = arith.truncf %238 : vector<8x32xf32> to vector<8x32xbf16>
    %240 = vector.extract_strided_slice %234 {offsets = [0, 0], sizes = [24, 32], strides = [1, 1]} : vector<24x128xf32> to vector<24x32xf32>
    %241 = arith.truncf %240 : vector<24x32xf32> to vector<24x32xbf16>
    %242 = vector.extract_strided_slice %234 {offsets = [0, 64], sizes = [24, 32], strides = [1, 1]} : vector<24x128xf32> to vector<24x32xf32>
    %243 = arith.truncf %242 : vector<24x32xf32> to vector<24x32xbf16>
    %cst_116 = arith.constant dense<0.000000e+00> : vector<8x24xf32>
    %244 = tpu.matmul %239, %241, %cst_116 {dimension_numbers = #tpu.dot_dimension_numbers<[1], [1], [0], [0], [0, 0, 1, 0], [], []>} : vector<8x32xbf16>, vector<24x32xbf16>, vector<8x24xf32> -> vector<8x24xf32>
    %cst_117 = arith.constant dense<0xFF800000> : vector<8xf32>
    %245 = vector.multi_reduction <maximumf>, %244, %cst_117 [1] : vector<8x24xf32> to vector<8xf32>
    %cst_118 = arith.constant 0xFF800000 : f32
    %246 = vector.broadcast %cst_118 : f32 to vector<8xf32>
    %247 = arith.maximumf %246, %245 : vector<8xf32>
    %248 = vector.shape_cast %247 : vector<8xf32> to vector<8x1xf32>
    %249 = vector.broadcast %248 : vector<8x1xf32> to vector<8x24xf32>
    %250 = arith.subf %244, %249 : vector<8x24xf32>
    %251 = math.exp %250 : vector<8x24xf32>
    %cst_119 = arith.constant dense<0.000000e+00> : vector<8xf32>
    %252 = vector.multi_reduction <add>, %251, %cst_119 [1] : vector<8x24xf32> to vector<8xf32>
    %253 = vector.shape_cast %252 : vector<8xf32> to vector<8x1xf32>
    %254 = vector.broadcast %253 : vector<8x1xf32> to vector<8x24xf32>
    %255 = arith.divf %251, %254 : vector<8x24xf32>
    %256 = arith.truncf %255 : vector<8x24xf32> to vector<8x24xbf16>
    %cst_120 = arith.constant dense<0.000000e+00> : vector<8x32xf32>
    %257 = tpu.matmul %256, %243, %cst_120 {dimension_numbers = #tpu.dot_dimension_numbers<[1], [0], [0], [1], [0, 0, 1, 1], [], []>} : vector<8x24xbf16>, vector<24x32xbf16>, vector<8x32xf32> -> vector<8x32xf32>
    %258 = arith.truncf %257 : vector<8x32xf32> to vector<8x32xbf16>
    %259 = vector.extract_strided_slice %23 {offsets = [0, 0], sizes = [32, 64], strides = [1, 1]} : vector<64x64xbf16> to vector<32x64xbf16>
    %cst_121 = arith.constant dense<0.000000e+00> : vector<8x64xf32>
    %260 = tpu.matmul %258, %259, %cst_121 {dimension_numbers = #tpu.dot_dimension_numbers<[1], [0], [0], [1], [0, 0, 1, 1], [], []>} : vector<8x32xbf16>, vector<32x64xbf16>, vector<8x64xf32> -> vector<8x64xf32>
    %261 = arith.addf %237, %260 : vector<8x64xf32>
    %262 = vector.extract_strided_slice %236 {offsets = [0, 32], sizes = [8, 32], strides = [1, 1]} : vector<8x64xf32> to vector<8x32xf32>
    %263 = arith.truncf %262 : vector<8x32xf32> to vector<8x32xbf16>
    %264 = vector.extract_strided_slice %234 {offsets = [0, 32], sizes = [24, 32], strides = [1, 1]} : vector<24x128xf32> to vector<24x32xf32>
    %265 = arith.truncf %264 : vector<24x32xf32> to vector<24x32xbf16>
    %266 = vector.extract_strided_slice %234 {offsets = [0, 96], sizes = [24, 32], strides = [1, 1]} : vector<24x128xf32> to vector<24x32xf32>
    %267 = arith.truncf %266 : vector<24x32xf32> to vector<24x32xbf16>
    %cst_122 = arith.constant dense<0.000000e+00> : vector<8x24xf32>
    %268 = tpu.matmul %263, %265, %cst_122 {dimension_numbers = #tpu.dot_dimension_numbers<[1], [1], [0], [0], [0, 0, 1, 0], [], []>} : vector<8x32xbf16>, vector<24x32xbf16>, vector<8x24xf32> -> vector<8x24xf32>
    %cst_123 = arith.constant dense<0xFF800000> : vector<8xf32>
    %269 = vector.multi_reduction <maximumf>, %268, %cst_123 [1] : vector<8x24xf32> to vector<8xf32>
    %cst_124 = arith.constant 0xFF800000 : f32
    %270 = vector.broadcast %cst_124 : f32 to vector<8xf32>
    %271 = arith.maximumf %270, %269 : vector<8xf32>
    %272 = vector.shape_cast %271 : vector<8xf32> to vector<8x1xf32>
    %273 = vector.broadcast %272 : vector<8x1xf32> to vector<8x24xf32>
    %274 = arith.subf %268, %273 : vector<8x24xf32>
    %275 = math.exp %274 : vector<8x24xf32>
    %cst_125 = arith.constant dense<0.000000e+00> : vector<8xf32>
    %276 = vector.multi_reduction <add>, %275, %cst_125 [1] : vector<8x24xf32> to vector<8xf32>
    %277 = vector.shape_cast %276 : vector<8xf32> to vector<8x1xf32>
    %278 = vector.broadcast %277 : vector<8x1xf32> to vector<8x24xf32>
    %279 = arith.divf %275, %278 : vector<8x24xf32>
    %280 = arith.truncf %279 : vector<8x24xf32> to vector<8x24xbf16>
    %cst_126 = arith.constant dense<0.000000e+00> : vector<8x32xf32>
    %281 = tpu.matmul %280, %267, %cst_126 {dimension_numbers = #tpu.dot_dimension_numbers<[1], [0], [0], [1], [0, 0, 1, 1], [], []>} : vector<8x24xbf16>, vector<24x32xbf16>, vector<8x32xf32> -> vector<8x32xf32>
    %282 = arith.truncf %281 : vector<8x32xf32> to vector<8x32xbf16>
    %283 = vector.extract_strided_slice %23 {offsets = [32, 0], sizes = [32, 64], strides = [1, 1]} : vector<64x64xbf16> to vector<32x64xbf16>
    %cst_127 = arith.constant dense<0.000000e+00> : vector<8x64xf32>
    %284 = tpu.matmul %282, %283, %cst_127 {dimension_numbers = #tpu.dot_dimension_numbers<[1], [0], [0], [1], [0, 0, 1, 1], [], []>} : vector<8x32xbf16>, vector<32x64xbf16>, vector<8x64xf32> -> vector<8x64xf32>
    %285 = arith.addf %261, %284 : vector<8x64xf32>
    %286 = arith.addf %209, %285 : vector<8x64xf32>
    %287 = vector.broadcast %24 : vector<1x64xf32> to vector<8x64xf32>
    %288 = arith.addf %286, %287 : vector<8x64xf32>
    %cst_128 = arith.constant dense<0.000000e+00> : vector<8xf32>
    %289 = vector.multi_reduction <add>, %288, %cst_128 [1] : vector<8x64xf32> to vector<8xf32>
    %290 = vector.shape_cast %289 : vector<8xf32> to vector<8x1xf32>
    %cst_129 = arith.constant 6.400000e+01 : f32
    %291 = vector.broadcast %cst_129 : f32 to vector<8x1xf32>
    %292 = arith.divf %290, %291 : vector<8x1xf32>
    %293 = vector.broadcast %292 : vector<8x1xf32> to vector<8x64xf32>
    %294 = arith.subf %288, %293 : vector<8x64xf32>
    %295 = arith.mulf %294, %294 : vector<8x64xf32>
    %cst_130 = arith.constant dense<0.000000e+00> : vector<8xf32>
    %296 = vector.multi_reduction <add>, %295, %cst_130 [1] : vector<8x64xf32> to vector<8xf32>
    %297 = vector.shape_cast %296 : vector<8xf32> to vector<8x1xf32>
    %cst_131 = arith.constant 6.400000e+01 : f32
    %298 = vector.broadcast %cst_131 : f32 to vector<8x1xf32>
    %299 = arith.divf %297, %298 : vector<8x1xf32>
    %300 = vector.broadcast %292 : vector<8x1xf32> to vector<8x64xf32>
    %301 = arith.subf %288, %300 : vector<8x64xf32>
    %cst_132 = arith.constant 9.99999974E-6 : f32
    %302 = vector.broadcast %cst_132 : f32 to vector<8x1xf32>
    %303 = arith.addf %299, %302 : vector<8x1xf32>
    %304 = math.rsqrt %303 : vector<8x1xf32>
    %305 = vector.broadcast %304 : vector<8x1xf32> to vector<8x64xf32>
    %306 = arith.mulf %301, %305 : vector<8x64xf32>
    %307 = vector.broadcast %25 : vector<1x64xf32> to vector<8x64xf32>
    %308 = arith.mulf %306, %307 : vector<8x64xf32>
    %309 = vector.broadcast %26 : vector<1x64xf32> to vector<8x64xf32>
    %310 = arith.addf %308, %309 : vector<8x64xf32>
    %311 = arith.truncf %310 : vector<8x64xf32> to vector<8x64xbf16>
    %cst_133 = arith.constant dense<0.000000e+00> : vector<8x256xf32>
    %312 = tpu.matmul %311, %27, %cst_133 {dimension_numbers = #tpu.dot_dimension_numbers<[1], [0], [0], [1], [0, 0, 1, 1], [], []>} : vector<8x64xbf16>, vector<64x256xbf16>, vector<8x256xf32> -> vector<8x256xf32>
    %313 = vector.broadcast %28 : vector<1x256xf32> to vector<8x256xf32>
    %314 = arith.addf %312, %313 : vector<8x256xf32>
    %315 = arith.mulf %314, %314 : vector<8x256xf32>
    %316 = arith.mulf %314, %315 : vector<8x256xf32>
    %cst_134 = arith.constant 4.471500e-02 : f32
    %317 = vector.broadcast %cst_134 : f32 to vector<8x256xf32>
    %318 = arith.mulf %317, %316 : vector<8x256xf32>
    %319 = arith.addf %314, %318 : vector<8x256xf32>
    %cst_135 = arith.constant 0.797884583 : f32
    %320 = vector.broadcast %cst_135 : f32 to vector<8x256xf32>
    %321 = arith.mulf %320, %319 : vector<8x256xf32>
    %322 = math.tanh %321 : vector<8x256xf32>
    %cst_136 = arith.constant 1.000000e+00 : f32
    %323 = vector.broadcast %cst_136 : f32 to vector<8x256xf32>
    %324 = arith.addf %323, %322 : vector<8x256xf32>
    %cst_137 = arith.constant 5.000000e-01 : f32
    %325 = vector.broadcast %cst_137 : f32 to vector<8x256xf32>
    %326 = arith.mulf %325, %324 : vector<8x256xf32>
    %327 = arith.mulf %314, %326 : vector<8x256xf32>
    %328 = arith.truncf %327 : vector<8x256xf32> to vector<8x256xbf16>
    %cst_138 = arith.constant dense<0.000000e+00> : vector<8x64xf32>
    %329 = tpu.matmul %328, %29, %cst_138 {dimension_numbers = #tpu.dot_dimension_numbers<[1], [0], [0], [1], [0, 0, 1, 1], [], []>} : vector<8x256xbf16>, vector<256x64xbf16>, vector<8x64xf32> -> vector<8x64xf32>
    %330 = arith.addf %288, %329 : vector<8x64xf32>
    %331 = vector.broadcast %30 : vector<1x64xf32> to vector<8x64xf32>
    %332 = arith.addf %330, %331 : vector<8x64xf32>
    %c0_139 = arith.constant 0 : index
    %c0_140 = arith.constant 0 : index
    %c0_141 = arith.constant 0 : index
    %333 = vector.load %arg33[%c0_139, %c0_140, %c0_141] : memref<1x8x64xf32, #tpu.memory_space<vmem>>, vector<1x8x64xf32>
    %334 = vector.shape_cast %333 : vector<1x8x64xf32> to vector<8x64xf32>
    %335 = vector.shape_cast %332 : vector<8x64xf32> to vector<1x8x64xf32>
    tpu.vector_store %arg33[%c0_139, %c0_140, %c0_141], %335 {strides = array<i32>} : memref<1x8x64xf32, #tpu.memory_space<vmem>>, vector<1x8x64xf32>,
    return
  }
  func.func @transform_0(%arg0: i32) -> (i32, i32, i32) {
    %c0_i32 = arith.constant 0 : i32
    %c0_i32_0 = arith.constant 0 : i32
    %c0_i32_1 = arith.constant 0 : i32
    return %arg0, %c0_i32, %c0_i32_0 : i32, i32, i32
  }
  func.func @transform_1(%arg0: i32) -> (i32, i32) {
    %c0_i32 = arith.constant 0 : i32
    %c0_i32_0 = arith.constant 0 : i32
    %c0_i32_1 = arith.constant 0 : i32
    return %c0_i32, %c0_i32_0 : i32, i32
  }
  func.func @transform_2(%arg0: i32) -> (i32, i32) {
    %c0_i32 = arith.constant 0 : i32
    %c0_i32_0 = arith.constant 0 : i32
    %c0_i32_1 = arith.constant 0 : i32
    return %c0_i32, %c0_i32_0 : i32, i32
  }
  func.func @transform_3(%arg0: i32) -> (i32, i32) {
    %c0_i32 = arith.constant 0 : i32
    %c0_i32_0 = arith.constant 0 : i32
    %c0_i32_1 = arith.constant 0 : i32
    return %c0_i32, %c0_i32_0 : i32, i32
  }
  func.func @transform_4(%arg0: i32) -> (i32, i32) {
    %c0_i32 = arith.constant 0 : i32
    %c0_i32_0 = arith.constant 0 : i32
    %c0_i32_1 = arith.constant 0 : i32
    return %c0_i32, %c0_i32_0 : i32, i32
  }
  func.func @transform_5(%arg0: i32) -> (i32, i32) {
    %c0_i32 = arith.constant 0 : i32
    %c0_i32_0 = arith.constant 0 : i32
    %c0_i32_1 = arith.constant 0 : i32
    return %c0_i32, %c0_i32_0 : i32, i32
  }
  func.func @transform_6(%arg0: i32) -> (i32, i32) {
    %c0_i32 = arith.constant 0 : i32
    %c0_i32_0 = arith.constant 0 : i32
    %c0_i32_1 = arith.constant 0 : i32
    return %c0_i32, %c0_i32_0 : i32, i32
  }
  func.func @transform_7(%arg0: i32) -> (i32, i32) {
    %c0_i32 = arith.constant 0 : i32
    %c0_i32_0 = arith.constant 0 : i32
    %c0_i32_1 = arith.constant 0 : i32
    return %c0_i32, %c0_i32_0 : i32, i32
  }
  func.func @transform_8(%arg0: i32) -> (i32, i32) {
    %c0_i32 = arith.constant 0 : i32
    %c0_i32_0 = arith.constant 0 : i32
    %c0_i32_1 = arith.constant 0 : i32
    return %c0_i32, %c0_i32_0 : i32, i32
  }
  func.func @transform_9(%arg0: i32) -> (i32, i32) {
    %c0_i32 = arith.constant 0 : i32
    %c0_i32_0 = arith.constant 0 : i32
    %c0_i32_1 = arith.constant 0 : i32
    return %c0_i32, %c0_i32_0 : i32, i32
  }
  func.func @transform_10(%arg0: i32) -> (i32, i32) {
    %c0_i32 = arith.constant 0 : i32
    %c0_i32_0 = arith.constant 0 : i32
    %c0_i32_1 = arith.constant 0 : i32
    return %c0_i32, %c0_i32_0 : i32, i32
  }
  func.func @transform_11(%arg0: i32) -> (i32, i32) {
    %c0_i32 = arith.constant 0 : i32
    %c0_i32_0 = arith.constant 0 : i32
    %c0_i32_1 = arith.constant 0 : i32
    return %c0_i32, %c0_i32_0 : i32, i32
  }
  func.func @transform_12(%arg0: i32) -> (i32, i32) {
    %c0_i32 = arith.constant 0 : i32
    %c0_i32_0 = arith.constant 0 : i32
    %c0_i32_1 = arith.constant 0 : i32
    return %c0_i32, %c0_i32_0 : i32, i32
  }
  func.func @transform_13(%arg0: i32) -> (i32, i32) {
    %c0_i32 = arith.constant 0 : i32
    %c0_i32_0 = arith.constant 0 : i32
    %c0_i32_1 = arith.constant 0 : i32
    return %c0_i32, %c0_i32_0 : i32, i32
  }
  func.func @transform_14(%arg0: i32) -> (i32, i32) {
    %c0_i32 = arith.constant 0 : i32
    %c0_i32_0 = arith.constant 0 : i32
    %c0_i32_1 = arith.constant 0 : i32
    return %c0_i32, %c0_i32_0 : i32, i32
  }
  func.func @transform_15(%arg0: i32) -> (i32, i32) {
    %c0_i32 = arith.constant 0 : i32
    %c0_i32_0 = arith.constant 0 : i32
    %c0_i32_1 = arith.constant 0 : i32
    return %c0_i32, %c0_i32_0 : i32, i32
  }
  func.func @transform_16(%arg0: i32) -> (i32, i32) {
    %c0_i32 = arith.constant 0 : i32
    %c0_i32_0 = arith.constant 0 : i32
    %c0_i32_1 = arith.constant 0 : i32
    return %c0_i32, %c0_i32_0 : i32, i32
  }
  func.func @transform_17(%arg0: i32) -> (i32, i32) {
    %c0_i32 = arith.constant 0 : i32
    %c0_i32_0 = arith.constant 0 : i32
    %c0_i32_1 = arith.constant 0 : i32
    return %c0_i32, %c0_i32_0 : i32, i32
  }
  func.func @transform_18(%arg0: i32) -> (i32, i32) {
    %c0_i32 = arith.constant 0 : i32
    %c0_i32_0 = arith.constant 0 : i32
    %c0_i32_1 = arith.constant 0 : i32
    return %c0_i32, %c0_i32_0 : i32, i32
  }
  func.func @transform_19(%arg0: i32) -> (i32, i32) {
    %c0_i32 = arith.constant 0 : i32
    %c0_i32_0 = arith.constant 0 : i32
    %c0_i32_1 = arith.constant 0 : i32
    return %c0_i32, %c0_i32_0 : i32, i32
  }
  func.func @transform_20(%arg0: i32) -> (i32, i32) {
    %c0_i32 = arith.constant 0 : i32
    %c0_i32_0 = arith.constant 0 : i32
    %c0_i32_1 = arith.constant 0 : i32
    return %c0_i32, %c0_i32_0 : i32, i32
  }
  func.func @transform_21(%arg0: i32) -> (i32, i32) {
    %c0_i32 = arith.constant 0 : i32
    %c0_i32_0 = arith.constant 0 : i32
    %c0_i32_1 = arith.constant 0 : i32
    return %c0_i32, %c0_i32_0 : i32, i32
  }
  func.func @transform_22(%arg0: i32) -> (i32, i32) {
    %c0_i32 = arith.constant 0 : i32
    %c0_i32_0 = arith.constant 0 : i32
    %c0_i32_1 = arith.constant 0 : i32
    return %c0_i32, %c0_i32_0 : i32, i32
  }
  func.func @transform_23(%arg0: i32) -> (i32, i32) {
    %c0_i32 = arith.constant 0 : i32
    %c0_i32_0 = arith.constant 0 : i32
    %c0_i32_1 = arith.constant 0 : i32
    return %c0_i32, %c0_i32_0 : i32, i32
  }
  func.func @transform_24(%arg0: i32) -> (i32, i32) {
    %c0_i32 = arith.constant 0 : i32
    %c0_i32_0 = arith.constant 0 : i32
    %c0_i32_1 = arith.constant 0 : i32
    return %c0_i32, %c0_i32_0 : i32, i32
  }
  func.func @transform_25(%arg0: i32) -> (i32, i32) {
    %c0_i32 = arith.constant 0 : i32
    %c0_i32_0 = arith.constant 0 : i32
    %c0_i32_1 = arith.constant 0 : i32
    return %c0_i32, %c0_i32_0 : i32, i32
  }
  func.func @transform_26(%arg0: i32) -> (i32, i32) {
    %c0_i32 = arith.constant 0 : i32
    %c0_i32_0 = arith.constant 0 : i32
    %c0_i32_1 = arith.constant 0 : i32
    return %c0_i32, %c0_i32_0 : i32, i32
  }
  func.func @transform_27(%arg0: i32) -> (i32, i32) {
    %c0_i32 = arith.constant 0 : i32
    %c0_i32_0 = arith.constant 0 : i32
    %c0_i32_1 = arith.constant 0 : i32
    return %c0_i32, %c0_i32_0 : i32, i32
  }
  func.func @transform_28(%arg0: i32) -> (i32, i32) {
    %c0_i32 = arith.constant 0 : i32
    %c0_i32_0 = arith.constant 0 : i32
    %c0_i32_1 = arith.constant 0 : i32
    return %c0_i32, %c0_i32_0 : i32, i32
  }
  func.func @transform_29(%arg0: i32) -> (i32, i32) {
    %c0_i32 = arith.constant 0 : i32
    %c0_i32_0 = arith.constant 0 : i32
    %c0_i32_1 = arith.constant 0 : i32
    return %c0_i32, %c0_i32_0 : i32, i32
  }
  func.func @transform_30(%arg0: i32) -> (i32, i32) {
    %c0_i32 = arith.constant 0 : i32
    %c0_i32_0 = arith.constant 0 : i32
    %c0_i32_1 = arith.constant 0 : i32
    return %c0_i32, %c0_i32_0 : i32, i32
  }
  func.func @transform_31(%arg0: i32) -> (i32, i32) {
    %c0_i32 = arith.constant 0 : i32
    %c0_i32_0 = arith.constant 0 : i32
    %c0_i32_1 = arith.constant 0 : i32
    return %c0_i32, %c0_i32_0 : i32, i32
  }
  func.func @transform_32(%arg0: i32) -> (i32, i32, i32) {
    %c0_i32 = arith.constant 0 : i32
    %c0_i32_0 = arith.constant 0 : i32
    %c0_i32_1 = arith.constant 0 : i32
    return %arg0, %c0_i32, %c0_i32_0 : i32, i32, i32
  }
}

</mosaic_0001>

<llo_original>
// kernel: compressor_mlp_forward.1
$region0: #{compressor_mlp_forward.1}
  #allocation0 [shape = 'u32[]', space=smem, size = 0x4, offset = 0x4, fixed_abs, tag = 'smem constant byte address 0x4 - core index']
  #allocation1 [shape = 'u32[144,128]{1,0:T(1,128)}', space=vmem, size = 0x12000, scoped, tag = 'internal scratch']
  %s0 = inlined_call_operand.smem [shape: u32[33], index: -1, kind: input, shape index: {}]
  %s1 = sld [smem:[%s0]]
  %s2 = scalar_lea.smem %s0, 1
  %s3 = sld [smem:[%s2]]
  %s4 = scalar_lea.smem %s0, 2
  %s5 = sld [smem:[%s4]]
  %s6 = scalar_lea.smem %s0, 3
  %s7 = sld [smem:[%s6]]
  %s8 = scalar_lea.smem %s0, 4
  %s9 = sld [smem:[%s8]]
  %s10 = scalar_lea.smem %s0, 5
  %s11 = sld [smem:[%s10]]
  %s12 = scalar_lea.smem %s0, 6
  %s13 = sld [smem:[%s12]]
  %s14 = scalar_lea.smem %s0, 7
  %s15 = sld [smem:[%s14]]
  %s16 = scalar_lea.smem %s0, 8
  %s17 = sld [smem:[%s16]]
  %s18 = scalar_lea.smem %s0, 9
  %s19 = sld [smem:[%s18]]
  %s20 = scalar_lea.smem %s0, 10
  %s21 = sld [smem:[%s20]]
  %s22 = scalar_lea.smem %s0, 11
  %s23 = sld [smem:[%s22]]
  %s24 = scalar_lea.smem %s0, 12
  %s25 = sld [smem:[%s24]]
  %s26 = scalar_lea.smem %s0, 13
  %s27 = sld [smem:[%s26]]
  %s28 = scalar_lea.smem %s0, 14
  %s29 = sld [smem:[%s28]]
  %s30 = scalar_lea.smem %s0, 15
  %s31 = sld [smem:[%s30]]
  %s32 = scalar_lea.smem %s0, 16
  %s33 = sld [smem:[%s32]]
  %s34 = scalar_lea.smem %s0, 17
  %s35 = sld [smem:[%s34]]
  %s36 = scalar_lea.smem %s0, 18
  %s37 = sld [smem:[%s36]]
  %s38 = scalar_lea.smem %s0, 19
  %s39 = sld [smem:[%s38]]
  %s40 = scalar_lea.smem %s0, 20
  %s41 = sld [smem:[%s40]]
  %s42 = scalar_lea.smem %s0, 21
  %s43 = sld [smem:[%s42]]
  %s44 = scalar_lea.smem %s0, 22
  %s45 = sld [smem:[%s44]]
  %s46 = scalar_lea.smem %s0, 23
  %s47 = sld [smem:[%s46]]
  %s48 = scalar_lea.smem %s0, 24
  %s49 = sld [smem:[%s48]]
  %s50 = scalar_lea.smem %s0, 25
  %s51 = sld [smem:[%s50]]
  %s52 = scalar_lea.smem %s0, 26
  %s53 = sld [smem:[%s52]]
  %s54 = scalar_lea.smem %s0, 27
  %s55 = sld [smem:[%s54]]
  %s56 = scalar_lea.smem %s0, 28
  %s57 = sld [smem:[%s56]]
  %s58 = scalar_lea.smem %s0, 29
  %s59 = sld [smem:[%s58]]
  %s60 = scalar_lea.smem %s0, 30
  %s61 = sld [smem:[%s60]]
  %s62 = scalar_lea.smem %s0, 31
  %s63 = sld [smem:[%s62]]
  %s64 = scalar_lea.smem %s0, 32
  %s65 = sld [smem:[%s64]]
  %s66 = sld [smem:[#allocation0]]
  $region161: #{compressor_mlp_forward.1} parent=0
    _
  %s68 = ssub.s32 1, %s66
  %s69 = scalar_select 0, %s68, %s66
  loop: start=0, step=1, limit=4
  $region2: #{compressor_mlp_forward.1} parent=0 // loop_pre_header
    _
  $region3: #{compressor_mlp_forward.1} parent=0 // loop_header
    %s71 = sphi 0, %s75
    %p72 = scmp.ge.s32.totalorder %s71, 4
    %s81 = sphi 0, %s83
    %s84 = sphi 0, %s81
    %s85 = sphi 0, %s84
    %s101 = sphi 0, %s85
    %s105 = sphi 0, %s105
    %s107 = sphi 0, %s105
    %s108 = sphi 0, %s107
    %s122 = sphi 0, %s108
    %s126 = sphi 0, %s126
    %s128 = sphi 0, %s126
    %s129 = sphi 0, %s128
    %s143 = sphi 0, %s129
    %s147 = sphi 0, %s147
    %s149 = sphi 0, %s147
    %s150 = sphi 0, %s149
    %s164 = sphi 0, %s150
    %s168 = sphi 0, %s168
    %s170 = sphi 0, %s168
    %s171 = sphi 0, %s170
    %s185 = sphi 0, %s171
    %s189 = sphi 0, %s189
    %s191 = sphi 0, %s189
    %s192 = sphi 0, %s191
    %s206 = sphi 0, %s192
    %s210 = sphi 0, %s210
    %s212 = sphi 0, %s210
    %s213 = sphi 0, %s212
    %s227 = sphi 0, %s213
    %s231 = sphi 0, %s231
    %s233 = sphi 0, %s231
    %s234 = sphi 0, %s233
    %s248 = sphi 0, %s234
    %s252 = sphi 0, %s252
    %s254 = sphi 0, %s252
    %s255 = sphi 0, %s254
    %s269 = sphi 0, %s255
    %s273 = sphi 0, %s273
    %s275 = sphi 0, %s273
    %s276 = sphi 0, %s275
    %s290 = sphi 0, %s276
    %s294 = sphi 0, %s294
    %s296 = sphi 0, %s294
    %s297 = sphi 0, %s296
    %s311 = sphi 0, %s297
    %s315 = sphi 0, %s315
    %s317 = sphi 0, %s315
    %s318 = sphi 0, %s317
    %s332 = sphi 0, %s318
    %s336 = sphi 0, %s336
    %s338 = sphi 0, %s336
    %s339 = sphi 0, %s338
    %s353 = sphi 0, %s339
    %s357 = sphi 0, %s357
    %s359 = sphi 0, %s357
    %s360 = sphi 0, %s359
    %s374 = sphi 0, %s360
    %s378 = sphi 0, %s378
    %s380 = sphi 0, %s378
    %s381 = sphi 0, %s380
    %s395 = sphi 0, %s381
    %s399 = sphi 0, %s399
    %s401 = sphi 0, %s399
    %s402 = sphi 0, %s401
    %s416 = sphi 0, %s402
    %s420 = sphi 0, %s420
    %s422 = sphi 0, %s420
    %s423 = sphi 0, %s422
    %s437 = sphi 0, %s423
    %s441 = sphi 0, %s441
    %s443 = sphi 0, %s441
    %s444 = sphi 0, %s443
    %s458 = sphi 0, %s444
    %s462 = sphi 0, %s462
    %s464 = sphi 0, %s462
    %s465 = sphi 0, %s464
    %s479 = sphi 0, %s465
    %s483 = sphi 0, %s483
    %s485 = sphi 0, %s483
    %s486 = sphi 0, %s485
    %s500 = sphi 0, %s486
    %s504 = sphi 0, %s504
    %s506 = sphi 0, %s504
    %s507 = sphi 0, %s506
    %s521 = sphi 0, %s507
    %s525 = sphi 0, %s525
    %s527 = sphi 0, %s525
    %s528 = sphi 0, %s527
    %s542 = sphi 0, %s528
    %s546 = sphi 0, %s546
    %s548 = sphi 0, %s546
    %s549 = sphi 0, %s548
    %s563 = sphi 0, %s549
    %s567 = sphi 0, %s567
    %s569 = sphi 0, %s567
    %s570 = sphi 0, %s569
    %s584 = sphi 0, %s570
    %s588 = sphi 0, %s588
    %s590 = sphi 0, %s588
    %s591 = sphi 0, %s590
    %s605 = sphi 0, %s591
    %s609 = sphi 0, %s609
    %s611 = sphi 0, %s609
    %s612 = sphi 0, %s611
    %s626 = sphi 0, %s612
    %s630 = sphi 0, %s630
    %s632 = sphi 0, %s630
    %s633 = sphi 0, %s632
    %s647 = sphi 0, %s633
    %s651 = sphi 0, %s651
    %s653 = sphi 0, %s651
    %s654 = sphi 0, %s653
    %s668 = sphi 0, %s654
    %s672 = sphi 0, %s672
    %s674 = sphi 0, %s672
    %s675 = sphi 0, %s674
    %s689 = sphi 0, %s675
    %s693 = sphi 0, %s693
    %s695 = sphi 0, %s693
    %s696 = sphi 0, %s695
    %s710 = sphi 0, %s696
    %s714 = sphi 0, %s714
    %s716 = sphi 0, %s714
    %s717 = sphi 0, %s716
    %s731 = sphi 0, %s717
    %s735 = sphi 0, %s735
    %s737 = sphi 0, %s735
    %s738 = sphi 0, %s737
    %s752 = sphi 0, %s738
    %s758 = sphi 0, %s760
    %s761 = sphi 0, %s758
    %s762 = sphi 0, %s761
    %s778 = sphi 0, %s762
  $region4: #{compressor_mlp_forward.1} parent=0 // loop_header_branch
    %74 = sbr.rel (%p72) target = $region8
  $region5: #{compressor_mlp_forward.1} parent=0 // loop_body
    %s76 = ssub.s32 %s71, 1
    %s77 = ssub.s32 %s71, 2
    %s78 = sadd.s32 %s71, 1
    %s79 = ssub.s32 %s71, %s78
    %p80 = scmp.eq.s32.totalorder %s79, 0
    %s82 = sadd.s32 %s81, 1
    %s83 = scalar_select %p80, %s81, %s82
    %p86 = pneg %p80
    %p87 = scmp.eq.s32.totalorder %s71, 1
    %p88 = por %p86, %p87
    %p89 = scmp.ne.s32.totalorder %s81, %s84
    %p90 = scmp.eq.s32.totalorder %s71, 0
    %p91 = por %p89, %p90
    %p92 = scmp.ne.s32.totalorder %s81, %s84
    %p93 = scmp.eq.s32.totalorder %s76, 1
    %p94 = por %p92, %p93
    %p95 = scmp.ne.s32.totalorder %s84, %s85
    %p96 = scmp.eq.s32.totalorder %s76, 0
    %p97 = por %p95, %p96
    %p98 = scmp.ne.s32.totalorder %s84, %s85
    %p99 = scmp.eq.s32.totalorder %s77, 1
    %p100 = por %p98, %p99
    %p102 = scmp.ne.s32.totalorder %s85, %s101
    %p103 = scmp.eq.s32.totalorder %s77, 0
    %p104 = por %p102, %p103
    %s106 = sadd.s32 %s105, 1
    %p109 = scmp.eq.s32.totalorder %s71, 1
    %p110 = scmp.ne.s32.totalorder %s105, %s107
    %p111 = scmp.eq.s32.totalorder %s71, 0
    %p112 = por %p110, %p111
    %p113 = scmp.ne.s32.totalorder %s105, %s107
    %p114 = scmp.eq.s32.totalorder %s76, 1
    %p115 = por %p113, %p114
    %p116 = scmp.ne.s32.totalorder %s107, %s108
    %p117 = scmp.eq.s32.totalorder %s76, 0
    %p118 = por %p116, %p117
    %p119 = scmp.ne.s32.totalorder %s107, %s108
    %p120 = scmp.eq.s32.totalorder %s77, 1
    %p121 = por %p119, %p120
    %p123 = scmp.ne.s32.totalorder %s108, %s122
    %p124 = scmp.eq.s32.totalorder %s77, 0
    %p125 = por %p123, %p124
    %s127 = sadd.s32 %s126, 1
    %p130 = scmp.eq.s32.totalorder %s71, 1
    %p131 = scmp.ne.s32.totalorder %s126, %s128
    %p132 = scmp.eq.s32.totalorder %s71, 0
    %p133 = por %p131, %p132
    %p134 = scmp.ne.s32.totalorder %s126, %s128
    %p135 = scmp.eq.s32.totalorder %s76, 1
    %p136 = por %p134, %p135
    %p137 = scmp.ne.s32.totalorder %s128, %s129
    %p138 = scmp.eq.s32.totalorder %s76, 0
    %p139 = por %p137, %p138
    %p140 = scmp.ne.s32.totalorder %s128, %s129
    %p141 = scmp.eq.s32.totalorder %s77, 1
    %p142 = por %p140, %p141
    %p144 = scmp.ne.s32.totalorder %s129, %s143
    %p145 = scmp.eq.s32.totalorder %s77, 0
    %p146 = por %p144, %p145
    %s148 = sadd.s32 %s147, 1
    %p151 = scmp.eq.s32.totalorder %s71, 1
    %p152 = scmp.ne.s32.totalorder %s147, %s149
    %p153 = scmp.eq.s32.totalorder %s71, 0
    %p154 = por %p152, %p153
    %p155 = scmp.ne.s32.totalorder %s147, %s149
    %p156 = scmp.eq.s32.totalorder %s76, 1
    %p157 = por %p155, %p156
    %p158 = scmp.ne.s32.totalorder %s149, %s150
    %p159 = scmp.eq.s32.totalorder %s76, 0
    %p160 = por %p158, %p159
    %p161 = scmp.ne.s32.totalorder %s149, %s150
    %p162 = scmp.eq.s32.totalorder %s77, 1
    %p163 = por %p161, %p162
    %p165 = scmp.ne.s32.totalorder %s150, %s164
    %p166 = scmp.eq.s32.totalorder %s77, 0
    %p167 = por %p165, %p166
    %s169 = sadd.s32 %s168, 1
    %p172 = scmp.eq.s32.totalorder %s71, 1
    %p173 = scmp.ne.s32.totalorder %s168, %s170
    %p174 = scmp.eq.s32.totalorder %s71, 0
    %p175 = por %p173, %p174
    %p176 = scmp.ne.s32.totalorder %s168, %s170
    %p177 = scmp.eq.s32.totalorder %s76, 1
    %p178 = por %p176, %p177
    %p179 = scmp.ne.s32.totalorder %s170, %s171
    %p180 = scmp.eq.s32.totalorder %s76, 0
    %p181 = por %p179, %p180
    %p182 = scmp.ne.s32.totalorder %s170, %s171
    %p183 = scmp.eq.s32.totalorder %s77, 1
    %p184 = por %p182, %p183
    %p186 = scmp.ne.s32.totalorder %s171, %s185
    %p187 = scmp.eq.s32.totalorder %s77, 0
    %p188 = por %p186, %p187
    %s190 = sadd.s32 %s189, 1
    %p193 = scmp.eq.s32.totalorder %s71, 1
    %p194 = scmp.ne.s32.totalorder %s189, %s191
    %p195 = scmp.eq.s32.totalorder %s71, 0
    %p196 = por %p194, %p195
    %p197 = scmp.ne.s32.totalorder %s189, %s191
    %p198 = scmp.eq.s32.totalorder %s76, 1
    %p199 = por %p197, %p198
    %p200 = scmp.ne.s32.totalorder %s191, %s192
    %p201 = scmp.eq.s32.totalorder %s76, 0
    %p202 = por %p200, %p201
    %p203 = scmp.ne.s32.totalorder %s191, %s192
    %p204 = scmp.eq.s32.totalorder %s77, 1
    %p205 = por %p203, %p204
    %p207 = scmp.ne.s32.totalorder %s192, %s206
    %p208 = scmp.eq.s32.totalorder %s77, 0
    %p209 = por %p207, %p208
    %s211 = sadd.s32 %s210, 1
    %p214 = scmp.eq.s32.totalorder %s71, 1
    %p215 = scmp.ne.s32.totalorder %s210, %s212
    %p216 = scmp.eq.s32.totalorder %s71, 0
    %p217 = por %p215, %p216
    %p218 = scmp.ne.s32.totalorder %s210, %s212
    %p219 = scmp.eq.s32.totalorder %s76, 1
    %p220 = por %p218, %p219
    %p221 = scmp.ne.s32.totalorder %s212, %s213
    %p222 = scmp.eq.s32.totalorder %s76, 0
    %p223 = por %p221, %p222
    %p224 = scmp.ne.s32.totalorder %s212, %s213
    %p225 = scmp.eq.s32.totalorder %s77, 1
    %p226 = por %p224, %p225
    %p228 = scmp.ne.s32.totalorder %s213, %s227
    %p229 = scmp.eq.s32.totalorder %s77, 0
    %p230 = por %p228, %p229
    %s232 = sadd.s32 %s231, 1
    %p235 = scmp.eq.s32.totalorder %s71, 1
    %p236 = scmp.ne.s32.totalorder %s231, %s233
    %p237 = scmp.eq.s32.totalorder %s71, 0
    %p238 = por %p236, %p237
    %p239 = scmp.ne.s32.totalorder %s231, %s233
    %p240 = scmp.eq.s32.totalorder %s76, 1
    %p241 = por %p239, %p240
    %p242 = scmp.ne.s32.totalorder %s233, %s234
    %p243 = scmp.eq.s32.totalorder %s76, 0
    %p244 = por %p242, %p243
    %p245 = scmp.ne.s32.totalorder %s233, %s234
    %p246 = scmp.eq.s32.totalorder %s77, 1
    %p247 = por %p245, %p246
    %p249 = scmp.ne.s32.totalorder %s234, %s248
    %p250 = scmp.eq.s32.totalorder %s77, 0
    %p251 = por %p249, %p250
    %s253 = sadd.s32 %s252, 1
    %p256 = scmp.eq.s32.totalorder %s71, 1
    %p257 = scmp.ne.s32.totalorder %s252, %s254
    %p258 = scmp.eq.s32.totalorder %s71, 0
    %p259 = por %p257, %p258
    %p260 = scmp.ne.s32.totalorder %s252, %s254
    %p261 = scmp.eq.s32.totalorder %s76, 1
    %p262 = por %p260, %p261
    %p263 = scmp.ne.s32.totalorder %s254, %s255
    %p264 = scmp.eq.s32.totalorder %s76, 0
    %p265 = por %p263, %p264
    %p266 = scmp.ne.s32.totalorder %s254, %s255
    %p267 = scmp.eq.s32.totalorder %s77, 1
    %p268 = por %p266, %p267
    %p270 = scmp.ne.s32.totalorder %s255, %s269
    %p271 = scmp.eq.s32.totalorder %s77, 0
    %p272 = por %p270, %p271
    %s274 = sadd.s32 %s273, 1
    %p277 = scmp.eq.s32.totalorder %s71, 1
    %p278 = scmp.ne.s32.totalorder %s273, %s275
    %p279 = scmp.eq.s32.totalorder %s71, 0
    %p280 = por %p278, %p279
    %p281 = scmp.ne.s32.totalorder %s273, %s275
    %p282 = scmp.eq.s32.totalorder %s76, 1
    %p283 = por %p281, %p282
    %p284 = scmp.ne.s32.totalorder %s275, %s276
    %p285 = scmp.eq.s32.totalorder %s76, 0
    %p286 = por %p284, %p285
    %p287 = scmp.ne.s32.totalorder %s275, %s276
    %p288 = scmp.eq.s32.totalorder %s77, 1
    %p289 = por %p287, %p288
    %p291 = scmp.ne.s32.totalorder %s276, %s290
    %p292 = scmp.eq.s32.totalorder %s77, 0
    %p293 = por %p291, %p292
    %s295 = sadd.s32 %s294, 1
    %p298 = scmp.eq.s32.totalorder %s71, 1
    %p299 = scmp.ne.s32.totalorder %s294, %s296
    %p300 = scmp.eq.s32.totalorder %s71, 0
    %p301 = por %p299, %p300
    %p302 = scmp.ne.s32.totalorder %s294, %s296
    %p303 = scmp.eq.s32.totalorder %s76, 1
    %p304 = por %p302, %p303
    %p305 = scmp.ne.s32.totalorder %s296, %s297
    %p306 = scmp.eq.s32.totalorder %s76, 0
    %p307 = por %p305, %p306
    %p308 = scmp.ne.s32.totalorder %s296, %s297
    %p309 = scmp.eq.s32.totalorder %s77, 1
    %p310 = por %p308, %p309
    %p312 = scmp.ne.s32.totalorder %s297, %s311
    %p313 = scmp.eq.s32.totalorder %s77, 0
    %p314 = por %p312, %p313
    %s316 = sadd.s32 %s315, 1
    %p319 = scmp.eq.s32.totalorder %s71, 1
    %p320 = scmp.ne.s32.totalorder %s315, %s317
    %p321 = scmp.eq.s32.totalorder %s71, 0
    %p322 = por %p320, %p321
    %p323 = scmp.ne.s32.totalorder %s315, %s317
    %p324 = scmp.eq.s32.totalorder %s76, 1
    %p325 = por %p323, %p324
    %p326 = scmp.ne.s32.totalorder %s317, %s318
    %p327 = scmp.eq.s32.totalorder %s76, 0
    %p328 = por %p326, %p327
    %p329 = scmp.ne.s32.totalorder %s317, %s318
    %p330 = scmp.eq.s32.totalorder %s77, 1
    %p331 = por %p329, %p330
    %p333 = scmp.ne.s32.totalorder %s318, %s332
    %p334 = scmp.eq.s32.totalorder %s77, 0
    %p335 = por %p333, %p334
    %s337 = sadd.s32 %s336, 1
    %p340 = scmp.eq.s32.totalorder %s71, 1
    %p341 = scmp.ne.s32.totalorder %s336, %s338
    %p342 = scmp.eq.s32.totalorder %s71, 0
    %p343 = por %p341, %p342
    %p344 = scmp.ne.s32.totalorder %s336, %s338
    %p345 = scmp.eq.s32.totalorder %s76, 1
    %p346 = por %p344, %p345
    %p347 = scmp.ne.s32.totalorder %s338, %s339
    %p348 = scmp.eq.s32.totalorder %s76, 0
    %p349 = por %p347, %p348
    %p350 = scmp.ne.s32.totalorder %s338, %s339
    %p351 = scmp.eq.s32.totalorder %s77, 1
    %p352 = por %p350, %p351
    %p354 = scmp.ne.s32.totalorder %s339, %s353
    %p355 = scmp.eq.s32.totalorder %s77, 0
    %p356 = por %p354, %p355
    %s358 = sadd.s32 %s357, 1
    %p361 = scmp.eq.s32.totalorder %s71, 1
    %p362 = scmp.ne.s32.totalorder %s357, %s359
    %p363 = scmp.eq.s32.totalorder %s71, 0
    %p364 = por %p362, %p363
    %p365 = scmp.ne.s32.totalorder %s357, %s359
    %p366 = scmp.eq.s32.totalorder %s76, 1
    %p367 = por %p365, %p366
    %p368 = scmp.ne.s32.totalorder %s359, %s360
    %p369 = scmp.eq.s32.totalorder %s76, 0
    %p370 = por %p368, %p369
    %p371 = scmp.ne.s32.totalorder %s359, %s360
    %p372 = scmp.eq.s32.totalorder %s77, 1
    %p373 = por %p371, %p372
    %p375 = scmp.ne.s32.totalorder %s360, %s374
    %p376 = scmp.eq.s32.totalorder %s77, 0
    %p377 = por %p375, %p376
    %s379 = sadd.s32 %s378, 1
    %p382 = scmp.eq.s32.totalorder %s71, 1
    %p383 = scmp.ne.s32.totalorder %s378, %s380
    %p384 = scmp.eq.s32.totalorder %s71, 0
    %p385 = por %p383, %p384
    %p386 = scmp.ne.s32.totalorder %s378, %s380
    %p387 = scmp.eq.s32.totalorder %s76, 1
    %p388 = por %p386, %p387
    %p389 = scmp.ne.s32.totalorder %s380, %s381
    %p390 = scmp.eq.s32.totalorder %s76, 0
    %p391 = por %p389, %p390
    %p392 = scmp.ne.s32.totalorder %s380, %s381
    %p393 = scmp.eq.s32.totalorder %s77, 1
    %p394 = por %p392, %p393
    %p396 = scmp.ne.s32.totalorder %s381, %s395
    %p397 = scmp.eq.s32.totalorder %s77, 0
    %p398 = por %p396, %p397
    %s400 = sadd.s32 %s399, 1
    %p403 = scmp.eq.s32.totalorder %s71, 1
    %p404 = scmp.ne.s32.totalorder %s399, %s401
    %p405 = scmp.eq.s32.totalorder %s71, 0
    %p406 = por %p404, %p405
    %p407 = scmp.ne.s32.totalorder %s399, %s401
    %p408 = scmp.eq.s32.totalorder %s76, 1
    %p409 = por %p407, %p408
    %p410 = scmp.ne.s32.totalorder %s401, %s402
    %p411 = scmp.eq.s32.totalorder %s76, 0
    %p412 = por %p410, %p411
    %p413 = scmp.ne.s32.totalorder %s401, %s402
    %p414 = scmp.eq.s32.totalorder %s77, 1
    %p415 = por %p413, %p414
    %p417 = scmp.ne.s32.totalorder %s402, %s416
    %p418 = scmp.eq.s32.totalorder %s77, 0
    %p419 = por %p417, %p418
    %s421 = sadd.s32 %s420, 1
    %p424 = scmp.eq.s32.totalorder %s71, 1
    %p425 = scmp.ne.s32.totalorder %s420, %s422
    %p426 = scmp.eq.s32.totalorder %s71, 0
    %p427 = por %p425, %p426
    %p428 = scmp.ne.s32.totalorder %s420, %s422
    %p429 = scmp.eq.s32.totalorder %s76, 1
    %p430 = por %p428, %p429
    %p431 = scmp.ne.s32.totalorder %s422, %s423
    %p432 = scmp.eq.s32.totalorder %s76, 0
    %p433 = por %p431, %p432
    %p434 = scmp.ne.s32.totalorder %s422, %s423
    %p435 = scmp.eq.s32.totalorder %s77, 1
    %p436 = por %p434, %p435
    %p438 = scmp.ne.s32.totalorder %s423, %s437
    %p439 = scmp.eq.s32.totalorder %s77, 0
    %p440 = por %p438, %p439
    %s442 = sadd.s32 %s441, 1
    %p445 = scmp.eq.s32.totalorder %s71, 1
    %p446 = scmp.ne.s32.totalorder %s441, %s443
    %p447 = scmp.eq.s32.totalorder %s71, 0
    %p448 = por %p446, %p447
    %p449 = scmp.ne.s32.totalorder %s441, %s443
    %p450 = scmp.eq.s32.totalorder %s76, 1
    %p451 = por %p449, %p450
    %p452 = scmp.ne.s32.totalorder %s443, %s444
    %p453 = scmp.eq.s32.totalorder %s76, 0
    %p454 = por %p452, %p453
    %p455 = scmp.ne.s32.totalorder %s443, %s444
    %p456 = scmp.eq.s32.totalorder %s77, 1
    %p457 = por %p455, %p456
    %p459 = scmp.ne.s32.totalorder %s444, %s458
    %p460 = scmp.eq.s32.totalorder %s77, 0
    %p461 = por %p459, %p460
    %s463 = sadd.s32 %s462, 1
    %p466 = scmp.eq.s32.totalorder %s71, 1
    %p467 = scmp.ne.s32.totalorder %s462, %s464
    %p468 = scmp.eq.s32.totalorder %s71, 0
    %p469 = por %p467, %p468
    %p470 = scmp.ne.s32.totalorder %s462, %s464
    %p471 = scmp.eq.s32.totalorder %s76, 1
    %p472 = por %p470, %p471
    %p473 = scmp.ne.s32.totalorder %s464, %s465
    %p474 = scmp.eq.s32.totalorder %s76, 0
    %p475 = por %p473, %p474
    %p476 = scmp.ne.s32.totalorder %s464, %s465
    %p477 = scmp.eq.s32.totalorder %s77, 1
    %p478 = por %p476, %p477
    %p480 = scmp.ne.s32.totalorder %s465, %s479
    %p481 = scmp.eq.s32.totalorder %s77, 0
    %p482 = por %p480, %p481
    %s484 = sadd.s32 %s483, 1
    %p487 = scmp.eq.s32.totalorder %s71, 1
    %p488 = scmp.ne.s32.totalorder %s483, %s485
    %p489 = scmp.eq.s32.totalorder %s71, 0
    %p490 = por %p488, %p489
    %p491 = scmp.ne.s32.totalorder %s483, %s485
    %p492 = scmp.eq.s32.totalorder %s76, 1
    %p493 = por %p491, %p492
    %p494 = scmp.ne.s32.totalorder %s485, %s486
    %p495 = scmp.eq.s32.totalorder %s76, 0
    %p496 = por %p494, %p495
    %p497 = scmp.ne.s32.totalorder %s485, %s486
    %p498 = scmp.eq.s32.totalorder %s77, 1
    %p499 = por %p497, %p498
    %p501 = scmp.ne.s32.totalorder %s486, %s500
    %p502 = scmp.eq.s32.totalorder %s77, 0
    %p503 = por %p501, %p502
    %s505 = sadd.s32 %s504, 1
    %p508 = scmp.eq.s32.totalorder %s71, 1
    %p509 = scmp.ne.s32.totalorder %s504, %s506
    %p510 = scmp.eq.s32.totalorder %s71, 0
    %p511 = por %p509, %p510
    %p512 = scmp.ne.s32.totalorder %s504, %s506
    %p513 = scmp.eq.s32.totalorder %s76, 1
    %p514 = por %p512, %p513
    %p515 = scmp.ne.s32.totalorder %s506, %s507
    %p516 = scmp.eq.s32.totalorder %s76, 0
    %p517 = por %p515, %p516
    %p518 = scmp.ne.s32.totalorder %s506, %s507
    %p519 = scmp.eq.s32.totalorder %s77, 1
    %p520 = por %p518, %p519
    %p522 = scmp.ne.s32.totalorder %s507, %s521
    %p523 = scmp.eq.s32.totalorder %s77, 0
    %p524 = por %p522, %p523
    %s526 = sadd.s32 %s525, 1
    %p529 = scmp.eq.s32.totalorder %s71, 1
    %p530 = scmp.ne.s32.totalorder %s525, %s527
    %p531 = scmp.eq.s32.totalorder %s71, 0
    %p532 = por %p530, %p531
    %p533 = scmp.ne.s32.totalorder %s525, %s527
    %p534 = scmp.eq.s32.totalorder %s76, 1
    %p535 = por %p533, %p534
    %p536 = scmp.ne.s32.totalorder %s527, %s528
    %p537 = scmp.eq.s32.totalorder %s76, 0
    %p538 = por %p536, %p537
    %p539 = scmp.ne.s32.totalorder %s527, %s528
    %p540 = scmp.eq.s32.totalorder %s77, 1
    %p541 = por %p539, %p540
    %p543 = scmp.ne.s32.totalorder %s528, %s542
    %p544 = scmp.eq.s32.totalorder %s77, 0
    %p545 = por %p543, %p544
    %s547 = sadd.s32 %s546, 1
    %p550 = scmp.eq.s32.totalorder %s71, 1
    %p551 = scmp.ne.s32.totalorder %s546, %s548
    %p552 = scmp.eq.s32.totalorder %s71, 0
    %p553 = por %p551, %p552
    %p554 = scmp.ne.s32.totalorder %s546, %s548
    %p555 = scmp.eq.s32.totalorder %s76, 1
    %p556 = por %p554, %p555
    %p557 = scmp.ne.s32.totalorder %s548, %s549
    %p558 = scmp.eq.s32.totalorder %s76, 0
    %p559 = por %p557, %p558
    %p560 = scmp.ne.s32.totalorder %s548, %s549
    %p561 = scmp.eq.s32.totalorder %s77, 1
    %p562 = por %p560, %p561
    %p564 = scmp.ne.s32.totalorder %s549, %s563
    %p565 = scmp.eq.s32.totalorder %s77, 0
    %p566 = por %p564, %p565
    %s568 = sadd.s32 %s567, 1
    %p571 = scmp.eq.s32.totalorder %s71, 1
    %p572 = scmp.ne.s32.totalorder %s567, %s569
    %p573 = scmp.eq.s32.totalorder %s71, 0
    %p574 = por %p572, %p573
    %p575 = scmp.ne.s32.totalorder %s567, %s569
    %p576 = scmp.eq.s32.totalorder %s76, 1
    %p577 = por %p575, %p576
    %p578 = scmp.ne.s32.totalorder %s569, %s570
    %p579 = scmp.eq.s32.totalorder %s76, 0
    %p580 = por %p578, %p579
    %p581 = scmp.ne.s32.totalorder %s569, %s570
    %p582 = scmp.eq.s32.totalorder %s77, 1
    %p583 = por %p581, %p582
    %p585 = scmp.ne.s32.totalorder %s570, %s584
    %p586 = scmp.eq.s32.totalorder %s77, 0
    %p587 = por %p585, %p586
    %s589 = sadd.s32 %s588, 1
    %p592 = scmp.eq.s32.totalorder %s71, 1
    %p593 = scmp.ne.s32.totalorder %s588, %s590
    %p594 = scmp.eq.s32.totalorder %s71, 0
    %p595 = por %p593, %p594
    %p596 = scmp.ne.s32.totalorder %s588, %s590
    %p597 = scmp.eq.s32.totalorder %s76, 1
    %p598 = por %p596, %p597
    %p599 = scmp.ne.s32.totalorder %s590, %s591
    %p600 = scmp.eq.s32.totalorder %s76, 0
    %p601 = por %p599, %p600
    %p602 = scmp.ne.s32.totalorder %s590, %s591
    %p603 = scmp.eq.s32.totalorder %s77, 1
    %p604 = por %p602, %p603
    %p606 = scmp.ne.s32.totalorder %s591, %s605
    %p607 = scmp.eq.s32.totalorder %s77, 0
    %p608 = por %p606, %p607
    %s610 = sadd.s32 %s609, 1
    %p613 = scmp.eq.s32.totalorder %s71, 1
    %p614 = scmp.ne.s32.totalorder %s609, %s611
    %p615 = scmp.eq.s32.totalorder %s71, 0
    %p616 = por %p614, %p615
    %p617 = scmp.ne.s32.totalorder %s609, %s611
    %p618 = scmp.eq.s32.totalorder %s76, 1
    %p619 = por %p617, %p618
    %p620 = scmp.ne.s32.totalorder %s611, %s612
    %p621 = scmp.eq.s32.totalorder %s76, 0
    %p622 = por %p620, %p621
    %p623 = scmp.ne.s32.totalorder %s611, %s612
    %p624 = scmp.eq.s32.totalorder %s77, 1
    %p625 = por %p623, %p624
    %p627 = scmp.ne.s32.totalorder %s612, %s626
    %p628 = scmp.eq.s32.totalorder %s77, 0
    %p629 = por %p627, %p628
    %s631 = sadd.s32 %s630, 1
    %p634 = scmp.eq.s32.totalorder %s71, 1
    %p635 = scmp.ne.s32.totalorder %s630, %s632
    %p636 = scmp.eq.s32.totalorder %s71, 0
    %p637 = por %p635, %p636
    %p638 = scmp.ne.s32.totalorder %s630, %s632
    %p639 = scmp.eq.s32.totalorder %s76, 1
    %p640 = por %p638, %p639
    %p641 = scmp.ne.s32.totalorder %s632, %s633
    %p642 = scmp.eq.s32.totalorder %s76, 0
    %p643 = por %p641, %p642
    %p644 = scmp.ne.s32.totalorder %s632, %s633
    %p645 = scmp.eq.s32.totalorder %s77, 1
    %p646 = por %p644, %p645
    %p648 = scmp.ne.s32.totalorder %s633, %s647
    %p649 = scmp.eq.s32.totalorder %s77, 0
    %p650 = por %p648, %p649
    %s652 = sadd.s32 %s651, 1
    %p655 = scmp.eq.s32.totalorder %s71, 1
    %p656 = scmp.ne.s32.totalorder %s651, %s653
    %p657 = scmp.eq.s32.totalorder %s71, 0
    %p658 = por %p656, %p657
    %p659 = scmp.ne.s32.totalorder %s651, %s653
    %p660 = scmp.eq.s32.totalorder %s76, 1
    %p661 = por %p659, %p660
    %p662 = scmp.ne.s32.totalorder %s653, %s654
    %p663 = scmp.eq.s32.totalorder %s76, 0
    %p664 = por %p662, %p663
    %p665 = scmp.ne.s32.totalorder %s653, %s654
    %p666 = scmp.eq.s32.totalorder %s77, 1
    %p667 = por %p665, %p666
    %p669 = scmp.ne.s32.totalorder %s654, %s668
    %p670 = scmp.eq.s32.totalorder %s77, 0
    %p671 = por %p669, %p670
    %s673 = sadd.s32 %s672, 1
    %p676 = scmp.eq.s32.totalorder %s71, 1
    %p677 = scmp.ne.s32.totalorder %s672, %s674
    %p678 = scmp.eq.s32.totalorder %s71, 0
    %p679 = por %p677, %p678
    %p680 = scmp.ne.s32.totalorder %s672, %s674
    %p681 = scmp.eq.s32.totalorder %s76, 1
    %p682 = por %p680, %p681
    %p683 = scmp.ne.s32.totalorder %s674, %s675
    %p684 = scmp.eq.s32.totalorder %s76, 0
    %p685 = por %p683, %p684
    %p686 = scmp.ne.s32.totalorder %s674, %s675
    %p687 = scmp.eq.s32.totalorder %s77, 1
    %p688 = por %p686, %p687
    %p690 = scmp.ne.s32.totalorder %s675, %s689
    %p691 = scmp.eq.s32.totalorder %s77, 0
    %p692 = por %p690, %p691
    %s694 = sadd.s32 %s693, 1
    %p697 = scmp.eq.s32.totalorder %s71, 1
    %p698 = scmp.ne.s32.totalorder %s693, %s695
    %p699 = scmp.eq.s32.totalorder %s71, 0
    %p700 = por %p698, %p699
    %p701 = scmp.ne.s32.totalorder %s693, %s695
    %p702 = scmp.eq.s32.totalorder %s76, 1
    %p703 = por %p701, %p702
    %p704 = scmp.ne.s32.totalorder %s695, %s696
    %p705 = scmp.eq.s32.totalorder %s76, 0
    %p706 = por %p704, %p705
    %p707 = scmp.ne.s32.totalorder %s695, %s696
    %p708 = scmp.eq.s32.totalorder %s77, 1
    %p709 = por %p707, %p708
    %p711 = scmp.ne.s32.totalorder %s696, %s710
    %p712 = scmp.eq.s32.totalorder %s77, 0
    %p713 = por %p711, %p712
    %s715 = sadd.s32 %s714, 1
    %p718 = scmp.eq.s32.totalorder %s71, 1
    %p719 = scmp.ne.s32.totalorder %s714, %s716
    %p720 = scmp.eq.s32.totalorder %s71, 0
    %p721 = por %p719, %p720
    %p722 = scmp.ne.s32.totalorder %s714, %s716
    %p723 = scmp.eq.s32.totalorder %s76, 1
    %p724 = por %p722, %p723
    %p725 = scmp.ne.s32.totalorder %s716, %s717
    %p726 = scmp.eq.s32.totalorder %s76, 0
    %p727 = por %p725, %p726
    %p728 = scmp.ne.s32.totalorder %s716, %s717
    %p729 = scmp.eq.s32.totalorder %s77, 1
    %p730 = por %p728, %p729
    %p732 = scmp.ne.s32.totalorder %s717, %s731
    %p733 = scmp.eq.s32.totalorder %s77, 0
    %p734 = por %p732, %p733
    %s736 = sadd.s32 %s735, 1
    %p739 = scmp.eq.s32.totalorder %s71, 1
    %p740 = scmp.ne.s32.totalorder %s735, %s737
    %p741 = scmp.eq.s32.totalorder %s71, 0
    %p742 = por %p740, %p741
    %p743 = scmp.ne.s32.totalorder %s735, %s737
    %p744 = scmp.eq.s32.totalorder %s76, 1
    %p745 = por %p743, %p744
    %p746 = scmp.ne.s32.totalorder %s737, %s738
    %p747 = scmp.eq.s32.totalorder %s76, 0
    %p748 = por %p746, %p747
    %p749 = scmp.ne.s32.totalorder %s737, %s738
    %p750 = scmp.eq.s32.totalorder %s77, 1
    %p751 = por %p749, %p750
    %p753 = scmp.ne.s32.totalorder %s738, %s752
    %p754 = scmp.eq.s32.totalorder %s77, 0
    %p755 = por %p753, %p754
    %s756 = ssub.s32 %s71, %s78
    %p757 = scmp.eq.s32.totalorder %s756, 0
    %s759 = sadd.s32 %s758, 1
    %s760 = scalar_select %p757, %s758, %s759
    %p763 = pneg %p757
    %p764 = scmp.eq.s32.totalorder %s71, 1
    %p765 = por %p763, %p764
    %p766 = scmp.ne.s32.totalorder %s758, %s761
    %p767 = scmp.eq.s32.totalorder %s71, 0
    %p768 = por %p766, %p767
    %p769 = scmp.ne.s32.totalorder %s758, %s761
    %p770 = scmp.eq.s32.totalorder %s76, 1
    %p771 = por %p769, %p770
    %p772 = scmp.ne.s32.totalorder %s761, %s762
    %p773 = scmp.eq.s32.totalorder %s76, 0
    %p774 = por %p772, %p773
    %p775 = scmp.ne.s32.totalorder %s761, %s762
    %p776 = scmp.eq.s32.totalorder %s77, 1
    %p777 = por %p775, %p776
    %p779 = scmp.ne.s32.totalorder %s762, %s778
    %p780 = scmp.eq.s32.totalorder %s77, 0
    %p781 = por %p779, %p780
    %p782 = scmp.le.s32.totalorder 1, %s71
    %p783 = scmp.lt.s32.totalorder %s71, 3
    %p784 = pnand %p782, %p783
    %p785 = pneg %p784
    // Predicated region
    $region9: #{compressor_mlp_forward.1} parent=5 // pred_check
      _
    $region10: #{compressor_mlp_forward.1} parent=5 // pred_check_branch
      %787 = sbr.rel (%p784) target = $region12
    $region11: #{compressor_mlp_forward.1} parent=5 // pred_region
      %s788 = ssub.s32 %s71, 1
      // Predicated region
      $region13: #{compressor_mlp_forward.1} parent=11 // pred_check
        %p789 = pneg %p118
      $region14: #{compressor_mlp_forward.1} parent=11 // pred_check_branch
        %791 = sbr.rel (%p789) target = $region16
      $region15: #{compressor_mlp_forward.1} parent=11 // pred_region
        _
      $region16: #{compressor_mlp_forward.1} parent=11 // pred_fallthru
        _
      // Predicated region
      $region17: #{compressor_mlp_forward.1} parent=11 // pred_check
        %p792 = pneg %p139
      $region18: #{compressor_mlp_forward.1} parent=11 // pred_check_branch
        %794 = sbr.rel (%p792) target = $region20
      $region19: #{compressor_mlp_forward.1} parent=11 // pred_region
        _
      $region20: #{compressor_mlp_forward.1} parent=11 // pred_fallthru
        _
      // Predicated region
      $region21: #{compressor_mlp_forward.1} parent=11 // pred_check
        %p795 = pneg %p160
      $region22: #{compressor_mlp_forward.1} parent=11 // pred_check_branch
        %797 = sbr.rel (%p795) target = $region24
      $region23: #{compressor_mlp_forward.1} parent=11 // pred_region
        _
      $region24: #{compressor_mlp_forward.1} parent=11 // pred_fallthru
        _
      // Predicated region
      $region25: #{compressor_mlp_forward.1} parent=11 // pred_check
        %p798 = pneg %p181
      $region26: #{compressor_mlp_forward.1} parent=11 // pred_check_branch
        %800 = sbr.rel (%p798) target = $region28
      $region27: #{compressor_mlp_forward.1} parent=11 // pred_region
        _
      $region28: #{compressor_mlp_forward.1} parent=11 // pred_fallthru
        _
      // Predicated region
      $region29: #{compressor_mlp_forward.1} parent=11 // pred_check
        %p801 = pneg %p202
      $region30: #{compressor_mlp_forward.1} parent=11 // pred_check_branch
        %803 = sbr.rel (%p801) target = $region32
      $region31: #{compressor_mlp_forward.1} parent=11 // pred_region
        _
      $region32: #{compressor_mlp_forward.1} parent=11 // pred_fallthru
        _
      // Predicated region
      $region33: #{compressor_mlp_forward.1} parent=11 // pred_check
        %p804 = pneg %p223
      $region34: #{compressor_mlp_forward.1} parent=11 // pred_check_branch
        %806 = sbr.rel (%p804) target = $region36
      $region35: #{compressor_mlp_forward.1} parent=11 // pred_region
        _
      $region36: #{compressor_mlp_forward.1} parent=11 // pred_fallthru
        _
      // Predicated region
      $region37: #{compressor_mlp_forward.1} parent=11 // pred_check
        %p807 = pneg %p244
      $region38: #{compressor_mlp_forward.1} parent=11 // pred_check_branch
        %809 = sbr.rel (%p807) target = $region40
      $region39: #{compressor_mlp_forward.1} parent=11 // pred_region
        _
      $region40: #{compressor_mlp_forward.1} parent=11 // pred_fallthru
        _
      // Predicated region
      $region41: #{compressor_mlp_forward.1} parent=11 // pred_check
        %p810 = pneg %p265
      $region42: #{compressor_mlp_forward.1} parent=11 // pred_check_branch
        %812 = sbr.rel (%p810) target = $region44
      $region43: #{compressor_mlp_forward.1} parent=11 // pred_region
        _
      $region44: #{compressor_mlp_forward.1} parent=11 // pred_fallthru
        _
      // Predicated region
      $region45: #{compressor_mlp_forward.1} parent=11 // pred_check
        %p813 = pneg %p286
      $region46: #{compressor_mlp_forward.1} parent=11 // pred_check_branch
        %815 = sbr.rel (%p813) target = $region48
      $region47: #{compressor_mlp_forward.1} parent=11 // pred_region
        _
      $region48: #{compressor_mlp_forward.1} parent=11 // pred_fallthru
        _
      // Predicated region
      $region49: #{compressor_mlp_forward.1} parent=11 // pred_check
        %p816 = pneg %p307
      $region50: #{compressor_mlp_forward.1} parent=11 // pred_check_branch
        %818 = sbr.rel (%p816) target = $region52
      $region51: #{compressor_mlp_forward.1} parent=11 // pred_region
        _
      $region52: #{compressor_mlp_forward.1} parent=11 // pred_fallthru
        _
      // Predicated region
      $region53: #{compressor_mlp_forward.1} parent=11 // pred_check
        %p819 = pneg %p328
      $region54: #{compressor_mlp_forward.1} parent=11 // pred_check_branch
        %821 = sbr.rel (%p819) target = $region56
      $region55: #{compressor_mlp_forward.1} parent=11 // pred_region
        _
      $region56: #{compressor_mlp_forward.1} parent=11 // pred_fallthru
        _
      // Predicated region
      $region57: #{compressor_mlp_forward.1} parent=11 // pred_check
        %p822 = pneg %p349
      $region58: #{compressor_mlp_forward.1} parent=11 // pred_check_branch
        %824 = sbr.rel (%p822) target = $region60
      $region59: #{compressor_mlp_forward.1} parent=11 // pred_region
        _
      $region60: #{compressor_mlp_forward.1} parent=11 // pred_fallthru
        _
      // Predicated region
      $region61: #{compressor_mlp_forward.1} parent=11 // pred_check
        %p825 = pneg %p370
      $region62: #{compressor_mlp_forward.1} parent=11 // pred_check_branch
        %827 = sbr.rel (%p825) target = $region64
      $region63: #{compressor_mlp_forward.1} parent=11 // pred_region
        _
      $region64: #{compressor_mlp_forward.1} parent=11 // pred_fallthru
        _
      // Predicated region
      $region65: #{compressor_mlp_forward.1} parent=11 // pred_check
        %p828 = pneg %p391
      $region66: #{compressor_mlp_forward.1} parent=11 // pred_check_branch
        %830 = sbr.rel (%p828) target = $region68
      $region67: #{compressor_mlp_forward.1} parent=11 // pred_region
        _
      $region68: #{compressor_mlp_forward.1} parent=11 // pred_fallthru
        _
      // Predicated region
      $region69: #{compressor_mlp_forward.1} parent=11 // pred_check
        %p831 = pneg %p412
      $region70: #{compressor_mlp_forward.1} parent=11 // pred_check_branch
        %833 = sbr.rel (%p831) target = $region72
      $region71: #{compressor_mlp_forward.1} parent=11 // pred_region
        _
      $region72: #{compressor_mlp_forward.1} parent=11 // pred_fallthru
        _
      // Predicated region
      $region73: #{compressor_mlp_forward.1} parent=11 // pred_check
        %p834 = pneg %p433
      $region74: #{compressor_mlp_forward.1} parent=11 // pred_check_branch
        %836 = sbr.rel (%p834) target = $region76
      $region75: #{compressor_mlp_forward.1} parent=11 // pred_region
        _
      $region76: #{compressor_mlp_forward.1} parent=11 // pred_fallthru
        _
      // Predicated region
      $region77: #{compressor_mlp_forward.1} parent=11 // pred_check
        %p837 = pneg %p454
      $region78: #{compressor_mlp_forward.1} parent=11 // pred_check_branch
        %839 = sbr.rel (%p837) target = $region80
      $region79: #{compressor_mlp_forward.1} parent=11 // pred_region
        _
      $region80: #{compressor_mlp_forward.1} parent=11 // pred_fallthru
        _
      // Predicated region
      $region81: #{compressor_mlp_forward.1} parent=11 // pred_check
        %p840 = pneg %p475
      $region82: #{compressor_mlp_forward.1} parent=11 // pred_check_branch
        %842 = sbr.rel (%p840) target = $region84
      $region83: #{compressor_mlp_forward.1} parent=11 // pred_region
        _
      $region84: #{compressor_mlp_forward.1} parent=11 // pred_fallthru
        _
      // Predicated region
      $region85: #{compressor_mlp_forward.1} parent=11 // pred_check
        %p843 = pneg %p496
      $region86: #{compressor_mlp_forward.1} parent=11 // pred_check_branch
        %845 = sbr.rel (%p843) target = $region88
      $region87: #{compressor_mlp_forward.1} parent=11 // pred_region
        _
      $region88: #{compressor_mlp_forward.1} parent=11 // pred_fallthru
        _
      // Predicated region
      $region89: #{compressor_mlp_forward.1} parent=11 // pred_check
        %p846 = pneg %p517
      $region90: #{compressor_mlp_forward.1} parent=11 // pred_check_branch
        %848 = sbr.rel (%p846) target = $region92
      $region91: #{compressor_mlp_forward.1} parent=11 // pred_region
        _
      $region92: #{compressor_mlp_forward.1} parent=11 // pred_fallthru
        _
      // Predicated region
      $region93: #{compressor_mlp_forward.1} parent=11 // pred_check
        %p849 = pneg %p538
      $region94: #{compressor_mlp_forward.1} parent=11 // pred_check_branch
        %851 = sbr.rel (%p849) target = $region96
      $region95: #{compressor_mlp_forward.1} parent=11 // pred_region
        _
      $region96: #{compressor_mlp_forward.1} parent=11 // pred_fallthru
        _
      // Predicated region
      $region97: #{compressor_mlp_forward.1} parent=11 // pred_check
        %p852 = pneg %p559
      $region98: #{compressor_mlp_forward.1} parent=11 // pred_check_branch
        %854 = sbr.rel (%p852) target = $region100
      $region99: #{compressor_mlp_forward.1} parent=11 // pred_region
        _
      $region100: #{compressor_mlp_forward.1} parent=11 // pred_fallthru
        _
      // Predicated region
      $region101: #{compressor_mlp_forward.1} parent=11 // pred_check
        %p855 = pneg %p580
      $region102: #{compressor_mlp_forward.1} parent=11 // pred_check_branch
        %857 = sbr.rel (%p855) target = $region104
      $region103: #{compressor_mlp_forward.1} parent=11 // pred_region
        _
      $region104: #{compressor_mlp_forward.1} parent=11 // pred_fallthru
        _
      // Predicated region
      $region105: #{compressor_mlp_forward.1} parent=11 // pred_check
        %p858 = pneg %p601
      $region106: #{compressor_mlp_forward.1} parent=11 // pred_check_branch
        %860 = sbr.rel (%p858) target = $region108
      $region107: #{compressor_mlp_forward.1} parent=11 // pred_region
        _
      $region108: #{compressor_mlp_forward.1} parent=11 // pred_fallthru
        _
      // Predicated region
      $region109: #{compressor_mlp_forward.1} parent=11 // pred_check
        %p861 = pneg %p622
      $region110: #{compressor_mlp_forward.1} parent=11 // pred_check_branch
        %863 = sbr.rel (%p861) target = $region112
      $region111: #{compressor_mlp_forward.1} parent=11 // pred_region
        _
      $region112: #{compressor_mlp_forward.1} parent=11 // pred_fallthru
        _
      // Predicated region
      $region113: #{compressor_mlp_forward.1} parent=11 // pred_check
        %p864 = pneg %p643
      $region114: #{compressor_mlp_forward.1} parent=11 // pred_check_branch
        %866 = sbr.rel (%p864) target = $region116
      $region115: #{compressor_mlp_forward.1} parent=11 // pred_region
        _
      $region116: #{compressor_mlp_forward.1} parent=11 // pred_fallthru
        _
      // Predicated region
      $region117: #{compressor_mlp_forward.1} parent=11 // pred_check
        %p867 = pneg %p664
      $region118: #{compressor_mlp_forward.1} parent=11 // pred_check_branch
        %869 = sbr.rel (%p867) target = $region120
      $region119: #{compressor_mlp_forward.1} parent=11 // pred_region
        _
      $region120: #{compressor_mlp_forward.1} parent=11 // pred_fallthru
        _
      // Predicated region
      $region121: #{compressor_mlp_forward.1} parent=11 // pred_check
        %p870 = pneg %p685
      $region122: #{compressor_mlp_forward.1} parent=11 // pred_check_branch
        %872 = sbr.rel (%p870) target = $region124
      $region123: #{compressor_mlp_forward.1} parent=11 // pred_region
        _
      $region124: #{compressor_mlp_forward.1} parent=11 // pred_fallthru
        _
      // Predicated region
      $region125: #{compressor_mlp_forward.1} parent=11 // pred_check
        %p873 = pneg %p706
      $region126: #{compressor_mlp_forward.1} parent=11 // pred_check_branch
        %875 = sbr.rel (%p873) target = $region128
      $region127: #{compressor_mlp_forward.1} parent=11 // pred_region
        _
      $region128: #{compressor_mlp_forward.1} parent=11 // pred_fallthru
        _
      // Predicated region
      $region129: #{compressor_mlp_forward.1} parent=11 // pred_check
        %p876 = pneg %p727
      $region130: #{compressor_mlp_forward.1} parent=11 // pred_check_branch
        %878 = sbr.rel (%p876) target = $region132
      $region131: #{compressor_mlp_forward.1} parent=11 // pred_region
        _
      $region132: #{compressor_mlp_forward.1} parent=11 // pred_fallthru
        _
      // Predicated region
      $region133: #{compressor_mlp_forward.1} parent=11 // pred_check
        %p879 = pneg %p748
      $region134: #{compressor_mlp_forward.1} parent=11 // pred_check_branch
        %881 = sbr.rel (%p879) target = $region136
      $region135: #{compressor_mlp_forward.1} parent=11 // pred_region
        _
      $region136: #{compressor_mlp_forward.1} parent=11 // pred_fallthru
        _
    $region12: #{compressor_mlp_forward.1} parent=5 // pred_fallthru
      _
    %p882 = scmp.lt.s32.totalorder %s71, 2
    // Predicated region
    $region137: #{compressor_mlp_forward.1} parent=5 // pred_check
      %p883 = pneg %p882
    $region138: #{compressor_mlp_forward.1} parent=5 // pred_check_branch
      %885 = sbr.rel (%p883) target = $region140
    $region139: #{compressor_mlp_forward.1} parent=5 // pred_region
      // Predicated region
      $region141: #{compressor_mlp_forward.1} parent=139 // pred_check
        %p886 = pneg %p91
      $region142: #{compressor_mlp_forward.1} parent=139 // pred_check_branch
        %888 = sbr.rel (%p886) target = $region144
      $region143: #{compressor_mlp_forward.1} parent=139 // pred_region
        %p889 = scmp.lt.s32.totalorder %s71, 1
        %s890 = scalar_select %p889, %s71, 1
        %s891 = smul.addr %s890, 2
        %s892 = smul.addr %s891, 8
        %s893 = scalar_lea.vmem %s1, %s892
      $region144: #{compressor_mlp_forward.1} parent=139 // pred_fallthru
        _
    $region140: #{compressor_mlp_forward.1} parent=5 // pred_fallthru
      _
    %p894 = scmp.le.s32.totalorder 1, %s71
    %p895 = scmp.lt.s32.totalorder %s71, 3
    %p896 = pnand %p894, %p895
    %p897 = pneg %p896
    // Predicated region
    $region145: #{compressor_mlp_forward.1} parent=5 // pred_check
      _
    $region146: #{compressor_mlp_forward.1} parent=5 // pred_check_branch
      %899 = sbr.rel (%p896) target = $region148
    $region147: #{compressor_mlp_forward.1} parent=5 // pred_region
      %s900 = ssub.s32 %s71, 1
      %p901 = scmp.lt.s32.totalorder %s76, 1
      %s902 = scalar_select %p901, %s76, 1
      %s903 = smul.addr %s902, 2
      %s904 = smul.addr %s903, 8
      %s905 = scalar_lea.vmem %s1, %s904
      %p906 = pneg %p97
      %p907 = pneg %p94
      %p908 = pneg %p118
      %p909 = pneg %p115
      %p910 = pneg %p139
      %p911 = pneg %p136
      %p912 = pneg %p160
      %p913 = pneg %p157
      %p914 = pneg %p181
      %p915 = pneg %p178
      %p916 = pneg %p202
      %p917 = pneg %p199
      %p918 = pneg %p223
      %p919 = pneg %p220
      %p920 = pneg %p244
      %p921 = pneg %p241
      %p922 = pneg %p265
      %p923 = pneg %p262
      %p924 = pneg %p286
      %p925 = pneg %p283
      %p926 = pneg %p307
      %p927 = pneg %p304
      %p928 = pneg %p328
      %p929 = pneg %p325
      %p930 = pneg %p349
      %p931 = pneg %p346
      %p932 = pneg %p370
      %p933 = pneg %p367
      %p934 = pneg %p391
      %p935 = pneg %p388
      %p936 = pneg %p412
      %p937 = pneg %p409
      %p938 = pneg %p433
      %p939 = pneg %p430
      %p940 = pneg %p454
      %p941 = pneg %p451
      %p942 = pneg %p475
      %p943 = pneg %p472
      %p944 = pneg %p496
      %p945 = pneg %p493
      %p946 = pneg %p517
      %p947 = pneg %p514
      %p948 = pneg %p538
      %p949 = pneg %p535
      %p950 = pneg %p559
      %p951 = pneg %p556
      %p952 = pneg %p580
      %p953 = pneg %p577
      %p954 = pneg %p601
      %p955 = pneg %p598
      %p956 = pneg %p622
      %p957 = pneg %p619
      %p958 = pneg %p643
      %p959 = pneg %p640
      %p960 = pneg %p664
      %p961 = pneg %p661
      %p962 = pneg %p685
      %p963 = pneg %p682
      %p964 = pneg %p706
      %p965 = pneg %p703
      %p966 = pneg %p727
      %p967 = pneg %p724
      %p968 = pneg %p748
      %p969 = pneg %p745
      %p970 = pneg %p774
      %p971 = pneg %p771
      %p972 = scmp.lt.s32.totalorder %s76, 1
      %s973 = scalar_select %p972, %s76, 1
      %s974 = smul.addr %s973, 8
      %s975 = scalar_lea.vmem %s65, %s974
      %p976 = scmp.lt.s32.totalorder %s76, 1
      %s977 = scalar_select %p976, %s76, 1
      %s978 = smul.addr %s977, 2
      %s979 = smul.addr %s978, 8
      %s980 = scalar_lea.vmem %s1, %s979
      %p981 = scmp.lt.s32.totalorder %s76, 1
      %s982 = scalar_select %p981, %s76, 1
      %s983 = smul.addr %s982, 8
      %s984 = scalar_lea.vmem %s65, %s983
      %v986 = vld [vmem:[%s3] sm:$0x1]
      %v987 = vld [vmem:[%s5] sm:$0x1]
      %v988 = vld [vmem:[%s7] sm:$0xf]
      %v989 = vld [vmem:[%s7 + $0x4] sm:$0xf]
      %v990 = vld [vmem:[%s7 + $0x8] sm:$0xf]
      %v991 = vld [vmem:[%s7 + $0xc] sm:$0xf]
      %v992 = vld [vmem:[%s7 + $0x10] sm:$0xf]
      %v993 = vld [vmem:[%s7 + $0x14] sm:$0xf]
      %v994 = vld [vmem:[%s7 + $0x18] sm:$0xf]
      %v995 = vld [vmem:[%s7 + $0x1c] sm:$0xf]
      %v996 = vld [vmem:[%s9] sm:$0x1]
      %v997 = vld [vmem:[%s11] sm:$0xf]
      %v998 = vld [vmem:[%s11 + $0x4] sm:$0xf]
      %v999 = vld [vmem:[%s13] sm:$0x1]
      %v1000 = vld [vmem:[%s15] sm:$0xff]
      %v1001 = vld [vmem:[%s17] sm:$0x1]
      %v1002 = vld [vmem:[%s19] sm:$0x1]
      %v1003 = vld [vmem:[%s21] sm:$0xf]
      %v1004 = vld [vmem:[%s21 + $0x4] sm:$0xf]
      %v1005 = vld [vmem:[%s21 + $0x8] sm:$0xf]
      %v1006 = vld [vmem:[%s21 + $0xc] sm:$0xf]
      %v1007 = vld [vmem:[%s21 + $0x10] sm:$0xf]
      %v1008 = vld [vmem:[%s21 + $0x14] sm:$0xf]
      %v1009 = vld [vmem:[%s21 + $0x18] sm:$0xf]
      %v1010 = vld [vmem:[%s21 + $0x1c] sm:$0xf]
      %v1011 = vld [vmem:[%s23] sm:$0xf]
      %v1012 = vld [vmem:[%s23 + $0x4] sm:$0xf]
      %v1013 = vld [vmem:[%s23 + $0x8] sm:$0xf]
      %v1014 = vld [vmem:[%s23 + $0xc] sm:$0xf]
      %v1015 = vld [vmem:[%s23 + $0x10] sm:$0xf]
      %v1016 = vld [vmem:[%s23 + $0x14] sm:$0xf]
      %v1017 = vld [vmem:[%s23 + $0x18] sm:$0xf]
      %v1018 = vld [vmem:[%s23 + $0x1c] sm:$0xf]
      %v1019 = vld [vmem:[%s25] sm:$0xf]
      %v1020 = vld [vmem:[%s25 + $0x4] sm:$0xf]
      %v1021 = vld [vmem:[%s25 + $0x8] sm:$0xf]
      %v1022 = vld [vmem:[%s25 + $0xc] sm:$0xf]
      %v1023 = vld [vmem:[%s25 + $0x10] sm:$0xf]
      %v1024 = vld [vmem:[%s25 + $0x14] sm:$0xf]
      %v1025 = vld [vmem:[%s25 + $0x18] sm:$0xf]
      %v1026 = vld [vmem:[%s25 + $0x1c] sm:$0xf]
      %v1027 = vld [vmem:[%s27] sm:$0x1]
      %v1028 = vld [vmem:[%s29] sm:$0x1]
      %v1029 = vld [vmem:[%s31] sm:$0x1]
      %v1030 = vld [vmem:[%s33] sm:$0xff]
      %v1031 = vld [vmem:[%s33 + $0x8] sm:$0xff]
      %v1032 = vld [vmem:[%s33 + $0x10] sm:$0xff]
      %v1033 = vld [vmem:[%s33 + $0x18] sm:$0xff]
      %v1034 = vld [vmem:[%s33 + $0x20] sm:$0xff]
      %v1035 = vld [vmem:[%s33 + $0x28] sm:$0xff]
      %v1036 = vld [vmem:[%s33 + $0x30] sm:$0xff]
      %v1037 = vld [vmem:[%s33 + $0x38] sm:$0xff]
      %v1038 = vld [vmem:[%s35] sm:$0x3]
      %v1039 = vld [vmem:[%s37] sm:$0xf]
      %v1040 = vld [vmem:[%s37 + $0x4] sm:$0xf]
      %v1041 = vld [vmem:[%s37 + $0x8] sm:$0xf]
      %v1042 = vld [vmem:[%s37 + $0xc] sm:$0xf]
      %v1043 = vld [vmem:[%s37 + $0x10] sm:$0xf]
      %v1044 = vld [vmem:[%s37 + $0x14] sm:$0xf]
      %v1045 = vld [vmem:[%s37 + $0x18] sm:$0xf]
      %v1046 = vld [vmem:[%s37 + $0x1c] sm:$0xf]
      %v1047 = vld [vmem:[%s37 + $0x20] sm:$0xf]
      %v1048 = vld [vmem:[%s37 + $0x24] sm:$0xf]
      %v1049 = vld [vmem:[%s37 + $0x28] sm:$0xf]
      %v1050 = vld [vmem:[%s37 + $0x2c] sm:$0xf]
      %v1051 = vld [vmem:[%s37 + $0x30] sm:$0xf]
      %v1052 = vld [vmem:[%s37 + $0x34] sm:$0xf]
      %v1053 = vld [vmem:[%s37 + $0x38] sm:$0xf]
      %v1054 = vld [vmem:[%s37 + $0x3c] sm:$0xf]
      %v1055 = vld [vmem:[%s37 + $0x40] sm:$0xf]
      %v1056 = vld [vmem:[%s37 + $0x44] sm:$0xf]
      %v1057 = vld [vmem:[%s37 + $0x48] sm:$0xf]
      %v1058 = vld [vmem:[%s37 + $0x4c] sm:$0xf]
      %v1059 = vld [vmem:[%s37 + $0x50] sm:$0xf]
      %v1060 = vld [vmem:[%s37 + $0x54] sm:$0xf]
      %v1061 = vld [vmem:[%s37 + $0x58] sm:$0xf]
      %v1062 = vld [vmem:[%s37 + $0x5c] sm:$0xf]
      %v1063 = vld [vmem:[%s37 + $0x60] sm:$0xf]
      %v1064 = vld [vmem:[%s37 + $0x64] sm:$0xf]
      %v1065 = vld [vmem:[%s37 + $0x68] sm:$0xf]
      %v1066 = vld [vmem:[%s37 + $0x6c] sm:$0xf]
      %v1067 = vld [vmem:[%s37 + $0x70] sm:$0xf]
      %v1068 = vld [vmem:[%s37 + $0x74] sm:$0xf]
      %v1069 = vld [vmem:[%s37 + $0x78] sm:$0xf]
      %v1070 = vld [vmem:[%s37 + $0x7c] sm:$0xf]
      %v1071 = vld [vmem:[%s39] sm:$0x1]
      %v1072 = vld [vmem:[%s41] sm:$0x1]
      %v1073 = vld [vmem:[%s43] sm:$0x1]
      %v1074 = vld [vmem:[%s45] sm:$0xf]
      %v1075 = vld [vmem:[%s45 + $0x4] sm:$0xf]
      %v1076 = vld [vmem:[%s45 + $0x8] sm:$0xf]
      %v1077 = vld [vmem:[%s45 + $0xc] sm:$0xf]
      %v1078 = vld [vmem:[%s45 + $0x10] sm:$0xf]
      %v1079 = vld [vmem:[%s45 + $0x14] sm:$0xf]
      %v1080 = vld [vmem:[%s45 + $0x18] sm:$0xf]
      %v1081 = vld [vmem:[%s45 + $0x1c] sm:$0xf]
      %v1082 = vld [vmem:[%s47] sm:$0xf]
      %v1083 = vld [vmem:[%s47 + $0x4] sm:$0xf]
      %v1084 = vld [vmem:[%s47 + $0x8] sm:$0xf]
      %v1085 = vld [vmem:[%s47 + $0xc] sm:$0xf]
      %v1086 = vld [vmem:[%s47 + $0x10] sm:$0xf]
      %v1087 = vld [vmem:[%s47 + $0x14] sm:$0xf]
      %v1088 = vld [vmem:[%s47 + $0x18] sm:$0xf]
      %v1089 = vld [vmem:[%s47 + $0x1c] sm:$0xf]
      %v1090 = vld [vmem:[%s49] sm:$0xf]
      %v1091 = vld [vmem:[%s49 + $0x4] sm:$0xf]
      %v1092 = vld [vmem:[%s49 + $0x8] sm:$0xf]
      %v1093 = vld [vmem:[%s49 + $0xc] sm:$0xf]
      %v1094 = vld [vmem:[%s49 + $0x10] sm:$0xf]
      %v1095 = vld [vmem:[%s49 + $0x14] sm:$0xf]
      %v1096 = vld [vmem:[%s49 + $0x18] sm:$0xf]
      %v1097 = vld [vmem:[%s49 + $0x1c] sm:$0xf]
      %v1098 = vld [vmem:[%s51] sm:$0x1]
      %v1099 = vld [vmem:[%s53] sm:$0x1]
      %v1100 = vld [vmem:[%s55] sm:$0x1]
      %v1101 = vld [vmem:[%s57] sm:$0xff]
      %v1102 = vld [vmem:[%s57 + $0x8] sm:$0xff]
      %v1103 = vld [vmem:[%s57 + $0x10] sm:$0xff]
      %v1104 = vld [vmem:[%s57 + $0x18] sm:$0xff]
      %v1105 = vld [vmem:[%s57 + $0x20] sm:$0xff]
      %v1106 = vld [vmem:[%s57 + $0x28] sm:$0xff]
      %v1107 = vld [vmem:[%s57 + $0x30] sm:$0xff]
      %v1108 = vld [vmem:[%s57 + $0x38] sm:$0xff]
      %v1109 = vld [vmem:[%s59] sm:$0x3]
      %v1110 = vld [vmem:[%s61] sm:$0xf]
      %v1111 = vld [vmem:[%s61 + $0x4] sm:$0xf]
      %v1112 = vld [vmem:[%s61 + $0x8] sm:$0xf]
      %v1113 = vld [vmem:[%s61 + $0xc] sm:$0xf]
      %v1114 = vld [vmem:[%s61 + $0x10] sm:$0xf]
      %v1115 = vld [vmem:[%s61 + $0x14] sm:$0xf]
      %v1116 = vld [vmem:[%s61 + $0x18] sm:$0xf]
      %v1117 = vld [vmem:[%s61 + $0x1c] sm:$0xf]
      %v1118 = vld [vmem:[%s61 + $0x20] sm:$0xf]
      %v1119 = vld [vmem:[%s61 + $0x24] sm:$0xf]
      %v1120 = vld [vmem:[%s61 + $0x28] sm:$0xf]
      %v1121 = vld [vmem:[%s61 + $0x2c] sm:$0xf]
      %v1122 = vld [vmem:[%s61 + $0x30] sm:$0xf]
      %v1123 = vld [vmem:[%s61 + $0x34] sm:$0xf]
      %v1124 = vld [vmem:[%s61 + $0x38] sm:$0xf]
      %v1125 = vld [vmem:[%s61 + $0x3c] sm:$0xf]
      %v1126 = vld [vmem:[%s61 + $0x40] sm:$0xf]
      %v1127 = vld [vmem:[%s61 + $0x44] sm:$0xf]
      %v1128 = vld [vmem:[%s61 + $0x48] sm:$0xf]
      %v1129 = vld [vmem:[%s61 + $0x4c] sm:$0xf]
      %v1130 = vld [vmem:[%s61 + $0x50] sm:$0xf]
      %v1131 = vld [vmem:[%s61 + $0x54] sm:$0xf]
      %v1132 = vld [vmem:[%s61 + $0x58] sm:$0xf]
      %v1133 = vld [vmem:[%s61 + $0x5c] sm:$0xf]
      %v1134 = vld [vmem:[%s61 + $0x60] sm:$0xf]
      %v1135 = vld [vmem:[%s61 + $0x64] sm:$0xf]
      %v1136 = vld [vmem:[%s61 + $0x68] sm:$0xf]
      %v1137 = vld [vmem:[%s61 + $0x6c] sm:$0xf]
      %v1138 = vld [vmem:[%s61 + $0x70] sm:$0xf]
      %v1139 = vld [vmem:[%s61 + $0x74] sm:$0xf]
      %v1140 = vld [vmem:[%s61 + $0x78] sm:$0xf]
      %v1141 = vld [vmem:[%s61 + $0x7c] sm:$0xf]
      %v1142 = vld [vmem:[%s63] sm:$0x1]
      %v1143 = vld [vmem:[%s980] sm:$0xff]
      %v1144 = vld [vmem:[%s980 + $0x8] sm:$0xff]
      %vm1145 = vcmask 523264
      %v1146 = vsel %vm1145, %v1143, 0.0
      %1147 = vadd.xlane.f32.xlu0 %v1146
      %v1148 = vpop.xlane.xlu0 %1147
      %v1149 = vsel %vm1145, %v1144, 0.0
      %1150 = vadd.xlane.f32.xlu0 %v1149
      %v1151 = vpop.xlane.xlu0 %1150
      %v1152 = vrcp.pop 64.0
      %v1153 = vmul.f32 %v1148, %v1152
      %v1154 = vmul.f32 %v1151, %v1152
      %v1155 = vsub.f32 %v1143, %v1153
      %v1156 = vsub.f32 %v1144, %v1154
      %v1157 = vmul.f32 %v1155, %v1155
      %v1158 = vmul.f32 %v1156, %v1156
      %v1159 = vsel %vm1145, %v1157, 0.0
      %1160 = vadd.xlane.f32.xlu0 %v1159
      %v1161 = vpop.xlane.xlu0 %1160
      %v1162 = vsel %vm1145, %v1158, 0.0
      %1163 = vadd.xlane.f32.xlu0 %v1162
      %v1164 = vpop.xlane.xlu0 %1163
      %v1165 = vmul.f32 %v1161, %v1152
      %v1166 = vmul.f32 %v1164, %v1152
      %v1167 = vadd.f32 %v1165, 1e-05
      %v1168 = vadd.f32 %v1166, 1e-05
      %v1169 = vrsqrt.pop %v1167
      %v1170 = vrsqrt.pop %v1168
      %v1171 = vmul.f32 %v1155, %v1169
      %v1172 = vmul.f32 %v1156, %v1170
      %v1174 = vlaneseq
      %v1175 = vshrl.u32 %v1174, 7
      %v1176 = vsub.s32 0, %v1175
      %v1177 = vrot.slane %v986, %v1176
      %v1179 = vmul.f32 %v1171, %v1177
      %v1180 = vmul.f32 %v1172, %v1177
      %v1182 = vlaneseq
      %v1183 = vshrl.u32 %v1182, 7
      %v1184 = vsub.s32 0, %v1183
      %v1185 = vrot.slane %v987, %v1184
      %v1187 = vadd.f32 %v1179, %v1185
      %v1188 = vadd.f32 %v1180, %v1185
      %v1189 = vpack.c.bf16 %v1188, %v1187
      %v1191 = vlaneseq
      %v1192 = vshrl.u32 %v1191, 7
      %v1193 = vsub.s32 0, %v1192
      %v1194 = vrot.slane %v996, %v1193
      %v1204 = vunpack.c.l.b16 %v988
      %v1205 = vunpack.c.l.b16 %v989
      %v1206 = vunpack.c.l.b16 %v990
      %v1207 = vunpack.c.l.b16 %v991
      %v1208 = vunpack.c.l.b16 %v992
      %v1209 = vunpack.c.l.b16 %v993
      %v1210 = vunpack.c.l.b16 %v994
      %v1211 = vunpack.c.l.b16 %v995
      %v1212 = vpack.c.b16 %v1205, %v1204
      %v1213 = vpack.c.b16 %v1207, %v1206
      %v1214 = vpack.c.b16 %v1209, %v1208
      %v1215 = vpack.c.b16 %v1211, %v1210
      %v1221 = vsel %vm1145, %v1189, 0
      %1223 = vmatprep.subr.bf16.mxu0 0
      %1224 = vmatpush1.bf16.msra.mxu0 %v1212
      %1225 = vmatprep.subr.bf16.mxu0 0
      %1226 = vmatpush1.bf16.msra.mxu0 %v1213
      %1227 = vmatprep.subr.bf16.mxu0 0
      %1228 = vmatpush1.bf16.msra.mxu0 %v1214
      %1229 = vmatprep.subr.bf16.mxu0 0
      %1230 = vmatpush1.bf16.msra.mxu0 %v1215
      %1231 = vmatprep.subr.bf16.mxu0 0
      %1232 = vmatpush1.bf16.msra.mxu0 0
      %1233 = vmatprep.subr.bf16.mxu0 0
      %1234 = vmatpush1.bf16.msra.mxu0 0
      %1235 = vmatprep.subr.bf16.mxu0 0
      %1236 = vmatpush1.bf16.msra.mxu0 0
      %1237 = vmatprep.subr.bf16.mxu0 0
      %1238 = vmatpush1.bf16.msra.mxu0 0
      %1239 = vmatprep.subr.bf16.mxu0 0
      %1240 = vmatpush1.bf16.msra.mxu0 0
      %1241 = vmatprep.subr.bf16.mxu0 0
      %1242 = vmatpush1.bf16.msra.mxu0 0
      %1243 = vmatprep.subr.bf16.mxu0 0
      %1244 = vmatpush1.bf16.msra.mxu0 0
      %1245 = vmatprep.subr.bf16.mxu0 0
      %1246 = vmatpush1.bf16.msra.mxu0 0
      %1247 = vmatprep.subr.bf16.mxu0 0
      %1248 = vmatpush1.bf16.msra.mxu0 0
      %1249 = vmatprep.subr.bf16.mxu0 0
      %1250 = vmatpush1.bf16.msra.mxu0 0
      %1251 = vmatprep.subr.bf16.mxu0 0
      %1252 = vmatpush1.bf16.msra.mxu0 0
      %1253 = vmatprep.subr.bf16.mxu0 0
      %1254 = vmatpush1.bf16.msra.mxu0 0
      %1255 = vmatprep.mubr.bf16.mxu0 0
      %1256 = vmatmul.mubr.bf16.gmra.mrb[0].mxu0 %v1221
      %v1257 = vpop.f32.mrb[0].mxu0
      %v1258 = vadd.f32 %v1194, %v1257
      %v1259 = vpop.f32.mrb[0].mxu0
      %v1260 = vpop.f32.mrb[0].mxu0
      %v1261 = vadd.f32 %v1194, %v1260
      %v1262 = vpop.f32.mrb[0].mxu0
      %1263 = vdwg.mxu0
      %v1264 = vmul.f32 %v1258, %v1258
      %v1265 = vmul.f32 %v1261, %v1261
      %v1266 = vmul.f32 %v1258, %v1264
      %v1267 = vmul.f32 %v1261, %v1265
      %v1268 = vmul.f32 %v1266, 0.044715
      %v1269 = vmul.f32 %v1267, 0.044715
      %v1270 = vadd.f32 %v1258, %v1268
      %v1271 = vadd.f32 %v1261, %v1269
      %v1272 = vmul.f32 %v1270, 0.7978846
      %v1273 = vmul.f32 %v1271, 0.7978846
      %v1274 = vtanh.pop %v1272
      %v1275 = vtanh.pop %v1273
      %v1276 = vadd.f32 %v1274, 1.0
      %v1277 = vadd.f32 %v1275, 1.0
      %v1278 = vmul.f32 %v1276, 0.5
      %v1279 = vmul.f32 %v1277, 0.5
      %v1280 = vmul.f32 %v1258, %v1278
      %v1281 = vmul.f32 %v1261, %v1279
      %v1282 = vpack.c.bf16 %v1281, %v1280
      %v1284 = vlaneseq
      %v1285 = vshrl.u32 %v1284, 7
      %v1286 = vsub.s32 0, %v1285
      %v1287 = vrot.slane %v999, %v1286
      %v1291 = vunpack.c.l.b16 %v997
      %v1292 = vunpack.c.l.b16 %v998
      %v1293 = vpack.c.b16 %v1292, %v1291
      %vm1295 = vcmask 130048
      %v1297 = vsel %vm1295, %v1282, 0
      %1299 = vmatprep.subr.bf16.mxu0 0
      %1300 = vmatpush1.bf16.msra.mxu0 %v1293
      %1301 = vmatprep.subr.bf16.mxu0 0
      %1302 = vmatpush1.bf16.msra.mxu0 0
      %1303 = vmatprep.subr.bf16.mxu0 0
      %1304 = vmatpush1.bf16.msra.mxu0 0
      %1305 = vmatprep.subr.bf16.mxu0 0
      %1306 = vmatpush1.bf16.msra.mxu0 0
      %1307 = vmatprep.subr.bf16.mxu0 0
      %1308 = vmatpush1.bf16.msra.mxu0 0
      %1309 = vmatprep.subr.bf16.mxu0 0
      %1310 = vmatpush1.bf16.msra.mxu0 0
      %1311 = vmatprep.subr.bf16.mxu0 0
      %1312 = vmatpush1.bf16.msra.mxu0 0
      %1313 = vmatprep.subr.bf16.mxu0 0
      %1314 = vmatpush1.bf16.msra.mxu0 0
      %1315 = vmatprep.subr.bf16.mxu0 0
      %1316 = vmatpush1.bf16.msra.mxu0 0
      %1317 = vmatprep.subr.bf16.mxu0 0
      %1318 = vmatpush1.bf16.msra.mxu0 0
      %1319 = vmatprep.subr.bf16.mxu0 0
      %1320 = vmatpush1.bf16.msra.mxu0 0
      %1321 = vmatprep.subr.bf16.mxu0 0
      %1322 = vmatpush1.bf16.msra.mxu0 0
      %1323 = vmatprep.subr.bf16.mxu0 0
      %1324 = vmatpush1.bf16.msra.mxu0 0
      %1325 = vmatprep.subr.bf16.mxu0 0
      %1326 = vmatpush1.bf16.msra.mxu0 0
      %1327 = vmatprep.subr.bf16.mxu0 0
      %1328 = vmatpush1.bf16.msra.mxu0 0
      %1329 = vmatprep.subr.bf16.mxu0 0
      %1330 = vmatpush1.bf16.msra.mxu0 0
      %1331 = vmatprep.mubr.bf16.mxu0 0
      %1332 = vmatmul.mubr.bf16.gmra.mrb[0].mxu0 %v1297
      %v1333 = vpop.f32.mrb[0].mxu0
      %v1334 = vadd.f32 %v1287, %v1333
      %v1335 = vpop.f32.mrb[0].mxu0
      %v1336 = vpop.f32.mrb[0].mxu0
      %v1337 = vadd.f32 %v1287, %v1336
      %v1338 = vpop.f32.mrb[0].mxu0
      %1339 = vdwg.mxu0
      %vm1340 = vcmask 64512
      %v1341 = vsel %vm1340, %v1334, -inf
      %v1342 = vsel %vm1340, %v1337, -inf
      %v1343 = vmax.f32 %v1341, %v1342
      %v1344 = vrot.slane %v1343, 4
      %v1345 = vmax.f32 %v1343, %v1344
      %v1346 = vrot.slane %v1345, 2
      %v1347 = vmax.f32 %v1345, %v1346
      %v1348 = vrot.slane %v1347, 1
      %v1349 = vmax.f32 %v1347, %v1348
      %v1350 = vsub.f32 %v1334, %v1349
      %v1351 = vsub.f32 %v1337, %v1349
      %v1352 = vmul.f32 %v1350, 1.442695
      %v1353 = vpow.pop %v1352
      %v1354 = vmul.f32 %v1351, 1.442695
      %v1355 = vpow.pop %v1354
      %v1356 = vsel %vm1340, %v1353, 0.0
      %v1357 = vsel %vm1340, %v1355, 0.0
      %v1358 = vadd.f32 %v1356, %v1357
      %v1359 = vrot.slane %v1358, 4
      %v1360 = vadd.f32 %v1358, %v1359
      %v1361 = vrot.slane %v1360, 2
      %v1362 = vadd.f32 %v1360, %v1361
      %v1363 = vrot.slane %v1362, 1
      %v1364 = vadd.f32 %v1362, %v1363
      %v1365 = vrcp.pop %v1364
      %v1366 = vmul.f32 %v1353, %v1365
      %v1367 = vmul.f32 %v1355, %v1365
      %v1368 = vpack.c.bf16 %v1367, %v1366
      %1369 = vxpose.xlu0.c.b16.start [1/8] %v1368, 128
      %1370 = vxpose.xlu0.c.b16.cont [2/8] 0, 128
      %1371 = vxpose.xlu0.c.b16.cont [3/8] 0, 128
      %1372 = vxpose.xlu0.c.b16.cont [4/8] 0, 128
      %1373 = vxpose.xlu0.c.b16.cont [5/8] 0, 128
      %1374 = vxpose.xlu0.c.b16.cont [6/8] 0, 128
      %1375 = vxpose.xlu0.c.b16.cont [7/8] 0, 128
      %1376 = vxpose.xlu0.c.b16.end [8/8] 0, 128
      %v1377 = vpop.trf.xlu0
      %v1378 = vpop.trf.xlu0
      %v1379 = vpop.trf.xlu0
      %v1380 = vpop.trf.xlu0
      %v1381 = vpop.trf.xlu0
      %v1382 = vpop.trf.xlu0
      %v1383 = vpop.trf.xlu0
      %v1384 = vpop.trf.xlu0
      %v1386 = vsel %vm1295, %v1377, 0
      %1388 = vmatprep.subr.bf16.mxu0 0
      %1389 = vmatpush1.bf16.msra.mxu0 %v1189
      %1390 = vmatprep.subr.bf16.mxu0 0
      %1391 = vmatpush1.bf16.msra.mxu0 0
      %1392 = vmatprep.subr.bf16.mxu0 0
      %1393 = vmatpush1.bf16.msra.mxu0 0
      %1394 = vmatprep.subr.bf16.mxu0 0
      %1395 = vmatpush1.bf16.msra.mxu0 0
      %1396 = vmatprep.subr.bf16.mxu0 0
      %1397 = vmatpush1.bf16.msra.mxu0 0
      %1398 = vmatprep.subr.bf16.mxu0 0
      %1399 = vmatpush1.bf16.msra.mxu0 0
      %1400 = vmatprep.subr.bf16.mxu0 0
      %1401 = vmatpush1.bf16.msra.mxu0 0
      %1402 = vmatprep.subr.bf16.mxu0 0
      %1403 = vmatpush1.bf16.msra.mxu0 0
      %1404 = vmatprep.subr.bf16.mxu0 0
      %1405 = vmatpush1.bf16.msra.mxu0 0
      %1406 = vmatprep.subr.bf16.mxu0 0
      %1407 = vmatpush1.bf16.msra.mxu0 0
      %1408 = vmatprep.subr.bf16.mxu0 0
      %1409 = vmatpush1.bf16.msra.mxu0 0
      %1410 = vmatprep.subr.bf16.mxu0 0
      %1411 = vmatpush1.bf16.msra.mxu0 0
      %1412 = vmatprep.subr.bf16.mxu0 0
      %1413 = vmatpush1.bf16.msra.mxu0 0
      %1414 = vmatprep.subr.bf16.mxu0 0
      %1415 = vmatpush1.bf16.msra.mxu0 0
      %1416 = vmatprep.subr.bf16.mxu0 0
      %1417 = vmatpush1.bf16.msra.mxu0 0
      %1418 = vmatprep.subr.bf16.mxu0 0
      %1419 = vmatpush1.bf16.msra.mxu0 0
      %1420 = vmatprep.mubr.bf16.mxu0 0
      %1421 = vmatmul.mubr.bf16.gmra.mrb[0].mxu0 %v1386
      %v1422 = vpop.f32.mrb[0].mxu0
      %v1423 = vadd.f32 %v1000, %v1422
      %v1424 = vpop.f32.mrb[0].mxu0
      %v1425 = vpop.f32.mrb[0].mxu0
      %v1426 = vpop.f32.mrb[0].mxu0
      %1427 = vdwg.mxu0
      %v1428 = vsel %vm1145, %v1187, 0.0
      %1429 = vadd.xlane.f32.xlu0 %v1428
      %v1430 = vpop.xlane.xlu0 %1429
      %v1431 = vsel %vm1145, %v1188, 0.0
      %1432 = vadd.xlane.f32.xlu0 %v1431
      %v1433 = vpop.xlane.xlu0 %1432
      %v1434 = vmul.f32 %v1430, %v1152
      %v1435 = vmul.f32 %v1433, %v1152
      %v1436 = vsub.f32 %v1187, %v1434
      %v1437 = vsub.f32 %v1188, %v1435
      %v1438 = vmul.f32 %v1436, %v1436
      %v1439 = vmul.f32 %v1437, %v1437
      %v1440 = vsel %vm1145, %v1438, 0.0
      %1441 = vadd.xlane.f32.xlu0 %v1440
      %v1442 = vpop.xlane.xlu0 %1441
      %v1443 = vsel %vm1145, %v1439, 0.0
      %1444 = vadd.xlane.f32.xlu0 %v1443
      %v1445 = vpop.xlane.xlu0 %1444
      %v1446 = vmul.f32 %v1442, %v1152
      %v1447 = vmul.f32 %v1445, %v1152
      %v1448 = vadd.f32 %v1446, 1e-05
      %v1449 = vadd.f32 %v1447, 1e-05
      %v1450 = vrsqrt.pop %v1448
      %v1451 = vrsqrt.pop %v1449
      %v1452 = vmul.f32 %v1436, %v1450
      %v1453 = vmul.f32 %v1437, %v1451
      %v1455 = vlaneseq
      %v1456 = vshrl.u32 %v1455, 7
      %v1457 = vsub.s32 0, %v1456
      %v1458 = vrot.slane %v1001, %v1457
      %v1460 = vmul.f32 %v1452, %v1458
      %v1461 = vmul.f32 %v1453, %v1458
      %v1463 = vlaneseq
      %v1464 = vshrl.u32 %v1463, 7
      %v1465 = vsub.s32 0, %v1464
      %v1466 = vrot.slane %v1002, %v1465
      %v1468 = vadd.f32 %v1460, %v1466
      %v1469 = vadd.f32 %v1461, %v1466
      %v1470 = vpack.c.bf16 %v1469, %v1468
      %v1479 = vunpack.c.l.b16 %v1011
      %v1480 = vunpack.c.l.b16 %v1012
      %v1481 = vunpack.c.l.b16 %v1013
      %v1482 = vunpack.c.l.b16 %v1014
      %v1483 = vunpack.c.l.b16 %v1015
      %v1484 = vunpack.c.l.b16 %v1016
      %v1485 = vunpack.c.l.b16 %v1017
      %v1486 = vunpack.c.l.b16 %v1018
      %v1487 = vpack.c.b16 %v1480, %v1479
      %v1488 = vpack.c.b16 %v1482, %v1481
      %v1489 = vpack.c.b16 %v1484, %v1483
      %v1490 = vpack.c.b16 %v1486, %v1485
      %v1496 = vsel %vm1145, %v1470, 0
      %1498 = vmatprep.subr.bf16.mxu0 0
      %1499 = vmatpush1.bf16.msra.mxu0 %v1487
      %1500 = vmatprep.subr.bf16.mxu0 0
      %1501 = vmatpush1.bf16.msra.mxu0 %v1488
      %1502 = vmatprep.subr.bf16.mxu0 0
      %1503 = vmatpush1.bf16.msra.mxu0 %v1489
      %1504 = vmatprep.subr.bf16.mxu0 0
      %1505 = vmatpush1.bf16.msra.mxu0 %v1490
      %1506 = vmatprep.subr.bf16.mxu0 0
      %1507 = vmatpush1.bf16.msra.mxu0 0
      %1508 = vmatprep.subr.bf16.mxu0 0
      %1509 = vmatpush1.bf16.msra.mxu0 0
      %1510 = vmatprep.subr.bf16.mxu0 0
      %1511 = vmatpush1.bf16.msra.mxu0 0
      %1512 = vmatprep.subr.bf16.mxu0 0
      %1513 = vmatpush1.bf16.msra.mxu0 0
      %1514 = vmatprep.subr.bf16.mxu0 0
      %1515 = vmatpush1.bf16.msra.mxu0 0
      %1516 = vmatprep.subr.bf16.mxu0 0
      %1517 = vmatpush1.bf16.msra.mxu0 0
      %1518 = vmatprep.subr.bf16.mxu0 0
      %1519 = vmatpush1.bf16.msra.mxu0 0
      %1520 = vmatprep.subr.bf16.mxu0 0
      %1521 = vmatpush1.bf16.msra.mxu0 0
      %1522 = vmatprep.subr.bf16.mxu0 0
      %1523 = vmatpush1.bf16.msra.mxu0 0
      %1524 = vmatprep.subr.bf16.mxu0 0
      %1525 = vmatpush1.bf16.msra.mxu0 0
      %1526 = vmatprep.subr.bf16.mxu0 0
      %1527 = vmatpush1.bf16.msra.mxu0 0
      %1528 = vmatprep.subr.bf16.mxu0 0
      %1529 = vmatpush1.bf16.msra.mxu0 0
      %1530 = vmatprep.mubr.bf16.mxu0 0
      %1531 = vmatmul.mubr.bf16.gmra.mrb[0].mxu0 %v1496
      %v1532 = vpop.f32.mrb[0].mxu0
      %v1533 = vadd.f32 0.0, %v1532
      %v1534 = vpop.f32.mrb[0].mxu0
      %v1535 = vpop.f32.mrb[0].mxu0
      %v1536 = vadd.f32 0.0, %v1535
      %v1537 = vpop.f32.mrb[0].mxu0
      %1538 = vdwg.mxu0
      %v1539 = vpack.c.bf16 %v1423, %v1423
      %v1548 = vunpack.c.l.b16 %v1003
      %v1549 = vunpack.c.l.b16 %v1004
      %v1550 = vunpack.c.l.b16 %v1005
      %v1551 = vunpack.c.l.b16 %v1006
      %v1552 = vunpack.c.l.b16 %v1007
      %v1553 = vunpack.c.l.b16 %v1008
      %v1554 = vunpack.c.l.b16 %v1009
      %v1555 = vunpack.c.l.b16 %v1010
      %v1556 = vpack.c.b16 %v1549, %v1548
      %v1557 = vpack.c.b16 %v1551, %v1550
      %v1558 = vpack.c.b16 %v1553, %v1552
      %v1559 = vpack.c.b16 %v1555, %v1554
      %v1565 = vsel %vm1145, %v1539, 0
      %1567 = vmatprep.subr.bf16.mxu0 0
      %1568 = vmatpush1.bf16.msra.mxu0 %v1556
      %1569 = vmatprep.subr.bf16.mxu0 0
      %1570 = vmatpush1.bf16.msra.mxu0 %v1557
      %1571 = vmatprep.subr.bf16.mxu0 0
      %1572 = vmatpush1.bf16.msra.mxu0 %v1558
      %1573 = vmatprep.subr.bf16.mxu0 0
      %1574 = vmatpush1.bf16.msra.mxu0 %v1559
      %1575 = vmatprep.subr.bf16.mxu0 0
      %1576 = vmatpush1.bf16.msra.mxu0 0
      %1577 = vmatprep.subr.bf16.mxu0 0
      %1578 = vmatpush1.bf16.msra.mxu0 0
      %1579 = vmatprep.subr.bf16.mxu0 0
      %1580 = vmatpush1.bf16.msra.mxu0 0
      %1581 = vmatprep.subr.bf16.mxu0 0
      %1582 = vmatpush1.bf16.msra.mxu0 0
      %1583 = vmatprep.subr.bf16.mxu0 0
      %1584 = vmatpush1.bf16.msra.mxu0 0
      %1585 = vmatprep.subr.bf16.mxu0 0
      %1586 = vmatpush1.bf16.msra.mxu0 0
      %1587 = vmatprep.subr.bf16.mxu0 0
      %1588 = vmatpush1.bf16.msra.mxu0 0
      %1589 = vmatprep.subr.bf16.mxu0 0
      %1590 = vmatpush1.bf16.msra.mxu0 0
      %1591 = vmatprep.subr.bf16.mxu0 0
      %1592 = vmatpush1.bf16.msra.mxu0 0
      %1593 = vmatprep.subr.bf16.mxu0 0
      %1594 = vmatpush1.bf16.msra.mxu0 0
      %1595 = vmatprep.subr.bf16.mxu0 0
      %1596 = vmatpush1.bf16.msra.mxu0 0
      %1597 = vmatprep.subr.bf16.mxu0 0
      %1598 = vmatpush1.bf16.msra.mxu0 0
      %1599 = vmatprep.mubr.bf16.mxu0 0
      %1600 = vmatmul.mubr.bf16.gmra.mrb[0].mxu0 %v1565
      %v1601 = vpop.f32.mrb[0].mxu0
      %v1602 = vadd.f32 0.0, %v1601
      %v1603 = vpop.f32.mrb[0].mxu0
      %v1604 = vpop.f32.mrb[0].mxu0
      %v1605 = vpop.f32.mrb[0].mxu0
      %1606 = vdwg.mxu0
      %v1607 = vpack.c.bf16 %v1602, %v1602
      %v1608 = vpack.c.bf16 %v1536, %v1533
      %vm1609 = vcmask 261120
      %v1611 = vsel %vm1609, %v1607, 0
      %v1614 = vsel %vm1609, %v1608, 0
      %1616 = vmatprep.subr.bf16.mxu0 0
      %1617 = vmatpush1.bf16.xpose.msra.mxu0 %v1614
      %1618 = vmatprep.subr.bf16.mxu0 0
      %1619 = vmatpush1.bf16.xpose.msra.mxu0 0
      %1620 = vmatprep.subr.bf16.mxu0 0
      %1621 = vmatpush1.bf16.xpose.msra.mxu0 0
      %1622 = vmatprep.subr.bf16.mxu0 0
      %1623 = vmatpush1.bf16.xpose.msra.mxu0 0
      %1624 = vmatprep.subr.bf16.mxu0 0
      %1625 = vmatpush1.bf16.xpose.msra.mxu0 0
      %1626 = vmatprep.subr.bf16.mxu0 0
      %1627 = vmatpush1.bf16.xpose.msra.mxu0 0
      %1628 = vmatprep.subr.bf16.mxu0 0
      %1629 = vmatpush1.bf16.xpose.msra.mxu0 0
      %1630 = vmatprep.subr.bf16.mxu0 0
      %1631 = vmatpush1.bf16.xpose.msra.mxu0 0
      %1632 = vmatprep.subr.bf16.mxu0 0
      %1633 = vmatpush1.bf16.xpose.msra.mxu0 0
      %1634 = vmatprep.subr.bf16.mxu0 0
      %1635 = vmatpush1.bf16.xpose.msra.mxu0 0
      %1636 = vmatprep.subr.bf16.mxu0 0
      %1637 = vmatpush1.bf16.xpose.msra.mxu0 0
      %1638 = vmatprep.subr.bf16.mxu0 0
      %1639 = vmatpush1.bf16.xpose.msra.mxu0 0
      %1640 = vmatprep.subr.bf16.mxu0 0
      %1641 = vmatpush1.bf16.xpose.msra.mxu0 0
      %1642 = vmatprep.subr.bf16.mxu0 0
      %1643 = vmatpush1.bf16.xpose.msra.mxu0 0
      %1644 = vmatprep.subr.bf16.mxu0 0
      %1645 = vmatpush1.bf16.xpose.msra.mxu0 0
      %1646 = vmatprep.subr.bf16.mxu0 0
      %1647 = vmatpush1.bf16.xpose.msra.mxu0 0
      %1648 = vmatprep.mubr.bf16.mxu0 0
      %1649 = vmatmul.mubr.bf16.gmra.mrb[0].mxu0 %v1611
      %v1650 = vpop.f32.mrb[0].mxu0
      %v1651 = vadd.f32 0.0, %v1650
      %v1652 = vpop.f32.mrb[0].mxu0
      %v1653 = vpop.f32.mrb[0].mxu0
      %v1654 = vpop.f32.mrb[0].mxu0
      %1655 = vdwg.mxu0
      %v1656 = vsel %vm1295, %v1651, -inf
      %1657 = vmax.xlane.f32.xlu0 %v1656
      %v1658 = vpop.xlane.xlu0 %1657
      %v1659 = vsub.f32 %v1651, %v1658
      %v1660 = vmul.f32 %v1659, 1.442695
      %v1661 = vpow.pop %v1660
      %v1662 = vsel %vm1295, %v1661, 0.0
      %1663 = vadd.xlane.f32.xlu0 %v1662
      %v1664 = vpop.xlane.xlu0 %1663
      %v1665 = vrcp.pop %v1664
      %v1666 = vmul.f32 %v1661, %v1665
      %v1667 = vpack.c.bf16 %v1666, %v1666
      %1669 = vrot.lane.b32.xlu0 %v1608, 64
      %v1670 = vpop.permute.xlu0 %1669
      %v1673 = vsel %vm1295, %v1667, 0
      %1675 = vmatprep.subr.bf16.mxu0 0
      %1676 = vmatpush1.bf16.msra.mxu0 %v1670
      %1677 = vmatprep.subr.bf16.mxu0 0
      %1678 = vmatpush1.bf16.msra.mxu0 0
      %1679 = vmatprep.subr.bf16.mxu0 0
      %1680 = vmatpush1.bf16.msra.mxu0 0
      %1681 = vmatprep.subr.bf16.mxu0 0
      %1682 = vmatpush1.bf16.msra.mxu0 0
      %1683 = vmatprep.subr.bf16.mxu0 0
      %1684 = vmatpush1.bf16.msra.mxu0 0
      %1685 = vmatprep.subr.bf16.mxu0 0
      %1686 = vmatpush1.bf16.msra.mxu0 0
      %1687 = vmatprep.subr.bf16.mxu0 0
      %1688 = vmatpush1.bf16.msra.mxu0 0
      %1689 = vmatprep.subr.bf16.mxu0 0
      %1690 = vmatpush1.bf16.msra.mxu0 0
      %1691 = vmatprep.subr.bf16.mxu0 0
      %1692 = vmatpush1.bf16.msra.mxu0 0
      %1693 = vmatprep.subr.bf16.mxu0 0
      %1694 = vmatpush1.bf16.msra.mxu0 0
      %1695 = vmatprep.subr.bf16.mxu0 0
      %1696 = vmatpush1.bf16.msra.mxu0 0
      %1697 = vmatprep.subr.bf16.mxu0 0
      %1698 = vmatpush1.bf16.msra.mxu0 0
      %1699 = vmatprep.subr.bf16.mxu0 0
      %1700 = vmatpush1.bf16.msra.mxu0 0
      %1701 = vmatprep.subr.bf16.mxu0 0
      %1702 = vmatpush1.bf16.msra.mxu0 0
      %1703 = vmatprep.subr.bf16.mxu0 0
      %1704 = vmatpush1.bf16.msra.mxu0 0
      %1705 = vmatprep.subr.bf16.mxu0 0
      %1706 = vmatpush1.bf16.msra.mxu0 0
      %1707 = vmatprep.mubr.bf16.mxu0 0
      %1708 = vmatmul.mubr.bf16.gmra.mrb[0].mxu0 %v1673
      %v1709 = vpop.f32.mrb[0].mxu0
      %v1710 = vadd.f32 0.0, %v1709
      %v1711 = vpop.f32.mrb[0].mxu0
      %v1712 = vpop.f32.mrb[0].mxu0
      %v1713 = vpop.f32.mrb[0].mxu0
      %1714 = vdwg.mxu0
      %v1715 = vpack.c.bf16 %v1710, %v1710
      %1717 = vrot.lane.b32.xlu0 %v1607, 96
      %v1718 = vpop.permute.xlu0 %1717
      %1719 = vrot.lane.b32.xlu0 %v1608, 96
      %v1720 = vpop.permute.xlu0 %1719
      %v1722 = vsel %vm1609, %v1718, 0
      %v1725 = vsel %vm1609, %v1720, 0
      %1727 = vmatprep.subr.bf16.mxu0 0
      %1728 = vmatpush1.bf16.xpose.msra.mxu0 %v1725
      %1729 = vmatprep.subr.bf16.mxu0 0
      %1730 = vmatpush1.bf16.xpose.msra.mxu0 0
      %1731 = vmatprep.subr.bf16.mxu0 0
      %1732 = vmatpush1.bf16.xpose.msra.mxu0 0
      %1733 = vmatprep.subr.bf16.mxu0 0
      %1734 = vmatpush1.bf16.xpose.msra.mxu0 0
      %1735 = vmatprep.subr.bf16.mxu0 0
      %1736 = vmatpush1.bf16.xpose.msra.mxu0 0
      %1737 = vmatprep.subr.bf16.mxu0 0
      %1738 = vmatpush1.bf16.xpose.msra.mxu0 0
      %1739 = vmatprep.subr.bf16.mxu0 0
      %1740 = vmatpush1.bf16.xpose.msra.mxu0 0
      %1741 = vmatprep.subr.bf16.mxu0 0
      %1742 = vmatpush1.bf16.xpose.msra.mxu0 0
      %1743 = vmatprep.subr.bf16.mxu0 0
      %1744 = vmatpush1.bf16.xpose.msra.mxu0 0
      %1745 = vmatprep.subr.bf16.mxu0 0
      %1746 = vmatpush1.bf16.xpose.msra.mxu0 0
      %1747 = vmatprep.subr.bf16.mxu0 0
      %1748 = vmatpush1.bf16.xpose.msra.mxu0 0
      %1749 = vmatprep.subr.bf16.mxu0 0
      %1750 = vmatpush1.bf16.xpose.msra.mxu0 0
      %1751 = vmatprep.subr.bf16.mxu0 0
      %1752 = vmatpush1.bf16.xpose.msra.mxu0 0
      %1753 = vmatprep.subr.bf16.mxu0 0
      %1754 = vmatpush1.bf16.xpose.msra.mxu0 0
      %1755 = vmatprep.subr.bf16.mxu0 0
      %1756 = vmatpush1.bf16.xpose.msra.mxu0 0
      %1757 = vmatprep.subr.bf16.mxu0 0
      %1758 = vmatpush1.bf16.xpose.msra.mxu0 0
      %1759 = vmatprep.mubr.bf16.mxu0 0
      %1760 = vmatmul.mubr.bf16.gmra.mrb[0].mxu0 %v1722
      %v1761 = vpop.f32.mrb[0].mxu0
      %v1762 = vadd.f32 0.0, %v1761
      %v1763 = vpop.f32.mrb[0].mxu0
      %v1764 = vpop.f32.mrb[0].mxu0
      %v1765 = vpop.f32.mrb[0].mxu0
      %1766 = vdwg.mxu0
      %v1767 = vsel %vm1295, %v1762, -inf
      %1768 = vmax.xlane.f32.xlu0 %v1767
      %v1769 = vpop.xlane.xlu0 %1768
      %v1770 = vsub.f32 %v1762, %v1769
      %v1771 = vmul.f32 %v1770, 1.442695
      %v1772 = vpow.pop %v1771
      %v1773 = vsel %vm1295, %v1772, 0.0
      %1774 = vadd.xlane.f32.xlu0 %v1773
      %v1775 = vpop.xlane.xlu0 %1774
      %v1776 = vrcp.pop %v1775
      %v1777 = vmul.f32 %v1772, %v1776
      %v1778 = vpack.c.bf16 %v1777, %v1777
      %1779 = vrot.lane.b32.xlu0 %v1608, 32
      %v1780 = vpop.permute.xlu0 %1779
      %v1783 = vsel %vm1295, %v1778, 0
      %1785 = vmatprep.subr.bf16.mxu0 0
      %1786 = vmatpush1.bf16.msra.mxu0 %v1780
      %1787 = vmatprep.subr.bf16.mxu0 0
      %1788 = vmatpush1.bf16.msra.mxu0 0
      %1789 = vmatprep.subr.bf16.mxu0 0
      %1790 = vmatpush1.bf16.msra.mxu0 0
      %1791 = vmatprep.subr.bf16.mxu0 0
      %1792 = vmatpush1.bf16.msra.mxu0 0
      %1793 = vmatprep.subr.bf16.mxu0 0
      %1794 = vmatpush1.bf16.msra.mxu0 0
      %1795 = vmatprep.subr.bf16.mxu0 0
      %1796 = vmatpush1.bf16.msra.mxu0 0
      %1797 = vmatprep.subr.bf16.mxu0 0
      %1798 = vmatpush1.bf16.msra.mxu0 0
      %1799 = vmatprep.subr.bf16.mxu0 0
      %1800 = vmatpush1.bf16.msra.mxu0 0
      %1801 = vmatprep.subr.bf16.mxu0 0
      %1802 = vmatpush1.bf16.msra.mxu0 0
      %1803 = vmatprep.subr.bf16.mxu0 0
      %1804 = vmatpush1.bf16.msra.mxu0 0
      %1805 = vmatprep.subr.bf16.mxu0 0
      %1806 = vmatpush1.bf16.msra.mxu0 0
      %1807 = vmatprep.subr.bf16.mxu0 0
      %1808 = vmatpush1.bf16.msra.mxu0 0
      %1809 = vmatprep.subr.bf16.mxu0 0
      %1810 = vmatpush1.bf16.msra.mxu0 0
      %1811 = vmatprep.subr.bf16.mxu0 0
      %1812 = vmatpush1.bf16.msra.mxu0 0
      %1813 = vmatprep.subr.bf16.mxu0 0
      %1814 = vmatpush1.bf16.msra.mxu0 0
      %1815 = vmatprep.subr.bf16.mxu0 0
      %1816 = vmatpush1.bf16.msra.mxu0 0
      %1817 = vmatprep.mubr.bf16.mxu0 0
      %1818 = vmatmul.mubr.bf16.gmra.mrb[0].mxu0 %v1783
      %v1819 = vpop.f32.mrb[0].mxu0
      %v1820 = vadd.f32 0.0, %v1819
      %v1821 = vpop.f32.mrb[0].mxu0
      %v1822 = vpop.f32.mrb[0].mxu0
      %v1823 = vpop.f32.mrb[0].mxu0
      %1824 = vdwg.mxu0
      %v1825 = vpack.c.bf16 %v1820, %v1820
      %v1830 = vunpack.c.l.b16 %v1023
      %v1831 = vunpack.c.l.b16 %v1024
      %v1832 = vunpack.c.l.b16 %v1025
      %v1833 = vunpack.c.l.b16 %v1026
      %v1834 = vpack.c.b16 %v1831, %v1830
      %v1835 = vpack.c.b16 %v1833, %v1832
      %v1839 = vsel %vm1609, %v1825, 0
      %1841 = vmatprep.subr.bf16.mxu0 0
      %1842 = vmatpush1.bf16.msra.mxu0 %v1834
      %1843 = vmatprep.subr.bf16.mxu0 0
      %1844 = vmatpush1.bf16.msra.mxu0 %v1835
      %1845 = vmatprep.subr.bf16.mxu0 0
      %1846 = vmatpush1.bf16.msra.mxu0 0
      %1847 = vmatprep.subr.bf16.mxu0 0
      %1848 = vmatpush1.bf16.msra.mxu0 0
      %1849 = vmatprep.subr.bf16.mxu0 0
      %1850 = vmatpush1.bf16.msra.mxu0 0
      %1851 = vmatprep.subr.bf16.mxu0 0
      %1852 = vmatpush1.bf16.msra.mxu0 0
      %1853 = vmatprep.subr.bf16.mxu0 0
      %1854 = vmatpush1.bf16.msra.mxu0 0
      %1855 = vmatprep.subr.bf16.mxu0 0
      %1856 = vmatpush1.bf16.msra.mxu0 0
      %1857 = vmatprep.subr.bf16.mxu0 0
      %1858 = vmatpush1.bf16.msra.mxu0 0
      %1859 = vmatprep.subr.bf16.mxu0 0
      %1860 = vmatpush1.bf16.msra.mxu0 0
      %1861 = vmatprep.subr.bf16.mxu0 0
      %1862 = vmatpush1.bf16.msra.mxu0 0
      %1863 = vmatprep.subr.bf16.mxu0 0
      %1864 = vmatpush1.bf16.msra.mxu0 0
      %1865 = vmatprep.subr.bf16.mxu0 0
      %1866 = vmatpush1.bf16.msra.mxu0 0
      %1867 = vmatprep.subr.bf16.mxu0 0
      %1868 = vmatpush1.bf16.msra.mxu0 0
      %1869 = vmatprep.subr.bf16.mxu0 0
      %1870 = vmatpush1.bf16.msra.mxu0 0
      %1871 = vmatprep.subr.bf16.mxu0 0
      %1872 = vmatpush1.bf16.msra.mxu0 0
      %1873 = vmatprep.mubr.bf16.mxu0 0
      %1874 = vmatmul.mubr.bf16.gmra.mrb[0].mxu0 %v1839
      %v1875 = vpop.f32.mrb[0].mxu0
      %v1876 = vadd.f32 0.0, %v1875
      %v1877 = vpop.f32.mrb[0].mxu0
      %v1878 = vpop.f32.mrb[0].mxu0
      %v1879 = vpop.f32.mrb[0].mxu0
      %1880 = vdwg.mxu0
      %v1885 = vunpack.c.l.b16 %v1019
      %v1886 = vunpack.c.l.b16 %v1020
      %v1887 = vunpack.c.l.b16 %v1021
      %v1888 = vunpack.c.l.b16 %v1022
      %v1889 = vpack.c.b16 %v1886, %v1885
      %v1890 = vpack.c.b16 %v1888, %v1887
      %v1894 = vsel %vm1609, %v1715, 0
      %1896 = vmatprep.subr.bf16.mxu0 0
      %1897 = vmatpush1.bf16.msra.mxu0 %v1889
      %1898 = vmatprep.subr.bf16.mxu0 0
      %1899 = vmatpush1.bf16.msra.mxu0 %v1890
      %1900 = vmatprep.subr.bf16.mxu0 0
      %1901 = vmatpush1.bf16.msra.mxu0 0
      %1902 = vmatprep.subr.bf16.mxu0 0
      %1903 = vmatpush1.bf16.msra.mxu0 0
      %1904 = vmatprep.subr.bf16.mxu0 0
      %1905 = vmatpush1.bf16.msra.mxu0 0
      %1906 = vmatprep.subr.bf16.mxu0 0
      %1907 = vmatpush1.bf16.msra.mxu0 0
      %1908 = vmatprep.subr.bf16.mxu0 0
      %1909 = vmatpush1.bf16.msra.mxu0 0
      %1910 = vmatprep.subr.bf16.mxu0 0
      %1911 = vmatpush1.bf16.msra.mxu0 0
      %1912 = vmatprep.subr.bf16.mxu0 0
      %1913 = vmatpush1.bf16.msra.mxu0 0
      %1914 = vmatprep.subr.bf16.mxu0 0
      %1915 = vmatpush1.bf16.msra.mxu0 0
      %1916 = vmatprep.subr.bf16.mxu0 0
      %1917 = vmatpush1.bf16.msra.mxu0 0
      %1918 = vmatprep.subr.bf16.mxu0 0
      %1919 = vmatpush1.bf16.msra.mxu0 0
      %1920 = vmatprep.subr.bf16.mxu0 0
      %1921 = vmatpush1.bf16.msra.mxu0 0
      %1922 = vmatprep.subr.bf16.mxu0 0
      %1923 = vmatpush1.bf16.msra.mxu0 0
      %1924 = vmatprep.subr.bf16.mxu0 0
      %1925 = vmatpush1.bf16.msra.mxu0 0
      %1926 = vmatprep.subr.bf16.mxu0 0
      %1927 = vmatpush1.bf16.msra.mxu0 0
      %1928 = vmatprep.mubr.bf16.mxu0 0
      %1929 = vmatmul.mubr.bf16.gmra.mrb[0].mxu0 %v1894
      %v1930 = vpop.f32.mrb[0].mxu0
      %v1931 = vadd.f32 %v1876, %v1930
      %v1932 = vpop.f32.mrb[0].mxu0
      %v1933 = vpop.f32.mrb[0].mxu0
      %v1934 = vpop.f32.mrb[0].mxu0
      %1935 = vdwg.mxu0
      %v1936 = vadd.f32 %v1423, %v1931
      %v1938 = vlaneseq
      %v1939 = vshrl.u32 %v1938, 7
      %v1940 = vsub.s32 0, %v1939
      %v1941 = vrot.slane %v1027, %v1940
      %v1943 = vadd.f32 %v1936, %v1941
      %v1944 = vsel %vm1145, %v1943, 0.0
      %1945 = vadd.xlane.f32.xlu0 %v1944
      %v1946 = vpop.xlane.xlu0 %1945
      %v1947 = vmul.f32 %v1946, %v1152
      %v1948 = vsub.f32 %v1943, %v1947
      %v1949 = vmul.f32 %v1948, %v1948
      %v1950 = vsel %vm1145, %v1949, 0.0
      %1951 = vadd.xlane.f32.xlu0 %v1950
      %v1952 = vpop.xlane.xlu0 %1951
      %v1953 = vmul.f32 %v1952, %v1152
      %v1954 = vadd.f32 %v1953, 1e-05
      %v1955 = vrsqrt.pop %v1954
      %v1956 = vmul.f32 %v1948, %v1955
      %v1958 = vlaneseq
      %v1959 = vshrl.u32 %v1958, 7
      %v1960 = vsub.s32 0, %v1959
      %v1961 = vrot.slane %v1028, %v1960
      %v1963 = vmul.f32 %v1956, %v1961
      %v1965 = vlaneseq
      %v1966 = vshrl.u32 %v1965, 7
      %v1967 = vsub.s32 0, %v1966
      %v1968 = vrot.slane %v1029, %v1967
      %v1970 = vadd.f32 %v1963, %v1968
      %v1971 = vpack.c.bf16 %v1970, %v1970
      %v1973 = vlaneseq
      %v1974 = vshrl.u32 %v1973, 7
      %v1975 = vsub.s32 0, %v1974
      %v1976 = vrot.slane %v1038, %v1975
      %v1977 = vlaneseq
      %v1978 = vshrl.u32 %v1977, 7
      %v1979 = vsub.s32 1, %v1978
      %v1980 = vrot.slane %v1038, %v1979
      %v1991 = vunpack.c.l.b16 %v1030
      %v1992 = vunpack.c.h.b16 %v1030
      %v1993 = vunpack.c.l.b16 %v1031
      %v1994 = vunpack.c.h.b16 %v1031
      %v1995 = vunpack.c.l.b16 %v1032
      %v1996 = vunpack.c.h.b16 %v1032
      %v1997 = vunpack.c.l.b16 %v1033
      %v1998 = vunpack.c.h.b16 %v1033
      %v1999 = vunpack.c.l.b16 %v1034
      %v2000 = vunpack.c.h.b16 %v1034
      %v2001 = vunpack.c.l.b16 %v1035
      %v2002 = vunpack.c.h.b16 %v1035
      %v2003 = vunpack.c.l.b16 %v1036
      %v2004 = vunpack.c.h.b16 %v1036
      %v2005 = vunpack.c.l.b16 %v1037
      %v2006 = vunpack.c.h.b16 %v1037
      %v2007 = vpack.c.b16 %v1993, %v1991
      %v2008 = vpack.c.b16 %v1994, %v1992
      %v2009 = vpack.c.b16 %v1997, %v1995
      %v2010 = vpack.c.b16 %v1998, %v1996
      %v2011 = vpack.c.b16 %v2001, %v1999
      %v2012 = vpack.c.b16 %v2002, %v2000
      %v2013 = vpack.c.b16 %v2005, %v2003
      %v2014 = vpack.c.b16 %v2006, %v2004
      %v2024 = vsel %vm1145, %v1971, 0
      %2026 = vmatprep.subr.bf16.mxu0 %v2008
      %2027 = vmatpush1.bf16.msra.mxu0 %v2007
      %2028 = vmatprep.subr.bf16.mxu0 %v2010
      %2029 = vmatpush1.bf16.msra.mxu0 %v2009
      %2030 = vmatprep.subr.bf16.mxu0 %v2012
      %2031 = vmatpush1.bf16.msra.mxu0 %v2011
      %2032 = vmatprep.subr.bf16.mxu0 %v2014
      %2033 = vmatpush1.bf16.msra.mxu0 %v2013
      %2034 = vmatprep.subr.bf16.mxu0 0
      %2035 = vmatpush1.bf16.msra.mxu0 0
      %2036 = vmatprep.subr.bf16.mxu0 0
      %2037 = vmatpush1.bf16.msra.mxu0 0
      %2038 = vmatprep.subr.bf16.mxu0 0
      %2039 = vmatpush1.bf16.msra.mxu0 0
      %2040 = vmatprep.subr.bf16.mxu0 0
      %2041 = vmatpush1.bf16.msra.mxu0 0
      %2042 = vmatprep.subr.bf16.mxu0 0
      %2043 = vmatpush1.bf16.msra.mxu0 0
      %2044 = vmatprep.subr.bf16.mxu0 0
      %2045 = vmatpush1.bf16.msra.mxu0 0
      %2046 = vmatprep.subr.bf16.mxu0 0
      %2047 = vmatpush1.bf16.msra.mxu0 0
      %2048 = vmatprep.subr.bf16.mxu0 0
      %2049 = vmatpush1.bf16.msra.mxu0 0
      %2050 = vmatprep.subr.bf16.mxu0 0
      %2051 = vmatpush1.bf16.msra.mxu0 0
      %2052 = vmatprep.subr.bf16.mxu0 0
      %2053 = vmatpush1.bf16.msra.mxu0 0
      %2054 = vmatprep.subr.bf16.mxu0 0
      %2055 = vmatpush1.bf16.msra.mxu0 0
      %2056 = vmatprep.subr.bf16.mxu0 0
      %2057 = vmatpush1.bf16.msra.mxu0 0
      %2058 = vmatprep.mubr.bf16.mxu0 0
      %2059 = vmatmul.mubr.bf16.gmra.mrb[0].mxu0 %v2024
      %v2060 = vpop.f32.mrb[0].mxu0
      %v2061 = vadd.f32 %v1976, %v2060
      %v2062 = vpop.f32.mrb[0].mxu0
      %v2063 = vadd.f32 %v1980, %v2062
      %v2064 = vpop.f32.mrb[0].mxu0
      %v2065 = vpop.f32.mrb[0].mxu0
      %2066 = vdwg.mxu0
      %v2067 = vmul.f32 %v2061, %v2061
      %v2068 = vmul.f32 %v2063, %v2063
      %v2069 = vmul.f32 %v2061, %v2067
      %v2070 = vmul.f32 %v2063, %v2068
      %v2071 = vmul.f32 %v2069, 0.044715
      %v2072 = vmul.f32 %v2070, 0.044715
      %v2073 = vadd.f32 %v2061, %v2071
      %v2074 = vadd.f32 %v2063, %v2072
      %v2075 = vmul.f32 %v2073, 0.7978846
      %v2076 = vmul.f32 %v2074, 0.7978846
      %v2077 = vtanh.pop %v2075
      %v2078 = vtanh.pop %v2076
      %v2079 = vadd.f32 %v2077, 1.0
      %v2080 = vadd.f32 %v2078, 1.0
      %v2081 = vmul.f32 %v2079, 0.5
      %v2082 = vmul.f32 %v2080, 0.5
      %v2083 = vmul.f32 %v2061, %v2081
      %v2084 = vmul.f32 %v2063, %v2082
      %v2085 = vpack.c.bf16 %v2083, %v2083
      %v2086 = vpack.c.bf16 %v2084, %v2084
      %v2119 = vunpack.c.l.b16 %v1039
      %v2120 = vunpack.c.l.b16 %v1040
      %v2121 = vunpack.c.l.b16 %v1041
      %v2122 = vunpack.c.l.b16 %v1042
      %v2123 = vunpack.c.l.b16 %v1043
      %v2124 = vunpack.c.l.b16 %v1044
      %v2125 = vunpack.c.l.b16 %v1045
      %v2126 = vunpack.c.l.b16 %v1046
      %v2127 = vunpack.c.l.b16 %v1047
      %v2128 = vunpack.c.l.b16 %v1048
      %v2129 = vunpack.c.l.b16 %v1049
      %v2130 = vunpack.c.l.b16 %v1050
      %v2131 = vunpack.c.l.b16 %v1051
      %v2132 = vunpack.c.l.b16 %v1052
      %v2133 = vunpack.c.l.b16 %v1053
      %v2134 = vunpack.c.l.b16 %v1054
      %v2135 = vunpack.c.l.b16 %v1055
      %v2136 = vunpack.c.l.b16 %v1056
      %v2137 = vunpack.c.l.b16 %v1057
      %v2138 = vunpack.c.l.b16 %v1058
      %v2139 = vunpack.c.l.b16 %v1059
      %v2140 = vunpack.c.l.b16 %v1060
      %v2141 = vunpack.c.l.b16 %v1061
      %v2142 = vunpack.c.l.b16 %v1062
      %v2143 = vunpack.c.l.b16 %v1063
      %v2144 = vunpack.c.l.b16 %v1064
      %v2145 = vunpack.c.l.b16 %v1065
      %v2146 = vunpack.c.l.b16 %v1066
      %v2147 = vunpack.c.l.b16 %v1067
      %v2148 = vunpack.c.l.b16 %v1068
      %v2149 = vunpack.c.l.b16 %v1069
      %v2150 = vunpack.c.l.b16 %v1070
      %v2151 = vpack.c.b16 %v2120, %v2119
      %v2152 = vpack.c.b16 %v2122, %v2121
      %v2153 = vpack.c.b16 %v2124, %v2123
      %v2154 = vpack.c.b16 %v2126, %v2125
      %v2155 = vpack.c.b16 %v2128, %v2127
      %v2156 = vpack.c.b16 %v2130, %v2129
      %v2157 = vpack.c.b16 %v2132, %v2131
      %v2158 = vpack.c.b16 %v2134, %v2133
      %v2159 = vpack.c.b16 %v2136, %v2135
      %v2160 = vpack.c.b16 %v2138, %v2137
      %v2161 = vpack.c.b16 %v2140, %v2139
      %v2162 = vpack.c.b16 %v2142, %v2141
      %v2163 = vpack.c.b16 %v2144, %v2143
      %v2164 = vpack.c.b16 %v2146, %v2145
      %v2165 = vpack.c.b16 %v2148, %v2147
      %v2166 = vpack.c.b16 %v2150, %v2149
      %2183 = vmatprep.subr.bf16.mxu0 0
      %2184 = vmatpush1.bf16.msra.mxu0 %v2151
      %2185 = vmatprep.subr.bf16.mxu0 0
      %2186 = vmatpush1.bf16.msra.mxu0 %v2152
      %2187 = vmatprep.subr.bf16.mxu0 0
      %2188 = vmatpush1.bf16.msra.mxu0 %v2153
      %2189 = vmatprep.subr.bf16.mxu0 0
      %2190 = vmatpush1.bf16.msra.mxu0 %v2154
      %2191 = vmatprep.subr.bf16.mxu0 0
      %2192 = vmatpush1.bf16.msra.mxu0 %v2155
      %2193 = vmatprep.subr.bf16.mxu0 0
      %2194 = vmatpush1.bf16.msra.mxu0 %v2156
      %2195 = vmatprep.subr.bf16.mxu0 0
      %2196 = vmatpush1.bf16.msra.mxu0 %v2157
      %2197 = vmatprep.subr.bf16.mxu0 0
      %2198 = vmatpush1.bf16.msra.mxu0 %v2158
      %2199 = vmatprep.subr.bf16.mxu0 0
      %2200 = vmatpush1.bf16.msra.mxu0 %v2159
      %2201 = vmatprep.subr.bf16.mxu0 0
      %2202 = vmatpush1.bf16.msra.mxu0 %v2160
      %2203 = vmatprep.subr.bf16.mxu0 0
      %2204 = vmatpush1.bf16.msra.mxu0 %v2161
      %2205 = vmatprep.subr.bf16.mxu0 0
      %2206 = vmatpush1.bf16.msra.mxu0 %v2162
      %2207 = vmatprep.subr.bf16.mxu0 0
      %2208 = vmatpush1.bf16.msra.mxu0 %v2163
      %2209 = vmatprep.subr.bf16.mxu0 0
      %2210 = vmatpush1.bf16.msra.mxu0 %v2164
      %2211 = vmatprep.subr.bf16.mxu0 0
      %2212 = vmatpush1.bf16.msra.mxu0 %v2165
      %2213 = vmatprep.subr.bf16.mxu0 0
      %2214 = vmatpush1.bf16.msra.mxu0 %v2166
      %2215 = vmatprep.mubr.bf16.mxu0 %v2086
      %2216 = vmatmul.mubr.bf16.gmra.mrb[0].mxu0 %v2085
      %v2217 = vpop.f32.mrb[0].mxu0
      %v2218 = vadd.f32 0.0, %v2217
      %v2219 = vpop.f32.mrb[0].mxu0
      %v2220 = vpop.f32.mrb[0].mxu0
      %v2221 = vpop.f32.mrb[0].mxu0
      %2222 = vdwg.mxu0
      %v2223 = vadd.f32 %v1943, %v2218
      %v2225 = vlaneseq
      %v2226 = vshrl.u32 %v2225, 7
      %v2227 = vsub.s32 0, %v2226
      %v2228 = vrot.slane %v1071, %v2227
      %v2230 = vadd.f32 %v2223, %v2228
      %v2231 = vsel %vm1145, %v2230, 0.0
      %2232 = vadd.xlane.f32.xlu0 %v2231
      %v2233 = vpop.xlane.xlu0 %2232
      %v2234 = vmul.f32 %v2233, %v1152
      %v2235 = vsub.f32 %v2230, %v2234
      %v2236 = vmul.f32 %v2235, %v2235
      %v2237 = vsel %vm1145, %v2236, 0.0
      %2238 = vadd.xlane.f32.xlu0 %v2237
      %v2239 = vpop.xlane.xlu0 %2238
      %v2240 = vmul.f32 %v2239, %v1152
      %v2241 = vadd.f32 %v2240, 1e-05
      %v2242 = vrsqrt.pop %v2241
      %v2243 = vmul.f32 %v2235, %v2242
      %v2245 = vlaneseq
      %v2246 = vshrl.u32 %v2245, 7
      %v2247 = vsub.s32 0, %v2246
      %v2248 = vrot.slane %v1072, %v2247
      %v2250 = vmul.f32 %v1452, %v2248
      %v2251 = vmul.f32 %v1453, %v2248
      %v2252 = vmul.f32 %v2243, %v2248
      %v2254 = vlaneseq
      %v2255 = vshrl.u32 %v2254, 7
      %v2256 = vsub.s32 0, %v2255
      %v2257 = vrot.slane %v1073, %v2256
      %v2259 = vadd.f32 %v2250, %v2257
      %v2260 = vadd.f32 %v2251, %v2257
      %v2261 = vadd.f32 %v2252, %v2257
      %v2262 = vpack.c.bf16 %v2260, %v2259
      %v2263 = vpack.c.bf16 %v2261, %v2261
      %v2272 = vunpack.c.l.b16 %v1082
      %v2273 = vunpack.c.l.b16 %v1083
      %v2274 = vunpack.c.l.b16 %v1084
      %v2275 = vunpack.c.l.b16 %v1085
      %v2276 = vunpack.c.l.b16 %v1086
      %v2277 = vunpack.c.l.b16 %v1087
      %v2278 = vunpack.c.l.b16 %v1088
      %v2279 = vunpack.c.l.b16 %v1089
      %v2280 = vpack.c.b16 %v2273, %v2272
      %v2281 = vpack.c.b16 %v2275, %v2274
      %v2282 = vpack.c.b16 %v2277, %v2276
      %v2283 = vpack.c.b16 %v2279, %v2278
      %v2289 = vsel %vm1145, %v2262, 0
      %v2292 = vsel %vm1145, %v2263, 0
      %2294 = vmatprep.subr.bf16.mxu0 0
      %2295 = vmatpush1.bf16.msra.mxu0 %v2280
      %2296 = vmatprep.subr.bf16.mxu0 0
      %2297 = vmatpush1.bf16.msra.mxu0 %v2281
      %2298 = vmatprep.subr.bf16.mxu0 0
      %2299 = vmatpush1.bf16.msra.mxu0 %v2282
      %2300 = vmatprep.subr.bf16.mxu0 0
      %2301 = vmatpush1.bf16.msra.mxu0 %v2283
      %2302 = vmatprep.subr.bf16.mxu0 0
      %2303 = vmatpush1.bf16.msra.mxu0 0
      %2304 = vmatprep.subr.bf16.mxu0 0
      %2305 = vmatpush1.bf16.msra.mxu0 0
      %2306 = vmatprep.subr.bf16.mxu0 0
      %2307 = vmatpush1.bf16.msra.mxu0 0
      %2308 = vmatprep.subr.bf16.mxu0 0
      %2309 = vmatpush1.bf16.msra.mxu0 0
      %2310 = vmatprep.subr.bf16.mxu0 0
      %2311 = vmatpush1.bf16.msra.mxu0 0
      %2312 = vmatprep.subr.bf16.mxu0 0
      %2313 = vmatpush1.bf16.msra.mxu0 0
      %2314 = vmatprep.subr.bf16.mxu0 0
      %2315 = vmatpush1.bf16.msra.mxu0 0
      %2316 = vmatprep.subr.bf16.mxu0 0
      %2317 = vmatpush1.bf16.msra.mxu0 0
      %2318 = vmatprep.subr.bf16.mxu0 0
      %2319 = vmatpush1.bf16.msra.mxu0 0
      %2320 = vmatprep.subr.bf16.mxu0 0
      %2321 = vmatpush1.bf16.msra.mxu0 0
      %2322 = vmatprep.subr.bf16.mxu0 0
      %2323 = vmatpush1.bf16.msra.mxu0 0
      %2324 = vmatprep.subr.bf16.mxu0 0
      %2325 = vmatpush1.bf16.msra.mxu0 0
      %2326 = vmatprep.mubr.bf16.mxu0 0
      %2327 = vmatmul.mubr.bf16.gmra.mrb[0].mxu0 %v2289
      %v2328 = vpop.f32.mrb[0].mxu0
      %v2329 = vadd.f32 0.0, %v2328
      %v2330 = vpop.f32.mrb[0].mxu0
      %v2331 = vpop.f32.mrb[0].mxu0
      %v2332 = vadd.f32 0.0, %v2331
      %v2333 = vpop.f32.mrb[0].mxu0
      %2334 = vmatprep.mubr.bf16.mxu0 0
      %2335 = vmatmul.mubr.bf16.gmra.mrb[0].mxu0 %v2292
      %v2336 = vpop.f32.mrb[0].mxu0
      %v2337 = vadd.f32 0.0, %v2336
      %v2338 = vpop.f32.mrb[0].mxu0
      %v2339 = vpop.f32.mrb[0].mxu0
      %v2340 = vpop.f32.mrb[0].mxu0
      %2341 = vdwg.mxu0
      %v2342 = vpack.c.bf16 %v2230, %v2230
      %v2351 = vunpack.c.l.b16 %v1074
      %v2352 = vunpack.c.l.b16 %v1075
      %v2353 = vunpack.c.l.b16 %v1076
      %v2354 = vunpack.c.l.b16 %v1077
      %v2355 = vunpack.c.l.b16 %v1078
      %v2356 = vunpack.c.l.b16 %v1079
      %v2357 = vunpack.c.l.b16 %v1080
      %v2358 = vunpack.c.l.b16 %v1081
      %v2359 = vpack.c.b16 %v2352, %v2351
      %v2360 = vpack.c.b16 %v2354, %v2353
      %v2361 = vpack.c.b16 %v2356, %v2355
      %v2362 = vpack.c.b16 %v2358, %v2357
      %v2368 = vsel %vm1145, %v2342, 0
      %2370 = vmatprep.subr.bf16.mxu0 0
      %2371 = vmatpush1.bf16.msra.mxu0 %v2359
      %2372 = vmatprep.subr.bf16.mxu0 0
      %2373 = vmatpush1.bf16.msra.mxu0 %v2360
      %2374 = vmatprep.subr.bf16.mxu0 0
      %2375 = vmatpush1.bf16.msra.mxu0 %v2361
      %2376 = vmatprep.subr.bf16.mxu0 0
      %2377 = vmatpush1.bf16.msra.mxu0 %v2362
      %2378 = vmatprep.subr.bf16.mxu0 0
      %2379 = vmatpush1.bf16.msra.mxu0 0
      %2380 = vmatprep.subr.bf16.mxu0 0
      %2381 = vmatpush1.bf16.msra.mxu0 0
      %2382 = vmatprep.subr.bf16.mxu0 0
      %2383 = vmatpush1.bf16.msra.mxu0 0
      %2384 = vmatprep.subr.bf16.mxu0 0
      %2385 = vmatpush1.bf16.msra.mxu0 0
      %2386 = vmatprep.subr.bf16.mxu0 0
      %2387 = vmatpush1.bf16.msra.mxu0 0
      %2388 = vmatprep.subr.bf16.mxu0 0
      %2389 = vmatpush1.bf16.msra.mxu0 0
      %2390 = vmatprep.subr.bf16.mxu0 0
      %2391 = vmatpush1.bf16.msra.mxu0 0
      %2392 = vmatprep.subr.bf16.mxu0 0
      %2393 = vmatpush1.bf16.msra.mxu0 0
      %2394 = vmatprep.subr.bf16.mxu0 0
      %2395 = vmatpush1.bf16.msra.mxu0 0
      %2396 = vmatprep.subr.bf16.mxu0 0
      %2397 = vmatpush1.bf16.msra.mxu0 0
      %2398 = vmatprep.subr.bf16.mxu0 0
      %2399 = vmatpush1.bf16.msra.mxu0 0
      %2400 = vmatprep.subr.bf16.mxu0 0
      %2401 = vmatpush1.bf16.msra.mxu0 0
      %2402 = vmatprep.mubr.bf16.mxu0 0
      %2403 = vmatmul.mubr.bf16.gmra.mrb[0].mxu0 %v2368
      %v2404 = vpop.f32.mrb[0].mxu0
      %v2405 = vadd.f32 0.0, %v2404
      %v2406 = vpop.f32.mrb[0].mxu0
      %v2407 = vpop.f32.mrb[0].mxu0
      %v2408 = vpop.f32.mrb[0].mxu0
      %2409 = vdwg.mxu0
      %v2410 = vpack.c.bf16 %v2405, %v2405
      %v2411 = vpack.c.bf16 %v2332, %v2329
      %v2412 = vpack.c.bf16 %v2337, %v2337
      %v2414 = vsel %vm1609, %v2410, 0
      %v2417 = vsel %vm1609, %v2411, 0
      %v2420 = vsel %vm1609, %v2412, 0
      %2422 = vmatprep.subr.bf16.mxu0 0
      %2423 = vmatpush1.bf16.xpose.msra.mxu0 %v2417
      %2424 = vmatprep.subr.bf16.mxu0 0
      %2425 = vmatpush1.bf16.xpose.msra.mxu0 %v2420
      %2426 = vmatprep.subr.bf16.mxu0 0
      %2427 = vmatpush1.bf16.xpose.msra.mxu0 0
      %2428 = vmatprep.subr.bf16.mxu0 0
      %2429 = vmatpush1.bf16.xpose.msra.mxu0 0
      %2430 = vmatprep.subr.bf16.mxu0 0
      %2431 = vmatpush1.bf16.xpose.msra.mxu0 0
      %2432 = vmatprep.subr.bf16.mxu0 0
      %2433 = vmatpush1.bf16.xpose.msra.mxu0 0
      %2434 = vmatprep.subr.bf16.mxu0 0
      %2435 = vmatpush1.bf16.xpose.msra.mxu0 0
      %2436 = vmatprep.subr.bf16.mxu0 0
      %2437 = vmatpush1.bf16.xpose.msra.mxu0 0
      %2438 = vmatprep.subr.bf16.mxu0 0
      %2439 = vmatpush1.bf16.xpose.msra.mxu0 0
      %2440 = vmatprep.subr.bf16.mxu0 0
      %2441 = vmatpush1.bf16.xpose.msra.mxu0 0
      %2442 = vmatprep.subr.bf16.mxu0 0
      %2443 = vmatpush1.bf16.xpose.msra.mxu0 0
      %2444 = vmatprep.subr.bf16.mxu0 0
      %2445 = vmatpush1.bf16.xpose.msra.mxu0 0
      %2446 = vmatprep.subr.bf16.mxu0 0
      %2447 = vmatpush1.bf16.xpose.msra.mxu0 0
      %2448 = vmatprep.subr.bf16.mxu0 0
      %2449 = vmatpush1.bf16.xpose.msra.mxu0 0
      %2450 = vmatprep.subr.bf16.mxu0 0
      %2451 = vmatpush1.bf16.xpose.msra.mxu0 0
      %2452 = vmatprep.subr.bf16.mxu0 0
      %2453 = vmatpush1.bf16.xpose.msra.mxu0 0
      %2454 = vmatprep.mubr.bf16.mxu0 0
      %2455 = vmatmul.mubr.bf16.gmra.mrb[0].mxu0 %v2414
      %v2456 = vpop.f32.mrb[0].mxu0
      %v2457 = vadd.f32 0.0, %v2456
      %v2458 = vpop.f32.mrb[0].mxu0
      %v2459 = vpop.f32.mrb[0].mxu0
      %v2460 = vpop.f32.mrb[0].mxu0
      %2461 = vdwg.mxu0
      %vm2462 = vcmask 195584
      %v2463 = vsel %vm2462, %v2457, -inf
      %2464 = vmax.xlane.f32.xlu0 %v2463
      %v2465 = vpop.xlane.xlu0 %2464
      %v2466 = vsub.f32 %v2457, %v2465
      %v2467 = vmul.f32 %v2466, 1.442695
      %v2468 = vpow.pop %v2467
      %v2469 = vsel %vm2462, %v2468, 0.0
      %2470 = vadd.xlane.f32.xlu0 %v2469
      %v2471 = vpop.xlane.xlu0 %2470
      %v2472 = vrcp.pop %v2471
      %v2473 = vmul.f32 %v2468, %v2472
      %v2474 = vpack.c.bf16 %v2473, %v2473
      %2477 = vrot.lane.b32.xlu0 %v2411, 64
      %v2478 = vpop.permute.xlu0 %2477
      %2479 = vrot.lane.b32.xlu0 %v2412, 64
      %v2480 = vpop.permute.xlu0 %2479
      %v2483 = vsel %vm2462, %v2474, 0
      %vm2485 = vcmask 1043456
      %v2487 = vsel %vm2485, %v2480, 0
      %2489 = vmatprep.subr.bf16.mxu0 0
      %2490 = vmatpush1.bf16.msra.mxu0 %v2478
      %2491 = vmatprep.subr.bf16.mxu0 0
      %2492 = vmatpush1.bf16.msra.mxu0 %v2487
      %2493 = vmatprep.subr.bf16.mxu0 0
      %2494 = vmatpush1.bf16.msra.mxu0 0
      %2495 = vmatprep.subr.bf16.mxu0 0
      %2496 = vmatpush1.bf16.msra.mxu0 0
      %2497 = vmatprep.subr.bf16.mxu0 0
      %2498 = vmatpush1.bf16.msra.mxu0 0
      %2499 = vmatprep.subr.bf16.mxu0 0
      %2500 = vmatpush1.bf16.msra.mxu0 0
      %2501 = vmatprep.subr.bf16.mxu0 0
      %2502 = vmatpush1.bf16.msra.mxu0 0
      %2503 = vmatprep.subr.bf16.mxu0 0
      %2504 = vmatpush1.bf16.msra.mxu0 0
      %2505 = vmatprep.subr.bf16.mxu0 0
      %2506 = vmatpush1.bf16.msra.mxu0 0
      %2507 = vmatprep.subr.bf16.mxu0 0
      %2508 = vmatpush1.bf16.msra.mxu0 0
      %2509 = vmatprep.subr.bf16.mxu0 0
      %2510 = vmatpush1.bf16.msra.mxu0 0
      %2511 = vmatprep.subr.bf16.mxu0 0
      %2512 = vmatpush1.bf16.msra.mxu0 0
      %2513 = vmatprep.subr.bf16.mxu0 0
      %2514 = vmatpush1.bf16.msra.mxu0 0
      %2515 = vmatprep.subr.bf16.mxu0 0
      %2516 = vmatpush1.bf16.msra.mxu0 0
      %2517 = vmatprep.subr.bf16.mxu0 0
      %2518 = vmatpush1.bf16.msra.mxu0 0
      %2519 = vmatprep.subr.bf16.mxu0 0
      %2520 = vmatpush1.bf16.msra.mxu0 0
      %2521 = vmatprep.mubr.bf16.mxu0 0
      %2522 = vmatmul.mubr.bf16.gmra.mrb[0].mxu0 %v2483
      %v2523 = vpop.f32.mrb[0].mxu0
      %v2524 = vadd.f32 0.0, %v2523
      %v2525 = vpop.f32.mrb[0].mxu0
      %v2526 = vpop.f32.mrb[0].mxu0
      %v2527 = vpop.f32.mrb[0].mxu0
      %2528 = vdwg.mxu0
      %v2529 = vpack.c.bf16 %v2524, %v2524
      %2531 = vrot.lane.b32.xlu0 %v2410, 96
      %v2532 = vpop.permute.xlu0 %2531
      %2533 = vrot.lane.b32.xlu0 %v2411, 96
      %v2534 = vpop.permute.xlu0 %2533
      %2535 = vrot.lane.b32.xlu0 %v2412, 96
      %v2536 = vpop.permute.xlu0 %2535
      %v2538 = vsel %vm1609, %v2532, 0
      %v2541 = vsel %vm1609, %v2534, 0
      %v2544 = vsel %vm1609, %v2536, 0
      %2546 = vmatprep.subr.bf16.mxu0 0
      %2547 = vmatpush1.bf16.xpose.msra.mxu0 %v2541
      %2548 = vmatprep.subr.bf16.mxu0 0
      %2549 = vmatpush1.bf16.xpose.msra.mxu0 %v2544
      %2550 = vmatprep.subr.bf16.mxu0 0
      %2551 = vmatpush1.bf16.xpose.msra.mxu0 0
      %2552 = vmatprep.subr.bf16.mxu0 0
      %2553 = vmatpush1.bf16.xpose.msra.mxu0 0
      %2554 = vmatprep.subr.bf16.mxu0 0
      %2555 = vmatpush1.bf16.xpose.msra.mxu0 0
      %2556 = vmatprep.subr.bf16.mxu0 0
      %2557 = vmatpush1.bf16.xpose.msra.mxu0 0
      %2558 = vmatprep.subr.bf16.mxu0 0
      %2559 = vmatpush1.bf16.xpose.msra.mxu0 0
      %2560 = vmatprep.subr.bf16.mxu0 0
      %2561 = vmatpush1.bf16.xpose.msra.mxu0 0
      %2562 = vmatprep.subr.bf16.mxu0 0
      %2563 = vmatpush1.bf16.xpose.msra.mxu0 0
      %2564 = vmatprep.subr.bf16.mxu0 0
      %2565 = vmatpush1.bf16.xpose.msra.mxu0 0
      %2566 = vmatprep.subr.bf16.mxu0 0
      %2567 = vmatpush1.bf16.xpose.msra.mxu0 0
      %2568 = vmatprep.subr.bf16.mxu0 0
      %2569 = vmatpush1.bf16.xpose.msra.mxu0 0
      %2570 = vmatprep.subr.bf16.mxu0 0
      %2571 = vmatpush1.bf16.xpose.msra.mxu0 0
      %2572 = vmatprep.subr.bf16.mxu0 0
      %2573 = vmatpush1.bf16.xpose.msra.mxu0 0
      %2574 = vmatprep.subr.bf16.mxu0 0
      %2575 = vmatpush1.bf16.xpose.msra.mxu0 0
      %2576 = vmatprep.subr.bf16.mxu0 0
      %2577 = vmatpush1.bf16.xpose.msra.mxu0 0
      %2578 = vmatprep.mubr.bf16.mxu0 0
      %2579 = vmatmul.mubr.bf16.gmra.mrb[0].mxu0 %v2538
      %v2580 = vpop.f32.mrb[0].mxu0
      %v2581 = vadd.f32 0.0, %v2580
      %v2582 = vpop.f32.mrb[0].mxu0
      %v2583 = vpop.f32.mrb[0].mxu0
      %v2584 = vpop.f32.mrb[0].mxu0
      %2585 = vdwg.mxu0
      %v2586 = vsel %vm2462, %v2581, -inf
      %2587 = vmax.xlane.f32.xlu0 %v2586
      %v2588 = vpop.xlane.xlu0 %2587
      %v2589 = vsub.f32 %v2581, %v2588
      %v2590 = vmul.f32 %v2589, 1.442695
      %v2591 = vpow.pop %v2590
      %v2592 = vsel %vm2462, %v2591, 0.0
      %2593 = vadd.xlane.f32.xlu0 %v2592
      %v2594 = vpop.xlane.xlu0 %2593
      %v2595 = vrcp.pop %v2594
      %v2596 = vmul.f32 %v2591, %v2595
      %v2597 = vpack.c.bf16 %v2596, %v2596
      %2598 = vrot.lane.b32.xlu0 %v2411, 32
      %v2599 = vpop.permute.xlu0 %2598
      %2600 = vrot.lane.b32.xlu0 %v2412, 32
      %v2601 = vpop.permute.xlu0 %2600
      %v2604 = vsel %vm2462, %v2597, 0
      %v2607 = vsel %vm2485, %v2601, 0
      %2609 = vmatprep.subr.bf16.mxu0 0
      %2610 = vmatpush1.bf16.msra.mxu0 %v2599
      %2611 = vmatprep.subr.bf16.mxu0 0
      %2612 = vmatpush1.bf16.msra.mxu0 %v2607
      %2613 = vmatprep.subr.bf16.mxu0 0
      %2614 = vmatpush1.bf16.msra.mxu0 0
      %2615 = vmatprep.subr.bf16.mxu0 0
      %2616 = vmatpush1.bf16.msra.mxu0 0
      %2617 = vmatprep.subr.bf16.mxu0 0
      %2618 = vmatpush1.bf16.msra.mxu0 0
      %2619 = vmatprep.subr.bf16.mxu0 0
      %2620 = vmatpush1.bf16.msra.mxu0 0
      %2621 = vmatprep.subr.bf16.mxu0 0
      %2622 = vmatpush1.bf16.msra.mxu0 0
      %2623 = vmatprep.subr.bf16.mxu0 0
      %2624 = vmatpush1.bf16.msra.mxu0 0
      %2625 = vmatprep.subr.bf16.mxu0 0
      %2626 = vmatpush1.bf16.msra.mxu0 0
      %2627 = vmatprep.subr.bf16.mxu0 0
      %2628 = vmatpush1.bf16.msra.mxu0 0
      %2629 = vmatprep.subr.bf16.mxu0 0
      %2630 = vmatpush1.bf16.msra.mxu0 0
      %2631 = vmatprep.subr.bf16.mxu0 0
      %2632 = vmatpush1.bf16.msra.mxu0 0
      %2633 = vmatprep.subr.bf16.mxu0 0
      %2634 = vmatpush1.bf16.msra.mxu0 0
      %2635 = vmatprep.subr.bf16.mxu0 0
      %2636 = vmatpush1.bf16.msra.mxu0 0
      %2637 = vmatprep.subr.bf16.mxu0 0
      %2638 = vmatpush1.bf16.msra.mxu0 0
      %2639 = vmatprep.subr.bf16.mxu0 0
      %2640 = vmatpush1.bf16.msra.mxu0 0
      %2641 = vmatprep.mubr.bf16.mxu0 0
      %2642 = vmatmul.mubr.bf16.gmra.mrb[0].mxu0 %v2604
      %v2643 = vpop.f32.mrb[0].mxu0
      %v2644 = vadd.f32 0.0, %v2643
      %v2645 = vpop.f32.mrb[0].mxu0
      %v2646 = vpop.f32.mrb[0].mxu0
      %v2647 = vpop.f32.mrb[0].mxu0
      %2648 = vdwg.mxu0
      %v2649 = vpack.c.bf16 %v2644, %v2644
      %v2654 = vunpack.c.l.b16 %v1094
      %v2655 = vunpack.c.l.b16 %v1095
      %v2656 = vunpack.c.l.b16 %v1096
      %v2657 = vunpack.c.l.b16 %v1097
      %v2658 = vpack.c.b16 %v2655, %v2654
      %v2659 = vpack.c.b16 %v2657, %v2656
      %v2663 = vsel %vm1609, %v2649, 0
      %2665 = vmatprep.subr.bf16.mxu0 0
      %2666 = vmatpush1.bf16.msra.mxu0 %v2658
      %2667 = vmatprep.subr.bf16.mxu0 0
      %2668 = vmatpush1.bf16.msra.mxu0 %v2659
      %2669 = vmatprep.subr.bf16.mxu0 0
      %2670 = vmatpush1.bf16.msra.mxu0 0
      %2671 = vmatprep.subr.bf16.mxu0 0
      %2672 = vmatpush1.bf16.msra.mxu0 0
      %2673 = vmatprep.subr.bf16.mxu0 0
      %2674 = vmatpush1.bf16.msra.mxu0 0
      %2675 = vmatprep.subr.bf16.mxu0 0
      %2676 = vmatpush1.bf16.msra.mxu0 0
      %2677 = vmatprep.subr.bf16.mxu0 0
      %2678 = vmatpush1.bf16.msra.mxu0 0
      %2679 = vmatprep.subr.bf16.mxu0 0
      %2680 = vmatpush1.bf16.msra.mxu0 0
      %2681 = vmatprep.subr.bf16.mxu0 0
      %2682 = vmatpush1.bf16.msra.mxu0 0
      %2683 = vmatprep.subr.bf16.mxu0 0
      %2684 = vmatpush1.bf16.msra.mxu0 0
      %2685 = vmatprep.subr.bf16.mxu0 0
      %2686 = vmatpush1.bf16.msra.mxu0 0
      %2687 = vmatprep.subr.bf16.mxu0 0
      %2688 = vmatpush1.bf16.msra.mxu0 0
      %2689 = vmatprep.subr.bf16.mxu0 0
      %2690 = vmatpush1.bf16.msra.mxu0 0
      %2691 = vmatprep.subr.bf16.mxu0 0
      %2692 = vmatpush1.bf16.msra.mxu0 0
      %2693 = vmatprep.subr.bf16.mxu0 0
      %2694 = vmatpush1.bf16.msra.mxu0 0
      %2695 = vmatprep.subr.bf16.mxu0 0
      %2696 = vmatpush1.bf16.msra.mxu0 0
      %2697 = vmatprep.mubr.bf16.mxu0 0
      %2698 = vmatmul.mubr.bf16.gmra.mrb[0].mxu0 %v2663
      %v2699 = vpop.f32.mrb[0].mxu0
      %v2700 = vadd.f32 0.0, %v2699
      %v2701 = vpop.f32.mrb[0].mxu0
      %v2702 = vpop.f32.mrb[0].mxu0
      %v2703 = vpop.f32.mrb[0].mxu0
      %2704 = vdwg.mxu0
      %v2709 = vunpack.c.l.b16 %v1090
      %v2710 = vunpack.c.l.b16 %v1091
      %v2711 = vunpack.c.l.b16 %v1092
      %v2712 = vunpack.c.l.b16 %v1093
      %v2713 = vpack.c.b16 %v2710, %v2709
      %v2714 = vpack.c.b16 %v2712, %v2711
      %v2718 = vsel %vm1609, %v2529, 0
      %2720 = vmatprep.subr.bf16.mxu0 0
      %2721 = vmatpush1.bf16.msra.mxu0 %v2713
      %2722 = vmatprep.subr.bf16.mxu0 0
      %2723 = vmatpush1.bf16.msra.mxu0 %v2714
      %2724 = vmatprep.subr.bf16.mxu0 0
      %2725 = vmatpush1.bf16.msra.mxu0 0
      %2726 = vmatprep.subr.bf16.mxu0 0
      %2727 = vmatpush1.bf16.msra.mxu0 0
      %2728 = vmatprep.subr.bf16.mxu0 0
      %2729 = vmatpush1.bf16.msra.mxu0 0
      %2730 = vmatprep.subr.bf16.mxu0 0
      %2731 = vmatpush1.bf16.msra.mxu0 0
      %2732 = vmatprep.subr.bf16.mxu0 0
      %2733 = vmatpush1.bf16.msra.mxu0 0
      %2734 = vmatprep.subr.bf16.mxu0 0
      %2735 = vmatpush1.bf16.msra.mxu0 0
      %2736 = vmatprep.subr.bf16.mxu0 0
      %2737 = vmatpush1.bf16.msra.mxu0 0
      %2738 = vmatprep.subr.bf16.mxu0 0
      %2739 = vmatpush1.bf16.msra.mxu0 0
      %2740 = vmatprep.subr.bf16.mxu0 0
      %2741 = vmatpush1.bf16.msra.mxu0 0
      %2742 = vmatprep.subr.bf16.mxu0 0
      %2743 = vmatpush1.bf16.msra.mxu0 0
      %2744 = vmatprep.subr.bf16.mxu0 0
      %2745 = vmatpush1.bf16.msra.mxu0 0
      %2746 = vmatprep.subr.bf16.mxu0 0
      %2747 = vmatpush1.bf16.msra.mxu0 0
      %2748 = vmatprep.subr.bf16.mxu0 0
      %2749 = vmatpush1.bf16.msra.mxu0 0
      %2750 = vmatprep.subr.bf16.mxu0 0
      %2751 = vmatpush1.bf16.msra.mxu0 0
      %2752 = vmatprep.mubr.bf16.mxu0 0
      %2753 = vmatmul.mubr.bf16.gmra.mrb[0].mxu0 %v2718
      %v2754 = vpop.f32.mrb[0].mxu0
      %v2755 = vadd.f32 %v2700, %v2754
      %v2756 = vpop.f32.mrb[0].mxu0
      %v2757 = vpop.f32.mrb[0].mxu0
      %v2758 = vpop.f32.mrb[0].mxu0
      %2759 = vdwg.mxu0
      %v2760 = vadd.f32 %v2230, %v2755
      %v2762 = vlaneseq
      %v2763 = vshrl.u32 %v2762, 7
      %v2764 = vsub.s32 0, %v2763
      %v2765 = vrot.slane %v1098, %v2764
      %v2767 = vadd.f32 %v2760, %v2765
      %v2768 = vsel %vm1145, %v2767, 0.0
      %2769 = vadd.xlane.f32.xlu0 %v2768
      %v2770 = vpop.xlane.xlu0 %2769
      %v2771 = vmul.f32 %v2770, %v1152
      %v2772 = vsub.f32 %v2767, %v2771
      %v2773 = vmul.f32 %v2772, %v2772
      %v2774 = vsel %vm1145, %v2773, 0.0
      %2775 = vadd.xlane.f32.xlu0 %v2774
      %v2776 = vpop.xlane.xlu0 %2775
      %v2777 = vmul.f32 %v2776, %v1152
      %v2778 = vadd.f32 %v2777, 1e-05
      %v2779 = vrsqrt.pop %v2778
      %v2780 = vmul.f32 %v2772, %v2779
      %v2782 = vlaneseq
      %v2783 = vshrl.u32 %v2782, 7
      %v2784 = vsub.s32 0, %v2783
      %v2785 = vrot.slane %v1099, %v2784
      %v2787 = vmul.f32 %v2780, %v2785
      %v2789 = vlaneseq
      %v2790 = vshrl.u32 %v2789, 7
      %v2791 = vsub.s32 0, %v2790
      %v2792 = vrot.slane %v1100, %v2791
      %v2794 = vadd.f32 %v2787, %v2792
      %v2795 = vpack.c.bf16 %v2794, %v2794
      %v2797 = vlaneseq
      %v2798 = vshrl.u32 %v2797, 7
      %v2799 = vsub.s32 0, %v2798
      %v2800 = vrot.slane %v1109, %v2799
      %v2801 = vlaneseq
      %v2802 = vshrl.u32 %v2801, 7
      %v2803 = vsub.s32 1, %v2802
      %v2804 = vrot.slane %v1109, %v2803
      %v2815 = vunpack.c.l.b16 %v1101
      %v2816 = vunpack.c.h.b16 %v1101
      %v2817 = vunpack.c.l.b16 %v1102
      %v2818 = vunpack.c.h.b16 %v1102
      %v2819 = vunpack.c.l.b16 %v1103
      %v2820 = vunpack.c.h.b16 %v1103
      %v2821 = vunpack.c.l.b16 %v1104
      %v2822 = vunpack.c.h.b16 %v1104
      %v2823 = vunpack.c.l.b16 %v1105
      %v2824 = vunpack.c.h.b16 %v1105
      %v2825 = vunpack.c.l.b16 %v1106
      %v2826 = vunpack.c.h.b16 %v1106
      %v2827 = vunpack.c.l.b16 %v1107
      %v2828 = vunpack.c.h.b16 %v1107
      %v2829 = vunpack.c.l.b16 %v1108
      %v2830 = vunpack.c.h.b16 %v1108
      %v2831 = vpack.c.b16 %v2817, %v2815
      %v2832 = vpack.c.b16 %v2818, %v2816
      %v2833 = vpack.c.b16 %v2821, %v2819
      %v2834 = vpack.c.b16 %v2822, %v2820
      %v2835 = vpack.c.b16 %v2825, %v2823
      %v2836 = vpack.c.b16 %v2826, %v2824
      %v2837 = vpack.c.b16 %v2829, %v2827
      %v2838 = vpack.c.b16 %v2830, %v2828
      %v2848 = vsel %vm1145, %v2795, 0
      %2850 = vmatprep.subr.bf16.mxu0 %v2832
      %2851 = vmatpush1.bf16.msra.mxu0 %v2831
      %2852 = vmatprep.subr.bf16.mxu0 %v2834
      %2853 = vmatpush1.bf16.msra.mxu0 %v2833
      %2854 = vmatprep.subr.bf16.mxu0 %v2836
      %2855 = vmatpush1.bf16.msra.mxu0 %v2835
      %2856 = vmatprep.subr.bf16.mxu0 %v2838
      %2857 = vmatpush1.bf16.msra.mxu0 %v2837
      %2858 = vmatprep.subr.bf16.mxu0 0
      %2859 = vmatpush1.bf16.msra.mxu0 0
      %2860 = vmatprep.subr.bf16.mxu0 0
      %2861 = vmatpush1.bf16.msra.mxu0 0
      %2862 = vmatprep.subr.bf16.mxu0 0
      %2863 = vmatpush1.bf16.msra.mxu0 0
      %2864 = vmatprep.subr.bf16.mxu0 0
      %2865 = vmatpush1.bf16.msra.mxu0 0
      %2866 = vmatprep.subr.bf16.mxu0 0
      %2867 = vmatpush1.bf16.msra.mxu0 0
      %2868 = vmatprep.subr.bf16.mxu0 0
      %2869 = vmatpush1.bf16.msra.mxu0 0
      %2870 = vmatprep.subr.bf16.mxu0 0
      %2871 = vmatpush1.bf16.msra.mxu0 0
      %2872 = vmatprep.subr.bf16.mxu0 0
      %2873 = vmatpush1.bf16.msra.mxu0 0
      %2874 = vmatprep.subr.bf16.mxu0 0
      %2875 = vmatpush1.bf16.msra.mxu0 0
      %2876 = vmatprep.subr.bf16.mxu0 0
      %2877 = vmatpush1.bf16.msra.mxu0 0
      %2878 = vmatprep.subr.bf16.mxu0 0
      %2879 = vmatpush1.bf16.msra.mxu0 0
      %2880 = vmatprep.subr.bf16.mxu0 0
      %2881 = vmatpush1.bf16.msra.mxu0 0
      %2882 = vmatprep.mubr.bf16.mxu0 0
      %2883 = vmatmul.mubr.bf16.gmra.mrb[0].mxu0 %v2848
      %v2884 = vpop.f32.mrb[0].mxu0
      %v2885 = vadd.f32 %v2800, %v2884
      %v2886 = vpop.f32.mrb[0].mxu0
      %v2887 = vadd.f32 %v2804, %v2886
      %v2888 = vpop.f32.mrb[0].mxu0
      %v2889 = vpop.f32.mrb[0].mxu0
      %2890 = vdwg.mxu0
      %v2891 = vmul.f32 %v2885, %v2885
      %v2892 = vmul.f32 %v2887, %v2887
      %v2893 = vmul.f32 %v2885, %v2891
      %v2894 = vmul.f32 %v2887, %v2892
      %v2895 = vmul.f32 %v2893, 0.044715
      %v2896 = vmul.f32 %v2894, 0.044715
      %v2897 = vadd.f32 %v2885, %v2895
      %v2898 = vadd.f32 %v2887, %v2896
      %v2899 = vmul.f32 %v2897, 0.7978846
      %v2900 = vmul.f32 %v2898, 0.7978846
      %v2901 = vtanh.pop %v2899
      %v2902 = vtanh.pop %v2900
      %v2903 = vadd.f32 %v2901, 1.0
      %v2904 = vadd.f32 %v2902, 1.0
      %v2905 = vmul.f32 %v2903, 0.5
      %v2906 = vmul.f32 %v2904, 0.5
      %v2907 = vmul.f32 %v2885, %v2905
      %v2908 = vmul.f32 %v2887, %v2906
      %v2909 = vpack.c.bf16 %v2907, %v2907
      %v2910 = vpack.c.bf16 %v2908, %v2908
      %v2943 = vunpack.c.l.b16 %v1110
      %v2944 = vunpack.c.l.b16 %v1111
      %v2945 = vunpack.c.l.b16 %v1112
      %v2946 = vunpack.c.l.b16 %v1113
      %v2947 = vunpack.c.l.b16 %v1114
      %v2948 = vunpack.c.l.b16 %v1115
      %v2949 = vunpack.c.l.b16 %v1116
      %v2950 = vunpack.c.l.b16 %v1117
      %v2951 = vunpack.c.l.b16 %v1118
      %v2952 = vunpack.c.l.b16 %v1119
      %v2953 = vunpack.c.l.b16 %v1120
      %v2954 = vunpack.c.l.b16 %v1121
      %v2955 = vunpack.c.l.b16 %v1122
      %v2956 = vunpack.c.l.b16 %v1123
      %v2957 = vunpack.c.l.b16 %v1124
      %v2958 = vunpack.c.l.b16 %v1125
      %v2959 = vunpack.c.l.b16 %v1126
      %v2960 = vunpack.c.l.b16 %v1127
      %v2961 = vunpack.c.l.b16 %v1128
      %v2962 = vunpack.c.l.b16 %v1129
      %v2963 = vunpack.c.l.b16 %v1130
      %v2964 = vunpack.c.l.b16 %v1131
      %v2965 = vunpack.c.l.b16 %v1132
      %v2966 = vunpack.c.l.b16 %v1133
      %v2967 = vunpack.c.l.b16 %v1134
      %v2968 = vunpack.c.l.b16 %v1135
      %v2969 = vunpack.c.l.b16 %v1136
      %v2970 = vunpack.c.l.b16 %v1137
      %v2971 = vunpack.c.l.b16 %v1138
      %v2972 = vunpack.c.l.b16 %v1139
      %v2973 = vunpack.c.l.b16 %v1140
      %v2974 = vunpack.c.l.b16 %v1141
      %v2975 = vpack.c.b16 %v2944, %v2943
      %v2976 = vpack.c.b16 %v2946, %v2945
      %v2977 = vpack.c.b16 %v2948, %v2947
      %v2978 = vpack.c.b16 %v2950, %v2949
      %v2979 = vpack.c.b16 %v2952, %v2951
      %v2980 = vpack.c.b16 %v2954, %v2953
      %v2981 = vpack.c.b16 %v2956, %v2955
      %v2982 = vpack.c.b16 %v2958, %v2957
      %v2983 = vpack.c.b16 %v2960, %v2959
      %v2984 = vpack.c.b16 %v2962, %v2961
      %v2985 = vpack.c.b16 %v2964, %v2963
      %v2986 = vpack.c.b16 %v2966, %v2965
      %v2987 = vpack.c.b16 %v2968, %v2967
      %v2988 = vpack.c.b16 %v2970, %v2969
      %v2989 = vpack.c.b16 %v2972, %v2971
      %v2990 = vpack.c.b16 %v2974, %v2973
      %3007 = vmatprep.subr.bf16.mxu0 0
      %3008 = vmatpush1.bf16.msra.mxu0 %v2975
      %3009 = vmatprep.subr.bf16.mxu0 0
      %3010 = vmatpush1.bf16.msra.mxu0 %v2976
      %3011 = vmatprep.subr.bf16.mxu0 0
      %3012 = vmatpush1.bf16.msra.mxu0 %v2977
      %3013 = vmatprep.subr.bf16.mxu0 0
      %3014 = vmatpush1.bf16.msra.mxu0 %v2978
      %3015 = vmatprep.subr.bf16.mxu0 0
      %3016 = vmatpush1.bf16.msra.mxu0 %v2979
      %3017 = vmatprep.subr.bf16.mxu0 0
      %3018 = vmatpush1.bf16.msra.mxu0 %v2980
      %3019 = vmatprep.subr.bf16.mxu0 0
      %3020 = vmatpush1.bf16.msra.mxu0 %v2981
      %3021 = vmatprep.subr.bf16.mxu0 0
      %3022 = vmatpush1.bf16.msra.mxu0 %v2982
      %3023 = vmatprep.subr.bf16.mxu0 0
      %3024 = vmatpush1.bf16.msra.mxu0 %v2983
      %3025 = vmatprep.subr.bf16.mxu0 0
      %3026 = vmatpush1.bf16.msra.mxu0 %v2984
      %3027 = vmatprep.subr.bf16.mxu0 0
      %3028 = vmatpush1.bf16.msra.mxu0 %v2985
      %3029 = vmatprep.subr.bf16.mxu0 0
      %3030 = vmatpush1.bf16.msra.mxu0 %v2986
      %3031 = vmatprep.subr.bf16.mxu0 0
      %3032 = vmatpush1.bf16.msra.mxu0 %v2987
      %3033 = vmatprep.subr.bf16.mxu0 0
      %3034 = vmatpush1.bf16.msra.mxu0 %v2988
      %3035 = vmatprep.subr.bf16.mxu0 0
      %3036 = vmatpush1.bf16.msra.mxu0 %v2989
      %3037 = vmatprep.subr.bf16.mxu0 0
      %3038 = vmatpush1.bf16.msra.mxu0 %v2990
      %3039 = vmatprep.mubr.bf16.mxu0 %v2910
      %3040 = vmatmul.mubr.bf16.gmra.mrb[0].mxu0 %v2909
      %v3041 = vpop.f32.mrb[0].mxu0
      %v3042 = vadd.f32 0.0, %v3041
      %v3043 = vpop.f32.mrb[0].mxu0
      %v3044 = vpop.f32.mrb[0].mxu0
      %v3045 = vpop.f32.mrb[0].mxu0
      %3046 = vdwg.mxu0
      %v3047 = vadd.f32 %v2767, %v3042
      %v3049 = vlaneseq
      %v3050 = vshrl.u32 %v3049, 7
      %v3051 = vsub.s32 0, %v3050
      %v3052 = vrot.slane %v1142, %v3051
      %v3054 = vadd.f32 %v3047, %v3052
      %3055 = vst.msk [vmem:[%s984] sm:$0xff] %vm1145, %v3054
      %p3056 = scmp.lt.s32.totalorder %s76, 1
      %s3057 = scalar_select %p3056, %s76, 1
      %s3058 = smul.addr %s3057, 8
      %s3059 = scalar_lea.vmem %s65, %s3058
      // Predicated region
      $region149: #{compressor_mlp_forward.1} parent=147 // pred_check
        %p3060 = pneg %p771
      $region150: #{compressor_mlp_forward.1} parent=147 // pred_check_branch
        %3062 = sbr.rel (%p3060) target = $region152
      $region151: #{compressor_mlp_forward.1} parent=147 // pred_region
        _
      $region152: #{compressor_mlp_forward.1} parent=147 // pred_fallthru
        _
    $region148: #{compressor_mlp_forward.1} parent=5 // pred_fallthru
      _
    %p3063 = scmp.le.s32.totalorder 2, %s71
    // Predicated region
    $region153: #{compressor_mlp_forward.1} parent=5 // pred_check
      %p3064 = pneg %p3063
    $region154: #{compressor_mlp_forward.1} parent=5 // pred_check_branch
      %3066 = sbr.rel (%p3064) target = $region156
    $region155: #{compressor_mlp_forward.1} parent=5 // pred_region
      %s3067 = ssub.s32 %s71, 2
      // Predicated region
      $region157: #{compressor_mlp_forward.1} parent=155 // pred_check
        %p3068 = pneg %p777
      $region158: #{compressor_mlp_forward.1} parent=155 // pred_check_branch
        %3070 = sbr.rel (%p3068) target = $region160
      $region159: #{compressor_mlp_forward.1} parent=155 // pred_region
        %p3071 = scmp.lt.s32.totalorder %s77, 1
        %s3072 = scalar_select %p3071, %s77, 1
        %s3073 = smul.addr %s3072, 8
        %s3074 = scalar_lea.vmem %s65, %s3073
      $region160: #{compressor_mlp_forward.1} parent=155 // pred_fallthru
        _
    $region156: #{compressor_mlp_forward.1} parent=5 // pred_fallthru
      _
  $region6: #{compressor_mlp_forward.1} parent=0 // loop_footer
    %s75 = sadd.s32 1, %s71
  $region7: #{compressor_mlp_forward.1} parent=0 // loop_footer_branch
    %70 = sbr.rel target = $region3
  $region8: #{compressor_mlp_forward.1} parent=0 // loop_exit
    _

</llo_original>
